<compile_context>
chip_gen: v7x
topology: tpu7x:2x2x1
jax: 0.10.0
libtpu: 0.0.40
codegen_flags: <defaults>
</compile_context>

<pallas_src>
import math

import jax
import jax.numpy as jnp
from jax import lax
from jax.experimental import pallas as pl
from jax.experimental.pallas import tpu as pltpu


# ---------------------------------------------------------------------------
# Fused Pallas kernel: one batch BLOCK (Bblk elements) per grid step.
# ---------------------------------------------------------------------------

def _fused_perceiver_kernel(
    x_ref, bias_ref,
    q_ref, sbias_ref, resid_ref,
    wk_ref, wv_ref, wo_ref,
    g1_ref, be1_ref,
    w1_ref, bm1_ref, w2_ref, bm2_ref,
    g2_ref, be2_ref,
    hw1_ref, hb1_ref, hw2_ref, hb2_ref,
    cls_ref, logit_ref,
):
    f32 = jnp.float32
    bf16 = jnp.bfloat16

    Bblk, N, F = x_ref.shape
    L, D = q_ref.shape

    # --- K/V projections: one flat matmul each with M = Bblk*N rows ---------
    # (input projection already folded into wk_eff/wv_eff; biases folded out)
    x2 = x_ref[...].reshape(Bblk * N, F)                               # bf16
    k = jnp.dot(x2, wk_ref[...], preferred_element_type=f32).astype(bf16)
    v = jnp.dot(x2, wv_ref[...], preferred_element_type=f32).astype(bf16)
    k = k.reshape(Bblk, N, D)
    v = v.reshape(Bblk, N, D)

    # --- Cross-attention (q precomputed; 1/sqrt(D) and bk folded in) --------
    qb = jnp.broadcast_to(q_ref[...][None], (Bblk, L, D))              # bf16
    s = jnp.einsum('bld,bnd->bln', qb, k, preferred_element_type=f32)  # (Bblk,L,N)
    s = s + sbias_ref[...] + bias_ref[...]        # (L,1) q@bk^T  +  (Bblk,1,N) pad mask

    m = jnp.max(s, axis=-1, keepdims=True)
    p = jnp.exp(s - m)
    denom = jnp.sum(p, axis=-1, keepdims=True)
    p = p * pl.reciprocal(denom, approx=True)

    attn = jnp.einsum('bln,bnd->bld', p.astype(bf16), v,
                      preferred_element_type=f32)                      # (Bblk,L,D)

    # Output projection (flat, M = Bblk*L) + residual (bv@wo folded into resid).
    y = (jnp.dot(attn.reshape(Bblk * L, D).astype(bf16), wo_ref[...],
                 preferred_element_type=f32).reshape(Bblk, L, D)
         + resid_ref[...])

    # LayerNorm 1 (f32).
    mu = jnp.mean(y, axis=-1, keepdims=True)
    var = jnp.mean((y - mu) ** 2, axis=-1, keepdims=True)
    y1 = (y - mu) * lax.rsqrt(var + 1e-5) * g1_ref[...] + be1_ref[...]

    # MLP + residual (flat, M = Bblk*L).
    y1f = y1.reshape(Bblk * L, D)
    h = jnp.dot(y1f.astype(bf16), w1_ref[...], preferred_element_type=f32) + bm1_ref[...]
    h = jnp.maximum(h, 0.0)
    y2 = jnp.dot(h.astype(bf16), w2_ref[...], preferred_element_type=f32) + bm2_ref[...] + y1f

    # LayerNorm 2 (f32).
    mu2 = jnp.mean(y2, axis=-1, keepdims=True)
    var2 = jnp.mean((y2 - mu2) ** 2, axis=-1, keepdims=True)
    z = (y2 - mu2) * lax.rsqrt(var2 + 1e-5) * g2_ref[...] + be2_ref[...]

    # Mean-pool latents -> cls token per batch element. Full (8,128)-tile store.
    cls = jnp.mean(z.reshape(Bblk, L, D), axis=1)                      # (Bblk, D)
    cls_ref[...] = cls

    # Fused output heads: concat hidden, block-diagonal + 128-lane-padded output.
    hh = jnp.dot(cls.astype(bf16), hw1_ref[...], preferred_element_type=f32) + hb1_ref[...]
    hh = jnp.maximum(hh, 0.0)                                          # (Bblk, Hs)
    logits = jnp.dot(hh.astype(bf16), hw2_ref[...], preferred_element_type=f32) + hb2_ref[...]
    logit_ref[...] = logits                                            # (Bblk, OP) lane-dense


# ---------------------------------------------------------------------------
# Pallas wrapper (single launch)
# ---------------------------------------------------------------------------

def fused_forward_pallas(images_bf16, attn_bias, fp, block_b):
    B, N, F = images_bf16.shape
    L, D = fp["q"].shape
    Dm = fp["mlp_w1"].shape[1]
    Hs = fp["head_w1"].shape[1]
    OP = fp["head_w2"].shape[1]
    assert B % block_b == 0
    grid = (B // block_b,)

    def wspec(shape):
        # Grid-invariant weight: constant block index -> fetched once, not per step.
        # TODO(synk): at production sizes add pipeline_mode=pl.Buffered(1) here so
        # invariant weights are single-buffered on v7x's 64 MiB VMEM.
        return pl.BlockSpec(shape, lambda g: (0,) * len(shape))

    in_specs = [
        pl.BlockSpec((block_b, N, F), lambda g: (g, 0, 0)),   # images (bf16)
        pl.BlockSpec((block_b, 1, N), lambda g: (g, 0, 0)),   # additive pad-mask bias
        wspec((L, D)),                                        # q (scaled, precomputed)
        wspec((L, 1)),                                        # q @ bk^T score bias
        wspec((L, D)),                                        # latents + bv@wo residual
        wspec((F, D)), wspec((F, D)), wspec((D, D)),          # wk_eff, wv_eff, wo
        wspec((1, D)), wspec((1, D)),                         # ln1 gamma/beta
        wspec((D, Dm)), wspec((1, Dm)),                       # mlp w1/b1
        wspec((Dm, D)), wspec((1, D)),                        # mlp w2/b2
        wspec((1, D)), wspec((1, D)),                         # ln2 gamma/beta
        wspec((D, Hs)), wspec((1, Hs)),                       # head hidden (concat)
        wspec((Hs, OP)), wspec((1, OP)),                      # head output (block-diag)
    ]
    out_specs = (
        pl.BlockSpec((block_b, D), lambda g: (g, 0)),         # cls tokens
        pl.BlockSpec((block_b, OP), lambda g: (g, 0)),        # packed logits
    )
    out_shape = (
        jax.ShapeDtypeStruct((B, D), jnp.float32),
        jax.ShapeDtypeStruct((B, OP), jnp.float32),
    )

    return pl.pallas_call(
        _fused_perceiver_kernel,
        out_shape=out_shape,
        grid=grid,
        in_specs=in_specs,
        out_specs=out_specs,
        compiler_params=pltpu.CompilerParams(
            dimension_semantics=("parallel",),
            vmem_limit_bytes=32 * 1024 * 1024,
        ),
    )(
        images_bf16, attn_bias,
        fp["q"], fp["sbias"], fp["resid"],
        fp["wk"], fp["wv"], fp["wo"],
        fp["ln1_g"], fp["ln1_b"],
        fp["mlp_w1"], fp["mlp_b1"], fp["mlp_w2"], fp["mlp_b2"],
        fp["ln2_g"], fp["ln2_b"],
        fp["head_w1"], fp["head_b1"], fp["head_w2"], fp["head_b2"],
    )


# ---------------------------------------------------------------------------
# Parameter construction (deterministic, in-script) + one-time fusion prep
# ---------------------------------------------------------------------------

def init_params(key, F, D, L, Dm, head_configs):
    ks = jax.random.split(key, 16)
    p = {
        "in_w": 0.02 * jax.random.normal(ks[0], (F, D), jnp.float32),
        "in_b": jnp.zeros((1, D), jnp.float32),
        "latents": 0.02 * jax.random.normal(ks[1], (L, D), jnp.float32),
        "wq": 0.02 * jax.random.normal(ks[2], (D, D), jnp.float32),
        "wk": 0.02 * jax.random.normal(ks[3], (D, D), jnp.float32),
        "wv": 0.02 * jax.random.normal(ks[4], (D, D), jnp.float32),
        "wo": 0.02 * jax.random.normal(ks[5], (D, D), jnp.float32),
        "ln1_g": jnp.ones((1, D), jnp.float32),
        "ln1_b": jnp.zeros((1, D), jnp.float32),
        "mlp_w1": 0.02 * jax.random.normal(ks[6], (D, Dm), jnp.float32),
        "mlp_b1": jnp.zeros((1, Dm), jnp.float32),
        "mlp_w2": 0.02 * jax.random.normal(ks[7], (Dm, D), jnp.float32),
        "mlp_b2": jnp.zeros((1, D), jnp.float32),
        "ln2_g": jnp.ones((1, D), jnp.float32),
        "ln2_b": jnp.zeros((1, D), jnp.float32),
        "heads": {},
    }
    hk = jax.random.split(ks[8], len(head_configs) * 2)
    for idx, (name, (hidden, n_out)) in enumerate(head_configs.items()):
        p["heads"][name] = {
            "w1": 0.02 * jax.random.normal(hk[2 * idx], (D, hidden), jnp.float32),
            "b1": jnp.zeros((1, hidden), jnp.float32),
            "w2": 0.02 * jax.random.normal(hk[2 * idx + 1], (hidden, n_out), jnp.float32),
            "b2": jnp.zeros((1, n_out), jnp.float32),
        }
    return p


def prepare_fused_params(p, head_configs):
    """One-time weight prep: fold input projection into K/V, precompute batch-invariant
    q (with 1/sqrt(D) scale) and the bk/bv bias contributions, concat + block-diagonalize
    the heads (output width rounded up to a multiple of 128), cast MXU weights to bf16."""
    bf16 = jnp.bfloat16
    f32 = jnp.float32
    D = p["in_w"].shape[1]
    scale = 1.0 / math.sqrt(D)

    wk_eff = jnp.dot(p["in_w"], p["wk"])            # (F, D)
    bk_eff = jnp.dot(p["in_b"], p["wk"])            # (1, D)
    wv_eff = jnp.dot(p["in_w"], p["wv"])            # (F, D)
    bv_eff = jnp.dot(p["in_b"], p["wv"])            # (1, D)

    q = jnp.dot(p["latents"], p["wq"]) * scale      # (L, D) batch-invariant query
    sbias = jnp.dot(q, bk_eff.T)                    # (L, 1) bk contribution to scores
    resid = p["latents"] + jnp.dot(bv_eff, p["wo"]) # bv contribution (softmax rows sum to 1)

    names = list(head_configs.keys())
    h_sizes = [head_configs[n][0] for n in names]
    o_sizes = [head_configs[n][1] for n in names]
    Hs = sum(h_sizes)
    OP = ((sum(o_sizes) + 127) // 128) * 128        # lane-dense: round UP to 128 multiple

    hw1 = jnp.concatenate([p["heads"][n]["w1"] for n in names], axis=1)   # (D, Hs)
    hb1 = jnp.concatenate([p["heads"][n]["b1"] for n in names], axis=1)   # (1, Hs)
    hw2 = jnp.zeros((Hs, OP), f32)
    hb2 = jnp.zeros((1, OP), f32)
    head_slices = {}
    h_off, o_off = 0, 0
    for n, hsz, osz in zip(names, h_sizes, o_sizes):
        hw2 = hw2.at[h_off:h_off + hsz, o_off:o_off + osz].set(p["heads"][n]["w2"])
        hb2 = hb2.at[:, o_off:o_off + osz].set(p["heads"][n]["b2"])
        head_slices[n] = (o_off, osz)
        h_off += hsz
        o_off += osz

    fused = {
        "q": q.astype(bf16),
        "sbias": sbias.astype(f32),
        "resid": resid.astype(f32),
        "wk": wk_eff.astype(bf16), "wv": wv_eff.astype(bf16),
        "wo": p["wo"].astype(bf16),
        "ln1_g": p["ln1_g"], "ln1_b": p["ln1_b"],
        "mlp_w1": p["mlp_w1"].astype(bf16), "mlp_b1": p["mlp_b1"],
        "mlp_w2": p["mlp_w2"].astype(bf16), "mlp_b2": p["mlp_b2"],
        "ln2_g": p["ln2_g"], "ln2_b": p["ln2_b"],
        "head_w1": hw1.astype(bf16), "head_b1": hb1,
        "head_w2": hw2.astype(bf16), "head_b2": hb2,
    }
    return fused, head_slices


# ---------------------------------------------------------------------------
# Full forward pass (PerceiverWrapper.forward equivalent)
# ---------------------------------------------------------------------------

def perceiver_wrapper_forward(images, image_pad_mask, fused_params, head_slices,
                              block_b=16):
    """images: (B, N, F) float32; image_pad_mask: (B, N) bool, True == padding."""
    B, N, _ = images.shape

    # Wrapper passes ~image_pad_mask to the resampler: True == valid token.
    valid = jnp.logical_not(image_pad_mask.astype(bool))
    attn_bias = jnp.where(valid, 0.0, -1e30).astype(jnp.float32)[:, None, :]  # (B,1,N)

    # bf16 images: halves the only per-step streamed tensor (v5e HBM bandwidth).
    images_b = images.astype(jnp.bfloat16)

    # Pad batch to a multiple of block_b (padded rows discarded after the call).
    Bp = ((B + block_b - 1) // block_b) * block_b
    pad = Bp - B
    if pad:
        images_b = jnp.pad(images_b, ((0, pad), (0, 0), (0, 0)))
        attn_bias = jnp.pad(attn_bias, ((0, pad), (0, 0), (0, 0)))

    cls_tokens, logits_packed = fused_forward_pallas(images_b, attn_bias, fused_params,
                                                     block_b)
    cls_tokens = cls_tokens[:B]
    logits_packed = logits_packed[:B]
    acts_packed = jax.nn.sigmoid(logits_packed)    # tiny host-side op; fuses with slicing

    heads_logits = {}
    heads_activations = {}
    for name, (off, n_out) in head_slices.items():
        heads_logits[name] = lax.slice_in_dim(logits_packed, off, off + n_out, axis=1)
        heads_activations[name] = lax.slice_in_dim(acts_packed, off, off + n_out, axis=1)

    return {
        "backbone_embedding": cls_tokens,
        "heads_logits": heads_logits,
        "heads_activations": heads_activations,
    }


# ---------------------------------------------------------------------------
# Pure-JAX f32 reference (unfolded formulation) for correctness checking
# ---------------------------------------------------------------------------

def reference_forward(images, image_pad_mask, p, head_configs):
    D = p["in_w"].shape[1]
    x = images.astype(jnp.float32)
    h0 = x @ p["in_w"] + p["in_b"]                              # input projection
    q = (p["latents"] @ p["wq"]) / math.sqrt(D)
    k = h0 @ p["wk"]
    v = h0 @ p["wv"]
    s = jnp.einsum('ld,bnd->bln', q, k)
    valid = jnp.logical_not(image_pad_mask.astype(bool))
    s = s + jnp.where(valid, 0.0, -1e30)[:, None, :]
    pa = jax.nn.softmax(s, axis=-1)
    attn = jnp.einsum('bln,bnd->bld', pa, v)
    y = attn @ p["wo"] + p["latents"][None]

    def ln(t, g, b):
        mu = t.mean(-1, keepdims=True)
        var = ((t - mu) ** 2).mean(-1, keepdims=True)
        return (t - mu) * lax.rsqrt(var + 1e-5) * g + b

    y1 = ln(y, p["ln1_g"], p["ln1_b"])
    h = jax.nn.relu(y1 @ p["mlp_w1"] + p["mlp_b1"])
    y2 = h @ p["mlp_w2"] + p["mlp_b2"] + y1
    z = ln(y2, p["ln2_g"], p["ln2_b"])
    cls = z.mean(axis=1)

    logits, acts = {}, {}
    for name in head_configs:
        hp = p["heads"][name]
        hh = jax.nn.relu(cls @ hp["w1"] + hp["b1"])
        lo = hh @ hp["w2"] + hp["b2"]
        logits[name] = lo
        acts[name] = jax.nn.sigmoid(lo)
    return {"backbone_embedding": cls, "heads_logits": logits, "heads_activations": acts}


# ---------------------------------------------------------------------------
# Main
# ---------------------------------------------------------------------------

if __name__ == "__main__":
    # D, Dm chosen as multiples of 128 so feature axes are lane-dense.
    B, N, F, D, L, Dm = 32, 8, 64, 128, 8, 256
    block_b = 16     # 2 grid steps -> both v7x TensorCores get work; Bblk*N = 128 rows
    head_configs = {"cancer": (16, 2), "subtype": (16, 3)}

    key = jax.random.PRNGKey(0)
    k_img, k_par = jax.random.split(key)

    images = jax.random.normal(k_img, (B, N, F), jnp.float32)
    # True == padding; vary the amount of padding per batch element (0..3 padded tokens).
    n_pad = jnp.arange(B) % 4
    image_pad_mask = jnp.arange(N)[None, :] >= (N - n_pad[:, None])

    raw_params = init_params(k_par, F, D, L, Dm, head_configs)
    fused_params, head_slices = prepare_fused_params(raw_params, head_configs)

    out = perceiver_wrapper_forward(images, image_pad_mask, fused_params, head_slices,
                                    block_b=block_b)
    out = jax.tree_util.tree_map(jax.block_until_ready, out)

    ref = reference_forward(images, image_pad_mask, raw_params, head_configs)

    def max_rel(a, b):
        return float(jnp.max(jnp.abs(a - b)) / (jnp.max(jnp.abs(b)) + 1e-6))

    assert out["backbone_embedding"].shape == (B, D)
    assert bool(jnp.all(jnp.isfinite(out["backbone_embedding"])))
    assert max_rel(out["backbone_embedding"], ref["backbone_embedding"]) < 0.08
    for name, (_, n_out) in {"cancer": (16, 2), "subtype": (16, 3)}.items():
        assert out["heads_logits"][name].shape == (B, n_out)
        assert out["heads_activations"][name].shape == (B, n_out)
        assert max_rel(out["heads_logits"][name], ref["heads_logits"][name]) < 0.08

    print("KERNEL_OK")
</pallas_src>

<mosaic_0001>
module attributes {stable_mosaic.version = 11 : i64} {
  func.func @_fused_perceiver_kernel(%arg0: i32, %arg1: memref<16x8x64xbf16, #tpu.memory_space<vmem>>, %arg2: memref<16x1x8xf32, #tpu.memory_space<vmem>>, %arg3: memref<8x128xbf16, #tpu.memory_space<vmem>>, %arg4: memref<8x1xf32, #tpu.memory_space<vmem>>, %arg5: memref<8x128xf32, #tpu.memory_space<vmem>>, %arg6: memref<64x128xbf16, #tpu.memory_space<vmem>>, %arg7: memref<64x128xbf16, #tpu.memory_space<vmem>>, %arg8: memref<128x128xbf16, #tpu.memory_space<vmem>>, %arg9: memref<1x128xf32, #tpu.memory_space<vmem>>, %arg10: memref<1x128xf32, #tpu.memory_space<vmem>>, %arg11: memref<128x256xbf16, #tpu.memory_space<vmem>>, %arg12: memref<1x256xf32, #tpu.memory_space<vmem>>, %arg13: memref<256x128xbf16, #tpu.memory_space<vmem>>, %arg14: memref<1x128xf32, #tpu.memory_space<vmem>>, %arg15: memref<1x128xf32, #tpu.memory_space<vmem>>, %arg16: memref<1x128xf32, #tpu.memory_space<vmem>>, %arg17: memref<128x32xbf16, #tpu.memory_space<vmem>>, %arg18: memref<1x32xf32, #tpu.memory_space<vmem>>, %arg19: memref<32x128xbf16, #tpu.memory_space<vmem>>, %arg20: memref<1x128xf32, #tpu.memory_space<vmem>>, %arg21: memref<16x128xf32, #tpu.memory_space<vmem>>, %arg22: memref<16x128xf32, #tpu.memory_space<vmem>>) attributes {dimension_semantics = [#tpu.dimension_semantics<parallel>], iteration_bounds = array<i64: 2>, scalar_prefetch = 0 : i64, scratch_operands = 0 : i64, tpu.core_type = #tpu.core_type<tc>, window_params = [{transform_indices = @transform_0, window_bounds = array<i64: 16, 8, 64>}, {transform_indices = @transform_1, window_bounds = array<i64: 16, 1, 8>}, {pipeline_mode = #tpu.pipeline_mode<synchronous>, transform_indices = @transform_2, window_bounds = array<i64: 8, 128>}, {pipeline_mode = #tpu.pipeline_mode<synchronous>, transform_indices = @transform_3, window_bounds = array<i64: 8, 1>}, {pipeline_mode = #tpu.pipeline_mode<synchronous>, transform_indices = @transform_4, window_bounds = array<i64: 8, 128>}, {pipeline_mode = #tpu.pipeline_mode<synchronous>, transform_indices = @transform_5, window_bounds = array<i64: 64, 128>}, {pipeline_mode = #tpu.pipeline_mode<synchronous>, transform_indices = @transform_6, window_bounds = array<i64: 64, 128>}, {pipeline_mode = #tpu.pipeline_mode<synchronous>, transform_indices = @transform_7, window_bounds = array<i64: 128, 128>}, {pipeline_mode = #tpu.pipeline_mode<synchronous>, transform_indices = @transform_8, window_bounds = array<i64: 1, 128>}, {pipeline_mode = #tpu.pipeline_mode<synchronous>, transform_indices = @transform_9, window_bounds = array<i64: 1, 128>}, {pipeline_mode = #tpu.pipeline_mode<synchronous>, transform_indices = @transform_10, window_bounds = array<i64: 128, 256>}, {pipeline_mode = #tpu.pipeline_mode<synchronous>, transform_indices = @transform_11, window_bounds = array<i64: 1, 256>}, {pipeline_mode = #tpu.pipeline_mode<synchronous>, transform_indices = @transform_12, window_bounds = array<i64: 256, 128>}, {pipeline_mode = #tpu.pipeline_mode<synchronous>, transform_indices = @transform_13, window_bounds = array<i64: 1, 128>}, {pipeline_mode = #tpu.pipeline_mode<synchronous>, transform_indices = @transform_14, window_bounds = array<i64: 1, 128>}, {pipeline_mode = #tpu.pipeline_mode<synchronous>, transform_indices = @transform_15, window_bounds = array<i64: 1, 128>}, {pipeline_mode = #tpu.pipeline_mode<synchronous>, transform_indices = @transform_16, window_bounds = array<i64: 128, 32>}, {pipeline_mode = #tpu.pipeline_mode<synchronous>, transform_indices = @transform_17, window_bounds = array<i64: 1, 32>}, {pipeline_mode = #tpu.pipeline_mode<synchronous>, transform_indices = @transform_18, window_bounds = array<i64: 32, 128>}, {pipeline_mode = #tpu.pipeline_mode<synchronous>, transform_indices = @transform_19, window_bounds = array<i64: 1, 128>}, {transform_indices = @transform_20, window_bounds = array<i64: 16, 128>}, {transform_indices = @transform_21, window_bounds = array<i64: 16, 128>}]} {
    %c0 = arith.constant 0 : index
    %c0_0 = arith.constant 0 : index
    %c0_1 = arith.constant 0 : index
    %0 = vector.load %arg1[%c0, %c0_0, %c0_1] : memref<16x8x64xbf16, #tpu.memory_space<vmem>>, vector<16x8x64xbf16>
    %1 = vector.shape_cast %0 : vector<16x8x64xbf16> to vector<128x64xbf16>
    %c0_2 = arith.constant 0 : index
    %c0_3 = arith.constant 0 : index
    %2 = vector.load %arg6[%c0_2, %c0_3] : memref<64x128xbf16, #tpu.memory_space<vmem>>, vector<64x128xbf16>
    %cst = arith.constant dense<0.000000e+00> : vector<128x128xf32>
    %3 = tpu.matmul %1, %2, %cst {dimension_numbers = #tpu.dot_dimension_numbers<[1], [0], [0], [1], [0, 0, 1, 1], [], []>} : vector<128x64xbf16>, vector<64x128xbf16>, vector<128x128xf32> -> vector<128x128xf32>
    %4 = arith.truncf %3 : vector<128x128xf32> to vector<128x128xbf16>
    %c0_4 = arith.constant 0 : index
    %c0_5 = arith.constant 0 : index
    %5 = vector.load %arg7[%c0_4, %c0_5] : memref<64x128xbf16, #tpu.memory_space<vmem>>, vector<64x128xbf16>
    %cst_6 = arith.constant dense<0.000000e+00> : vector<128x128xf32>
    %6 = tpu.matmul %1, %5, %cst_6 {dimension_numbers = #tpu.dot_dimension_numbers<[1], [0], [0], [1], [0, 0, 1, 1], [], []>} : vector<128x64xbf16>, vector<64x128xbf16>, vector<128x128xf32> -> vector<128x128xf32>
    %7 = arith.truncf %6 : vector<128x128xf32> to vector<128x128xbf16>
    %8 = vector.shape_cast %4 : vector<128x128xbf16> to vector<16x8x128xbf16>
    %9 = vector.shape_cast %7 : vector<128x128xbf16> to vector<16x8x128xbf16>
    %c0_7 = arith.constant 0 : index
    %c0_8 = arith.constant 0 : index
    %10 = vector.load %arg3[%c0_7, %c0_8] : memref<8x128xbf16, #tpu.memory_space<vmem>>, vector<8x128xbf16>
    %11 = vector.shape_cast %10 : vector<8x128xbf16> to vector<1x8x128xbf16>
    %12 = vector.shape_cast %11 : vector<1x8x128xbf16> to vector<1x8x128xbf16>
    %13 = vector.broadcast %12 : vector<1x8x128xbf16> to vector<16x8x128xbf16>
    "tpu.trace_start"() <{level = 10 : i32, message = "bld,bnd->bln"}> : () -> ()
    %cst_9 = arith.constant dense<0.000000e+00> : vector<16x8x8xf32>
    %14 = tpu.matmul %13, %8, %cst_9 {dimension_numbers = #tpu.dot_dimension_numbers<[2], [2], [1], [1], [0, 0, 0, 1, 1, 1], [0], [0]>} : vector<16x8x128xbf16>, vector<16x8x128xbf16>, vector<16x8x8xf32> -> vector<16x8x8xf32>
    "tpu.trace_stop"() : () -> ()
    %c0_10 = arith.constant 0 : index
    %c0_11 = arith.constant 0 : index
    %15 = vector.load %arg4[%c0_10, %c0_11] : memref<8x1xf32, #tpu.memory_space<vmem>>, vector<8x1xf32>
    %16 = vector.shape_cast %15 : vector<8x1xf32> to vector<1x8x1xf32>
    %17 = vector.broadcast %16 : vector<1x8x1xf32> to vector<16x8x8xf32>
    %18 = arith.addf %14, %17 : vector<16x8x8xf32>
    %c0_12 = arith.constant 0 : index
    %c0_13 = arith.constant 0 : index
    %c0_14 = arith.constant 0 : index
    %19 = vector.load %arg2[%c0_12, %c0_13, %c0_14] : memref<16x1x8xf32, #tpu.memory_space<vmem>>, vector<16x1x8xf32>
    %20 = vector.broadcast %19 : vector<16x1x8xf32> to vector<16x8x8xf32>
    %21 = arith.addf %18, %20 : vector<16x8x8xf32>
    %cst_15 = arith.constant dense<0xFF800000> : vector<16x8xf32>
    %22 = vector.multi_reduction <maximumf>, %21, %cst_15 [2] : vector<16x8x8xf32> to vector<16x8xf32>
    %23 = vector.shape_cast %22 : vector<16x8xf32> to vector<16x8x1xf32>
    %24 = vector.broadcast %23 : vector<16x8x1xf32> to vector<16x8x8xf32>
    %25 = arith.subf %21, %24 : vector<16x8x8xf32>
    %26 = math.exp %25 : vector<16x8x8xf32>
    %cst_16 = arith.constant dense<0.000000e+00> : vector<16x8xf32>
    %27 = vector.multi_reduction <add>, %26, %cst_16 [2] : vector<16x8x8xf32> to vector<16x8xf32>
    %28 = vector.shape_cast %27 : vector<16x8xf32> to vector<16x8x1xf32>
    %29 = tpu.reciprocal %28 {approx = true} : vector<16x8x1xf32> -> vector<16x8x1xf32>
    %30 = vector.broadcast %29 : vector<16x8x1xf32> to vector<16x8x8xf32>
    %31 = arith.mulf %26, %30 : vector<16x8x8xf32>
    %32 = arith.truncf %31 : vector<16x8x8xf32> to vector<16x8x8xbf16>
    "tpu.trace_start"() <{level = 10 : i32, message = "bln,bnd->bld"}> : () -> ()
    %cst_17 = arith.constant dense<0.000000e+00> : vector<16x8x128xf32>
    %33 = tpu.matmul %32, %9, %cst_17 {dimension_numbers = #tpu.dot_dimension_numbers<[2], [1], [1], [2], [0, 0, 0, 1, 1, 2], [0], [0]>} : vector<16x8x8xbf16>, vector<16x8x128xbf16>, vector<16x8x128xf32> -> vector<16x8x128xf32>
    "tpu.trace_stop"() : () -> ()
    %34 = vector.shape_cast %33 : vector<16x8x128xf32> to vector<128x128xf32>
    %35 = arith.truncf %34 : vector<128x128xf32> to vector<128x128xbf16>
    %c0_18 = arith.constant 0 : index
    %c0_19 = arith.constant 0 : index
    %36 = vector.load %arg8[%c0_18, %c0_19] : memref<128x128xbf16, #tpu.memory_space<vmem>>, vector<128x128xbf16>
    %cst_20 = arith.constant dense<0.000000e+00> : vector<128x128xf32>
    %37 = tpu.matmul %35, %36, %cst_20 {dimension_numbers = #tpu.dot_dimension_numbers<[1], [0], [0], [1], [0, 0, 1, 1], [], []>} : vector<128x128xbf16>, vector<128x128xbf16>, vector<128x128xf32> -> vector<128x128xf32>
    %38 = vector.shape_cast %37 : vector<128x128xf32> to vector<16x8x128xf32>
    %c0_21 = arith.constant 0 : index
    %c0_22 = arith.constant 0 : index
    %39 = vector.load %arg5[%c0_21, %c0_22] : memref<8x128xf32, #tpu.memory_space<vmem>>, vector<8x128xf32>
    %40 = vector.shape_cast %39 : vector<8x128xf32> to vector<1x8x128xf32>
    %41 = vector.broadcast %40 : vector<1x8x128xf32> to vector<16x8x128xf32>
    %42 = arith.addf %38, %41 : vector<16x8x128xf32>
    %cst_23 = arith.constant dense<0.000000e+00> : vector<16x8xf32>
    %43 = vector.multi_reduction <add>, %42, %cst_23 [2] : vector<16x8x128xf32> to vector<16x8xf32>
    %44 = vector.shape_cast %43 : vector<16x8xf32> to vector<16x8x1xf32>
    %cst_24 = arith.constant 1.280000e+02 : f32
    %45 = vector.broadcast %cst_24 : f32 to vector<16x8x1xf32>
    %46 = arith.divf %44, %45 : vector<16x8x1xf32>
    %47 = vector.broadcast %46 : vector<16x8x1xf32> to vector<16x8x128xf32>
    %48 = arith.subf %42, %47 : vector<16x8x128xf32>
    %49 = arith.mulf %48, %48 : vector<16x8x128xf32>
    %cst_25 = arith.constant dense<0.000000e+00> : vector<16x8xf32>
    %50 = vector.multi_reduction <add>, %49, %cst_25 [2] : vector<16x8x128xf32> to vector<16x8xf32>
    %51 = vector.shape_cast %50 : vector<16x8xf32> to vector<16x8x1xf32>
    %cst_26 = arith.constant 1.280000e+02 : f32
    %52 = vector.broadcast %cst_26 : f32 to vector<16x8x1xf32>
    %53 = arith.divf %51, %52 : vector<16x8x1xf32>
    %54 = vector.broadcast %46 : vector<16x8x1xf32> to vector<16x8x128xf32>
    %55 = arith.subf %42, %54 : vector<16x8x128xf32>
    %cst_27 = arith.constant 9.99999974E-6 : f32
    %56 = vector.broadcast %cst_27 : f32 to vector<16x8x1xf32>
    %57 = arith.addf %53, %56 : vector<16x8x1xf32>
    %58 = math.rsqrt %57 : vector<16x8x1xf32>
    %59 = vector.broadcast %58 : vector<16x8x1xf32> to vector<16x8x128xf32>
    %60 = arith.mulf %55, %59 : vector<16x8x128xf32>
    %c0_28 = arith.constant 0 : index
    %c0_29 = arith.constant 0 : index
    %61 = vector.load %arg9[%c0_28, %c0_29] : memref<1x128xf32, #tpu.memory_space<vmem>>, vector<1x128xf32>
    %62 = vector.shape_cast %61 : vector<1x128xf32> to vector<1x1x128xf32>
    %63 = vector.broadcast %62 : vector<1x1x128xf32> to vector<16x8x128xf32>
    %64 = arith.mulf %60, %63 : vector<16x8x128xf32>
    %c0_30 = arith.constant 0 : index
    %c0_31 = arith.constant 0 : index
    %65 = vector.load %arg10[%c0_30, %c0_31] : memref<1x128xf32, #tpu.memory_space<vmem>>, vector<1x128xf32>
    %66 = vector.shape_cast %65 : vector<1x128xf32> to vector<1x1x128xf32>
    %67 = vector.broadcast %66 : vector<1x1x128xf32> to vector<16x8x128xf32>
    %68 = arith.addf %64, %67 : vector<16x8x128xf32>
    %69 = vector.shape_cast %68 : vector<16x8x128xf32> to vector<128x128xf32>
    %70 = arith.truncf %69 : vector<128x128xf32> to vector<128x128xbf16>
    %c0_32 = arith.constant 0 : index
    %c0_33 = arith.constant 0 : index
    %71 = vector.load %arg11[%c0_32, %c0_33] : memref<128x256xbf16, #tpu.memory_space<vmem>>, vector<128x256xbf16>
    %cst_34 = arith.constant dense<0.000000e+00> : vector<128x256xf32>
    %72 = tpu.matmul %70, %71, %cst_34 {dimension_numbers = #tpu.dot_dimension_numbers<[1], [0], [0], [1], [0, 0, 1, 1], [], []>} : vector<128x128xbf16>, vector<128x256xbf16>, vector<128x256xf32> -> vector<128x256xf32>
    %c0_35 = arith.constant 0 : index
    %c0_36 = arith.constant 0 : index
    %73 = vector.load %arg12[%c0_35, %c0_36] : memref<1x256xf32, #tpu.memory_space<vmem>>, vector<1x256xf32>
    %74 = vector.broadcast %73 : vector<1x256xf32> to vector<128x256xf32>
    %75 = arith.addf %72, %74 : vector<128x256xf32>
    %cst_37 = arith.constant 0.000000e+00 : f32
    %76 = vector.broadcast %cst_37 : f32 to vector<128x256xf32>
    %77 = arith.maximumf %75, %76 : vector<128x256xf32>
    %78 = arith.truncf %77 : vector<128x256xf32> to vector<128x256xbf16>
    %c0_38 = arith.constant 0 : index
    %c0_39 = arith.constant 0 : index
    %79 = vector.load %arg13[%c0_38, %c0_39] : memref<256x128xbf16, #tpu.memory_space<vmem>>, vector<256x128xbf16>
    %cst_40 = arith.constant dense<0.000000e+00> : vector<128x128xf32>
    %80 = tpu.matmul %78, %79, %cst_40 {dimension_numbers = #tpu.dot_dimension_numbers<[1], [0], [0], [1], [0, 0, 1, 1], [], []>} : vector<128x256xbf16>, vector<256x128xbf16>, vector<128x128xf32> -> vector<128x128xf32>
    %c0_41 = arith.constant 0 : index
    %c0_42 = arith.constant 0 : index
    %81 = vector.load %arg14[%c0_41, %c0_42] : memref<1x128xf32, #tpu.memory_space<vmem>>, vector<1x128xf32>
    %82 = vector.broadcast %81 : vector<1x128xf32> to vector<128x128xf32>
    %83 = arith.addf %80, %82 : vector<128x128xf32>
    %84 = arith.addf %83, %69 : vector<128x128xf32>
    %cst_43 = arith.constant dense<0.000000e+00> : vector<128xf32>
    %85 = vector.multi_reduction <add>, %84, %cst_43 [1] : vector<128x128xf32> to vector<128xf32>
    %86 = vector.shape_cast %85 : vector<128xf32> to vector<128x1xf32>
    %cst_44 = arith.constant 1.280000e+02 : f32
    %87 = vector.broadcast %cst_44 : f32 to vector<128x1xf32>
    %88 = arith.divf %86, %87 : vector<128x1xf32>
    %89 = vector.broadcast %88 : vector<128x1xf32> to vector<128x128xf32>
    %90 = arith.subf %84, %89 : vector<128x128xf32>
    %91 = arith.mulf %90, %90 : vector<128x128xf32>
    %cst_45 = arith.constant dense<0.000000e+00> : vector<128xf32>
    %92 = vector.multi_reduction <add>, %91, %cst_45 [1] : vector<128x128xf32> to vector<128xf32>
    %93 = vector.shape_cast %92 : vector<128xf32> to vector<128x1xf32>
    %cst_46 = arith.constant 1.280000e+02 : f32
    %94 = vector.broadcast %cst_46 : f32 to vector<128x1xf32>
    %95 = arith.divf %93, %94 : vector<128x1xf32>
    %96 = vector.broadcast %88 : vector<128x1xf32> to vector<128x128xf32>
    %97 = arith.subf %84, %96 : vector<128x128xf32>
    %cst_47 = arith.constant 9.99999974E-6 : f32
    %98 = vector.broadcast %cst_47 : f32 to vector<128x1xf32>
    %99 = arith.addf %95, %98 : vector<128x1xf32>
    %100 = math.rsqrt %99 : vector<128x1xf32>
    %101 = vector.broadcast %100 : vector<128x1xf32> to vector<128x128xf32>
    %102 = arith.mulf %97, %101 : vector<128x128xf32>
    %c0_48 = arith.constant 0 : index
    %c0_49 = arith.constant 0 : index
    %103 = vector.load %arg15[%c0_48, %c0_49] : memref<1x128xf32, #tpu.memory_space<vmem>>, vector<1x128xf32>
    %104 = vector.broadcast %103 : vector<1x128xf32> to vector<128x128xf32>
    %105 = arith.mulf %102, %104 : vector<128x128xf32>
    %c0_50 = arith.constant 0 : index
    %c0_51 = arith.constant 0 : index
    %106 = vector.load %arg16[%c0_50, %c0_51] : memref<1x128xf32, #tpu.memory_space<vmem>>, vector<1x128xf32>
    %107 = vector.broadcast %106 : vector<1x128xf32> to vector<128x128xf32>
    %108 = arith.addf %105, %107 : vector<128x128xf32>
    %109 = vector.shape_cast %108 : vector<128x128xf32> to vector<16x8x128xf32>
    %cst_52 = arith.constant dense<0.000000e+00> : vector<16x128xf32>
    %110 = vector.multi_reduction <add>, %109, %cst_52 [1] : vector<16x8x128xf32> to vector<16x128xf32>
    %cst_53 = arith.constant 8.000000e+00 : f32
    %111 = vector.broadcast %cst_53 : f32 to vector<16x128xf32>
    %112 = arith.divf %110, %111 : vector<16x128xf32>
    %c0_54 = arith.constant 0 : index
    %c0_55 = arith.constant 0 : index
    %113 = vector.load %arg21[%c0_54, %c0_55] : memref<16x128xf32, #tpu.memory_space<vmem>>, vector<16x128xf32>
    tpu.vector_store %arg21[%c0_54, %c0_55], %112 {strides = array<i32>} : memref<16x128xf32, #tpu.memory_space<vmem>>, vector<16x128xf32>,
    %114 = arith.truncf %112 : vector<16x128xf32> to vector<16x128xbf16>
    %c0_56 = arith.constant 0 : index
    %c0_57 = arith.constant 0 : index
    %115 = vector.load %arg17[%c0_56, %c0_57] : memref<128x32xbf16, #tpu.memory_space<vmem>>, vector<128x32xbf16>
    %cst_58 = arith.constant dense<0.000000e+00> : vector<16x32xf32>
    %116 = tpu.matmul %114, %115, %cst_58 {dimension_numbers = #tpu.dot_dimension_numbers<[1], [0], [0], [1], [0, 0, 1, 1], [], []>} : vector<16x128xbf16>, vector<128x32xbf16>, vector<16x32xf32> -> vector<16x32xf32>
    %c0_59 = arith.constant 0 : index
    %c0_60 = arith.constant 0 : index
    %117 = vector.load %arg18[%c0_59, %c0_60] : memref<1x32xf32, #tpu.memory_space<vmem>>, vector<1x32xf32>
    %118 = vector.broadcast %117 : vector<1x32xf32> to vector<16x32xf32>
    %119 = arith.addf %116, %118 : vector<16x32xf32>
    %cst_61 = arith.constant 0.000000e+00 : f32
    %120 = vector.broadcast %cst_61 : f32 to vector<16x32xf32>
    %121 = arith.maximumf %119, %120 : vector<16x32xf32>
    %122 = arith.truncf %121 : vector<16x32xf32> to vector<16x32xbf16>
    %c0_62 = arith.constant 0 : index
    %c0_63 = arith.constant 0 : index
    %123 = vector.load %arg19[%c0_62, %c0_63] : memref<32x128xbf16, #tpu.memory_space<vmem>>, vector<32x128xbf16>
    %cst_64 = arith.constant dense<0.000000e+00> : vector<16x128xf32>
    %124 = tpu.matmul %122, %123, %cst_64 {dimension_numbers = #tpu.dot_dimension_numbers<[1], [0], [0], [1], [0, 0, 1, 1], [], []>} : vector<16x32xbf16>, vector<32x128xbf16>, vector<16x128xf32> -> vector<16x128xf32>
    %c0_65 = arith.constant 0 : index
    %c0_66 = arith.constant 0 : index
    %125 = vector.load %arg20[%c0_65, %c0_66] : memref<1x128xf32, #tpu.memory_space<vmem>>, vector<1x128xf32>
    %126 = vector.broadcast %125 : vector<1x128xf32> to vector<16x128xf32>
    %127 = arith.addf %124, %126 : vector<16x128xf32>
    %c0_67 = arith.constant 0 : index
    %c0_68 = arith.constant 0 : index
    %128 = vector.load %arg22[%c0_67, %c0_68] : memref<16x128xf32, #tpu.memory_space<vmem>>, vector<16x128xf32>
    tpu.vector_store %arg22[%c0_67, %c0_68], %127 {strides = array<i32>} : memref<16x128xf32, #tpu.memory_space<vmem>>, vector<16x128xf32>,
    return
  }
  func.func @transform_0(%arg0: i32) -> (i32, i32, i32) {
    %c0_i32 = arith.constant 0 : i32
    %c0_i32_0 = arith.constant 0 : i32
    %c0_i32_1 = arith.constant 0 : i32
    return %arg0, %c0_i32, %c0_i32_0 : i32, i32, i32
  }
  func.func @transform_1(%arg0: i32) -> (i32, i32, i32) {
    %c0_i32 = arith.constant 0 : i32
    %c0_i32_0 = arith.constant 0 : i32
    %c0_i32_1 = arith.constant 0 : i32
    return %arg0, %c0_i32, %c0_i32_0 : i32, i32, i32
  }
  func.func @transform_2(%arg0: i32) -> (i32, i32) {
    %c0_i32 = arith.constant 0 : i32
    %c0_i32_0 = arith.constant 0 : i32
    %c0_i32_1 = arith.constant 0 : i32
    return %c0_i32, %c0_i32_0 : i32, i32
  }
  func.func @transform_3(%arg0: i32) -> (i32, i32) {
    %c0_i32 = arith.constant 0 : i32
    %c0_i32_0 = arith.constant 0 : i32
    %c0_i32_1 = arith.constant 0 : i32
    return %c0_i32, %c0_i32_0 : i32, i32
  }
  func.func @transform_4(%arg0: i32) -> (i32, i32) {
    %c0_i32 = arith.constant 0 : i32
    %c0_i32_0 = arith.constant 0 : i32
    %c0_i32_1 = arith.constant 0 : i32
    return %c0_i32, %c0_i32_0 : i32, i32
  }
  func.func @transform_5(%arg0: i32) -> (i32, i32) {
    %c0_i32 = arith.constant 0 : i32
    %c0_i32_0 = arith.constant 0 : i32
    %c0_i32_1 = arith.constant 0 : i32
    return %c0_i32, %c0_i32_0 : i32, i32
  }
  func.func @transform_6(%arg0: i32) -> (i32, i32) {
    %c0_i32 = arith.constant 0 : i32
    %c0_i32_0 = arith.constant 0 : i32
    %c0_i32_1 = arith.constant 0 : i32
    return %c0_i32, %c0_i32_0 : i32, i32
  }
  func.func @transform_7(%arg0: i32) -> (i32, i32) {
    %c0_i32 = arith.constant 0 : i32
    %c0_i32_0 = arith.constant 0 : i32
    %c0_i32_1 = arith.constant 0 : i32
    return %c0_i32, %c0_i32_0 : i32, i32
  }
  func.func @transform_8(%arg0: i32) -> (i32, i32) {
    %c0_i32 = arith.constant 0 : i32
    %c0_i32_0 = arith.constant 0 : i32
    %c0_i32_1 = arith.constant 0 : i32
    return %c0_i32, %c0_i32_0 : i32, i32
  }
  func.func @transform_9(%arg0: i32) -> (i32, i32) {
    %c0_i32 = arith.constant 0 : i32
    %c0_i32_0 = arith.constant 0 : i32
    %c0_i32_1 = arith.constant 0 : i32
    return %c0_i32, %c0_i32_0 : i32, i32
  }
  func.func @transform_10(%arg0: i32) -> (i32, i32) {
    %c0_i32 = arith.constant 0 : i32
    %c0_i32_0 = arith.constant 0 : i32
    %c0_i32_1 = arith.constant 0 : i32
    return %c0_i32, %c0_i32_0 : i32, i32
  }
  func.func @transform_11(%arg0: i32) -> (i32, i32) {
    %c0_i32 = arith.constant 0 : i32
    %c0_i32_0 = arith.constant 0 : i32
    %c0_i32_1 = arith.constant 0 : i32
    return %c0_i32, %c0_i32_0 : i32, i32
  }
  func.func @transform_12(%arg0: i32) -> (i32, i32) {
    %c0_i32 = arith.constant 0 : i32
    %c0_i32_0 = arith.constant 0 : i32
    %c0_i32_1 = arith.constant 0 : i32
    return %c0_i32, %c0_i32_0 : i32, i32
  }
  func.func @transform_13(%arg0: i32) -> (i32, i32) {
    %c0_i32 = arith.constant 0 : i32
    %c0_i32_0 = arith.constant 0 : i32
    %c0_i32_1 = arith.constant 0 : i32
    return %c0_i32, %c0_i32_0 : i32, i32
  }
  func.func @transform_14(%arg0: i32) -> (i32, i32) {
    %c0_i32 = arith.constant 0 : i32
    %c0_i32_0 = arith.constant 0 : i32
    %c0_i32_1 = arith.constant 0 : i32
    return %c0_i32, %c0_i32_0 : i32, i32
  }
  func.func @transform_15(%arg0: i32) -> (i32, i32) {
    %c0_i32 = arith.constant 0 : i32
    %c0_i32_0 = arith.constant 0 : i32
    %c0_i32_1 = arith.constant 0 : i32
    return %c0_i32, %c0_i32_0 : i32, i32
  }
  func.func @transform_16(%arg0: i32) -> (i32, i32) {
    %c0_i32 = arith.constant 0 : i32
    %c0_i32_0 = arith.constant 0 : i32
    %c0_i32_1 = arith.constant 0 : i32
    return %c0_i32, %c0_i32_0 : i32, i32
  }
  func.func @transform_17(%arg0: i32) -> (i32, i32) {
    %c0_i32 = arith.constant 0 : i32
    %c0_i32_0 = arith.constant 0 : i32
    %c0_i32_1 = arith.constant 0 : i32
    return %c0_i32, %c0_i32_0 : i32, i32
  }
  func.func @transform_18(%arg0: i32) -> (i32, i32) {
    %c0_i32 = arith.constant 0 : i32
    %c0_i32_0 = arith.constant 0 : i32
    %c0_i32_1 = arith.constant 0 : i32
    return %c0_i32, %c0_i32_0 : i32, i32
  }
  func.func @transform_19(%arg0: i32) -> (i32, i32) {
    %c0_i32 = arith.constant 0 : i32
    %c0_i32_0 = arith.constant 0 : i32
    %c0_i32_1 = arith.constant 0 : i32
    return %c0_i32, %c0_i32_0 : i32, i32
  }
  func.func @transform_20(%arg0: i32) -> (i32, i32) {
    %c0_i32 = arith.constant 0 : i32
    %c0_i32_0 = arith.constant 0 : i32
    return %arg0, %c0_i32 : i32, i32
  }
  func.func @transform_21(%arg0: i32) -> (i32, i32) {
    %c0_i32 = arith.constant 0 : i32
    %c0_i32_0 = arith.constant 0 : i32
    return %arg0, %c0_i32 : i32, i32
  }
}

</mosaic_0001>

<llo_original>
// kernel: tpu_custom_call.1
$region0: #{tpu_custom_call.1}
  #allocation0 [shape = 'u32[]', space=smem, size = 0x4, offset = 0x4, fixed_abs, tag = 'smem constant byte address 0x4 - core index']
  #allocation1 [shape = 'u32[144,128]{1,0:T(1,128)}', space=vmem, size = 0x12000, scoped, tag = 'internal scratch']
  %s0 = inlined_call_operand.vmem [shape: bf16[32,8,64], index: 0, kind: input, shape index: {}]
  %s1 = inlined_call_operand.vmem [shape: f32[32,1,8], index: 1, kind: input, shape index: {}]
  %s2 = inlined_call_operand.hbm [shape: bf16[8,128], index: 2, kind: input, shape index: {}]
  %s3 = inlined_call_operand.vmem [shape: f32[8,1], index: 3, kind: input, shape index: {}]
  %s4 = inlined_call_operand.hbm [shape: f32[8,128], index: 4, kind: input, shape index: {}]
  %s5 = inlined_call_operand.hbm [shape: bf16[64,128], index: 5, kind: input, shape index: {}]
  %s6 = inlined_call_operand.hbm [shape: bf16[64,128], index: 6, kind: input, shape index: {}]
  %s7 = inlined_call_operand.hbm [shape: bf16[128,128], index: 7, kind: input, shape index: {}]
  %s8 = inlined_call_operand.vmem [shape: f32[1,128], index: 8, kind: input, shape index: {}]
  %s9 = inlined_call_operand.hbm [shape: f32[1,128], index: 9, kind: input, shape index: {}]
  %s10 = inlined_call_operand.hbm [shape: bf16[128,256], index: 10, kind: input, shape index: {}]
  %s11 = inlined_call_operand.vmem [shape: f32[1,256], index: 11, kind: input, shape index: {}]
  %s12 = inlined_call_operand.hbm [shape: bf16[256,128], index: 12, kind: input, shape index: {}]
  %s13 = inlined_call_operand.vmem [shape: f32[1,128], index: 13, kind: input, shape index: {}]
  %s14 = inlined_call_operand.vmem [shape: f32[1,128], index: 14, kind: input, shape index: {}]
  %s15 = inlined_call_operand.vmem [shape: f32[1,128], index: 15, kind: input, shape index: {}]
  %s16 = inlined_call_operand.vmem [shape: bf16[128,32], index: 16, kind: input, shape index: {}]
  %s17 = inlined_call_operand.vmem [shape: f32[1,32], index: 17, kind: input, shape index: {}]
  %s18 = inlined_call_operand.vmem [shape: bf16[32,128], index: 18, kind: input, shape index: {}]
  %s19 = inlined_call_operand.vmem [shape: f32[1,128], index: 19, kind: input, shape index: {}]
  %s20 = inlined_call_operand.hbm [shape: f32[32,128], index: 20, kind: output, shape index: {0}]
  %s21 = inlined_call_operand.hbm [shape: f32[32,128], index: 21, kind: output, shape index: {1}]
  %22 = xla_tuple %s20, %s21
  %s23 = sld [smem:[#allocation0]]
  $region153: #{tpu_custom_call.1} parent=0
    _
  %s25 = ssub.s32 1, %s23
  %s26 = scalar_select 0, %s25, %s23
  $region1: #{tpu_custom_call.1} parent=0
    #allocation2 [shape = 'u8[2048]{0}', space=vmem, size = 0x800, scoped, tag = 'input window, operand 2, single buffered']
    #allocation3 [shape = 's32[2]{0}', space=sflag, size = 0x8, scoped, tag = 'scoped memory for tpu_custom_call.1']
    #allocation4 [shape = 's32[2]{0}', space=sflag, size = 0x8, scoped, tag = 'scoped memory for tpu_custom_call.1']
    #allocation5 [shape = 'u8[4096]{0}', space=vmem, size = 0x1000, scoped, tag = 'input window, operand 4, single buffered']
    #allocation6 [shape = 's32[1]{0}', space=sflag, size = 0x4, scoped, tag = 'scoped memory for tpu_custom_call.1']
    #allocation7 [shape = 'u8[16384]{0}', space=vmem, size = 0x4000, scoped, tag = 'input window, operand 5, single buffered']
    #allocation8 [shape = 'u8[16384]{0}', space=vmem, size = 0x4000, scoped, tag = 'input window, operand 6, single buffered']
    #allocation9 [shape = 's32[1]{0}', space=sflag, size = 0x4, scoped, tag = 'scoped memory for tpu_custom_call.1']
    #allocation10 [shape = 'u8[32768]{0}', space=vmem, size = 0x8000, scoped, tag = 'input window, operand 7, single buffered']
    #allocation11 [shape = 'u8[512]{0}', space=vmem, size = 0x400, scoped, tag = 'input window, operand 9, single buffered']
    #allocation12 [shape = 's32[1]{0}', space=sflag, size = 0x4, scoped, tag = 'scoped memory for tpu_custom_call.1']
    #allocation13 [shape = 'u8[65536]{0}', space=vmem, size = 0x10000, scoped, tag = 'input window, operand 10, single buffered']
    #allocation14 [shape = 'u8[65536]{0}', space=vmem, size = 0x10000, scoped, tag = 'input window, operand 12, single buffered']
    #allocation15 [shape = 's32[1]{0}', space=sflag, size = 0x4, scoped, tag = 'scoped memory for tpu_custom_call.1']
    #allocation16 [shape = 'u8[16384]{0}', space=vmem, size = 0x4000, scoped, tag = 'output window, operand 0']
    #allocation17 [shape = 'u8[16384]{0}', space=vmem, size = 0x4000, scoped, tag = 'output window, operand 1']
    #allocation18 [shape = 's32[2]{0}', space=sflag, size = 0x8, scoped, tag = 'scoped memory for tpu_custom_call.1']
    %27 = vsyncpa [#allocation3], 0
    %28 = vsyncpa [#allocation6], 0
    %29 = vsyncpa [#allocation9], 0
    %30 = vsyncpa [#allocation12], 0
    %31 = vsyncpa [#allocation15], 0
    %32 = vsyncpa [#allocation4], 0
    %s33 = scalar_lea.sflag [#allocation4], 1
    %34 = vsyncpa %s33, 0
    %35 = vsyncpa [#allocation18], 0
    %s36 = scalar_lea.sflag [#allocation18], 1
    %37 = vsyncpa %s36, 0
    loop: start=0, step=1, limit=4
    $region2: #{tpu_custom_call.1} parent=1 // loop_pre_header
      _
    $region3: #{tpu_custom_call.1} parent=1 // loop_header
      %s39 = sphi 0, %s43
      %p40 = scmp.ge.s32.totalorder %s39, 4
      %s49 = sphi 0, %s51
      %s52 = sphi 0, %s49
      %s53 = sphi 0, %s52
      %s69 = sphi 0, %s53
      %s75 = sphi 0, %s77
      %s78 = sphi 0, %s75
      %s79 = sphi 0, %s78
      %s95 = sphi 0, %s79
      %s99 = sphi 0, %s99
      %s101 = sphi 0, %s99
      %s102 = sphi 0, %s101
      %s116 = sphi 0, %s102
      %s120 = sphi 0, %s120
      %s122 = sphi 0, %s120
      %s123 = sphi 0, %s122
      %s137 = sphi 0, %s123
      %s141 = sphi 0, %s141
      %s143 = sphi 0, %s141
      %s144 = sphi 0, %s143
      %s158 = sphi 0, %s144
      %s162 = sphi 0, %s162
      %s164 = sphi 0, %s162
      %s165 = sphi 0, %s164
      %s179 = sphi 0, %s165
      %s183 = sphi 0, %s183
      %s185 = sphi 0, %s183
      %s186 = sphi 0, %s185
      %s200 = sphi 0, %s186
      %s204 = sphi 0, %s204
      %s206 = sphi 0, %s204
      %s207 = sphi 0, %s206
      %s221 = sphi 0, %s207
      %s225 = sphi 0, %s225
      %s227 = sphi 0, %s225
      %s228 = sphi 0, %s227
      %s242 = sphi 0, %s228
      %s246 = sphi 0, %s246
      %s248 = sphi 0, %s246
      %s249 = sphi 0, %s248
      %s263 = sphi 0, %s249
      %s267 = sphi 0, %s267
      %s269 = sphi 0, %s267
      %s270 = sphi 0, %s269
      %s284 = sphi 0, %s270
      %s288 = sphi 0, %s288
      %s290 = sphi 0, %s288
      %s291 = sphi 0, %s290
      %s305 = sphi 0, %s291
      %s309 = sphi 0, %s309
      %s311 = sphi 0, %s309
      %s312 = sphi 0, %s311
      %s326 = sphi 0, %s312
      %s330 = sphi 0, %s330
      %s332 = sphi 0, %s330
      %s333 = sphi 0, %s332
      %s347 = sphi 0, %s333
      %s351 = sphi 0, %s351
      %s353 = sphi 0, %s351
      %s354 = sphi 0, %s353
      %s368 = sphi 0, %s354
      %s372 = sphi 0, %s372
      %s374 = sphi 0, %s372
      %s375 = sphi 0, %s374
      %s389 = sphi 0, %s375
      %s393 = sphi 0, %s393
      %s395 = sphi 0, %s393
      %s396 = sphi 0, %s395
      %s410 = sphi 0, %s396
      %s414 = sphi 0, %s414
      %s416 = sphi 0, %s414
      %s417 = sphi 0, %s416
      %s431 = sphi 0, %s417
      %s435 = sphi 0, %s435
      %s437 = sphi 0, %s435
      %s438 = sphi 0, %s437
      %s452 = sphi 0, %s438
      %s456 = sphi 0, %s456
      %s458 = sphi 0, %s456
      %s459 = sphi 0, %s458
      %s473 = sphi 0, %s459
      %s479 = sphi 0, %s481
      %s482 = sphi 0, %s479
      %s483 = sphi 0, %s482
      %s499 = sphi 0, %s483
      %s505 = sphi 0, %s507
      %s508 = sphi 0, %s505
      %s509 = sphi 0, %s508
      %s525 = sphi 0, %s509
    $region4: #{tpu_custom_call.1} parent=1 // loop_header_branch
      %42 = sbr.rel (%p40) target = $region8
    $region5: #{tpu_custom_call.1} parent=1 // loop_body
      %s44 = ssub.s32 %s39, 1
      %s45 = ssub.s32 %s39, 2
      %s46 = sadd.s32 %s39, 1
      %s47 = ssub.s32 %s39, %s46
      %p48 = scmp.eq.s32.totalorder %s47, 0
      %s50 = sadd.s32 %s49, 1
      %s51 = scalar_select %p48, %s49, %s50
      %p54 = pneg %p48
      %p55 = scmp.eq.s32.totalorder %s39, 1
      %p56 = por %p54, %p55
      %p57 = scmp.ne.s32.totalorder %s49, %s52
      %p58 = scmp.eq.s32.totalorder %s39, 0
      %p59 = por %p57, %p58
      %p60 = scmp.ne.s32.totalorder %s49, %s52
      %p61 = scmp.eq.s32.totalorder %s44, 1
      %p62 = por %p60, %p61
      %p63 = scmp.ne.s32.totalorder %s52, %s53
      %p64 = scmp.eq.s32.totalorder %s44, 0
      %p65 = por %p63, %p64
      %p66 = scmp.ne.s32.totalorder %s52, %s53
      %p67 = scmp.eq.s32.totalorder %s45, 1
      %p68 = por %p66, %p67
      %p70 = scmp.ne.s32.totalorder %s53, %s69
      %p71 = scmp.eq.s32.totalorder %s45, 0
      %p72 = por %p70, %p71
      %s73 = ssub.s32 %s39, %s46
      %p74 = scmp.eq.s32.totalorder %s73, 0
      %s76 = sadd.s32 %s75, 1
      %s77 = scalar_select %p74, %s75, %s76
      %p80 = pneg %p74
      %p81 = scmp.eq.s32.totalorder %s39, 1
      %p82 = por %p80, %p81
      %p83 = scmp.ne.s32.totalorder %s75, %s78
      %p84 = scmp.eq.s32.totalorder %s39, 0
      %p85 = por %p83, %p84
      %p86 = scmp.ne.s32.totalorder %s75, %s78
      %p87 = scmp.eq.s32.totalorder %s44, 1
      %p88 = por %p86, %p87
      %p89 = scmp.ne.s32.totalorder %s78, %s79
      %p90 = scmp.eq.s32.totalorder %s44, 0
      %p91 = por %p89, %p90
      %p92 = scmp.ne.s32.totalorder %s78, %s79
      %p93 = scmp.eq.s32.totalorder %s45, 1
      %p94 = por %p92, %p93
      %p96 = scmp.ne.s32.totalorder %s79, %s95
      %p97 = scmp.eq.s32.totalorder %s45, 0
      %p98 = por %p96, %p97
      %s100 = sadd.s32 %s99, 1
      %p103 = scmp.eq.s32.totalorder %s39, 1
      %p104 = scmp.ne.s32.totalorder %s99, %s101
      %p105 = scmp.eq.s32.totalorder %s39, 0
      %p106 = por %p104, %p105
      %p107 = scmp.ne.s32.totalorder %s99, %s101
      %p108 = scmp.eq.s32.totalorder %s44, 1
      %p109 = por %p107, %p108
      %p110 = scmp.ne.s32.totalorder %s101, %s102
      %p111 = scmp.eq.s32.totalorder %s44, 0
      %p112 = por %p110, %p111
      %p113 = scmp.ne.s32.totalorder %s101, %s102
      %p114 = scmp.eq.s32.totalorder %s45, 1
      %p115 = por %p113, %p114
      %p117 = scmp.ne.s32.totalorder %s102, %s116
      %p118 = scmp.eq.s32.totalorder %s45, 0
      %p119 = por %p117, %p118
      %s121 = sadd.s32 %s120, 1
      %p124 = scmp.eq.s32.totalorder %s39, 1
      %p125 = scmp.ne.s32.totalorder %s120, %s122
      %p126 = scmp.eq.s32.totalorder %s39, 0
      %p127 = por %p125, %p126
      %p128 = scmp.ne.s32.totalorder %s120, %s122
      %p129 = scmp.eq.s32.totalorder %s44, 1
      %p130 = por %p128, %p129
      %p131 = scmp.ne.s32.totalorder %s122, %s123
      %p132 = scmp.eq.s32.totalorder %s44, 0
      %p133 = por %p131, %p132
      %p134 = scmp.ne.s32.totalorder %s122, %s123
      %p135 = scmp.eq.s32.totalorder %s45, 1
      %p136 = por %p134, %p135
      %p138 = scmp.ne.s32.totalorder %s123, %s137
      %p139 = scmp.eq.s32.totalorder %s45, 0
      %p140 = por %p138, %p139
      %s142 = sadd.s32 %s141, 1
      %p145 = scmp.eq.s32.totalorder %s39, 1
      %p146 = scmp.ne.s32.totalorder %s141, %s143
      %p147 = scmp.eq.s32.totalorder %s39, 0
      %p148 = por %p146, %p147
      %p149 = scmp.ne.s32.totalorder %s141, %s143
      %p150 = scmp.eq.s32.totalorder %s44, 1
      %p151 = por %p149, %p150
      %p152 = scmp.ne.s32.totalorder %s143, %s144
      %p153 = scmp.eq.s32.totalorder %s44, 0
      %p154 = por %p152, %p153
      %p155 = scmp.ne.s32.totalorder %s143, %s144
      %p156 = scmp.eq.s32.totalorder %s45, 1
      %p157 = por %p155, %p156
      %p159 = scmp.ne.s32.totalorder %s144, %s158
      %p160 = scmp.eq.s32.totalorder %s45, 0
      %p161 = por %p159, %p160
      %s163 = sadd.s32 %s162, 1
      %p166 = scmp.eq.s32.totalorder %s39, 1
      %p167 = scmp.ne.s32.totalorder %s162, %s164
      %p168 = scmp.eq.s32.totalorder %s39, 0
      %p169 = por %p167, %p168
      %p170 = scmp.ne.s32.totalorder %s162, %s164
      %p171 = scmp.eq.s32.totalorder %s44, 1
      %p172 = por %p170, %p171
      %p173 = scmp.ne.s32.totalorder %s164, %s165
      %p174 = scmp.eq.s32.totalorder %s44, 0
      %p175 = por %p173, %p174
      %p176 = scmp.ne.s32.totalorder %s164, %s165
      %p177 = scmp.eq.s32.totalorder %s45, 1
      %p178 = por %p176, %p177
      %p180 = scmp.ne.s32.totalorder %s165, %s179
      %p181 = scmp.eq.s32.totalorder %s45, 0
      %p182 = por %p180, %p181
      %s184 = sadd.s32 %s183, 1
      %p187 = scmp.eq.s32.totalorder %s39, 1
      %p188 = scmp.ne.s32.totalorder %s183, %s185
      %p189 = scmp.eq.s32.totalorder %s39, 0
      %p190 = por %p188, %p189
      %p191 = scmp.ne.s32.totalorder %s183, %s185
      %p192 = scmp.eq.s32.totalorder %s44, 1
      %p193 = por %p191, %p192
      %p194 = scmp.ne.s32.totalorder %s185, %s186
      %p195 = scmp.eq.s32.totalorder %s44, 0
      %p196 = por %p194, %p195
      %p197 = scmp.ne.s32.totalorder %s185, %s186
      %p198 = scmp.eq.s32.totalorder %s45, 1
      %p199 = por %p197, %p198
      %p201 = scmp.ne.s32.totalorder %s186, %s200
      %p202 = scmp.eq.s32.totalorder %s45, 0
      %p203 = por %p201, %p202
      %s205 = sadd.s32 %s204, 1
      %p208 = scmp.eq.s32.totalorder %s39, 1
      %p209 = scmp.ne.s32.totalorder %s204, %s206
      %p210 = scmp.eq.s32.totalorder %s39, 0
      %p211 = por %p209, %p210
      %p212 = scmp.ne.s32.totalorder %s204, %s206
      %p213 = scmp.eq.s32.totalorder %s44, 1
      %p214 = por %p212, %p213
      %p215 = scmp.ne.s32.totalorder %s206, %s207
      %p216 = scmp.eq.s32.totalorder %s44, 0
      %p217 = por %p215, %p216
      %p218 = scmp.ne.s32.totalorder %s206, %s207
      %p219 = scmp.eq.s32.totalorder %s45, 1
      %p220 = por %p218, %p219
      %p222 = scmp.ne.s32.totalorder %s207, %s221
      %p223 = scmp.eq.s32.totalorder %s45, 0
      %p224 = por %p222, %p223
      %s226 = sadd.s32 %s225, 1
      %p229 = scmp.eq.s32.totalorder %s39, 1
      %p230 = scmp.ne.s32.totalorder %s225, %s227
      %p231 = scmp.eq.s32.totalorder %s39, 0
      %p232 = por %p230, %p231
      %p233 = scmp.ne.s32.totalorder %s225, %s227
      %p234 = scmp.eq.s32.totalorder %s44, 1
      %p235 = por %p233, %p234
      %p236 = scmp.ne.s32.totalorder %s227, %s228
      %p237 = scmp.eq.s32.totalorder %s44, 0
      %p238 = por %p236, %p237
      %p239 = scmp.ne.s32.totalorder %s227, %s228
      %p240 = scmp.eq.s32.totalorder %s45, 1
      %p241 = por %p239, %p240
      %p243 = scmp.ne.s32.totalorder %s228, %s242
      %p244 = scmp.eq.s32.totalorder %s45, 0
      %p245 = por %p243, %p244
      %s247 = sadd.s32 %s246, 1
      %p250 = scmp.eq.s32.totalorder %s39, 1
      %p251 = scmp.ne.s32.totalorder %s246, %s248
      %p252 = scmp.eq.s32.totalorder %s39, 0
      %p253 = por %p251, %p252
      %p254 = scmp.ne.s32.totalorder %s246, %s248
      %p255 = scmp.eq.s32.totalorder %s44, 1
      %p256 = por %p254, %p255
      %p257 = scmp.ne.s32.totalorder %s248, %s249
      %p258 = scmp.eq.s32.totalorder %s44, 0
      %p259 = por %p257, %p258
      %p260 = scmp.ne.s32.totalorder %s248, %s249
      %p261 = scmp.eq.s32.totalorder %s45, 1
      %p262 = por %p260, %p261
      %p264 = scmp.ne.s32.totalorder %s249, %s263
      %p265 = scmp.eq.s32.totalorder %s45, 0
      %p266 = por %p264, %p265
      %s268 = sadd.s32 %s267, 1
      %p271 = scmp.eq.s32.totalorder %s39, 1
      %p272 = scmp.ne.s32.totalorder %s267, %s269
      %p273 = scmp.eq.s32.totalorder %s39, 0
      %p274 = por %p272, %p273
      %p275 = scmp.ne.s32.totalorder %s267, %s269
      %p276 = scmp.eq.s32.totalorder %s44, 1
      %p277 = por %p275, %p276
      %p278 = scmp.ne.s32.totalorder %s269, %s270
      %p279 = scmp.eq.s32.totalorder %s44, 0
      %p280 = por %p278, %p279
      %p281 = scmp.ne.s32.totalorder %s269, %s270
      %p282 = scmp.eq.s32.totalorder %s45, 1
      %p283 = por %p281, %p282
      %p285 = scmp.ne.s32.totalorder %s270, %s284
      %p286 = scmp.eq.s32.totalorder %s45, 0
      %p287 = por %p285, %p286
      %s289 = sadd.s32 %s288, 1
      %p292 = scmp.eq.s32.totalorder %s39, 1
      %p293 = scmp.ne.s32.totalorder %s288, %s290
      %p294 = scmp.eq.s32.totalorder %s39, 0
      %p295 = por %p293, %p294
      %p296 = scmp.ne.s32.totalorder %s288, %s290
      %p297 = scmp.eq.s32.totalorder %s44, 1
      %p298 = por %p296, %p297
      %p299 = scmp.ne.s32.totalorder %s290, %s291
      %p300 = scmp.eq.s32.totalorder %s44, 0
      %p301 = por %p299, %p300
      %p302 = scmp.ne.s32.totalorder %s290, %s291
      %p303 = scmp.eq.s32.totalorder %s45, 1
      %p304 = por %p302, %p303
      %p306 = scmp.ne.s32.totalorder %s291, %s305
      %p307 = scmp.eq.s32.totalorder %s45, 0
      %p308 = por %p306, %p307
      %s310 = sadd.s32 %s309, 1
      %p313 = scmp.eq.s32.totalorder %s39, 1
      %p314 = scmp.ne.s32.totalorder %s309, %s311
      %p315 = scmp.eq.s32.totalorder %s39, 0
      %p316 = por %p314, %p315
      %p317 = scmp.ne.s32.totalorder %s309, %s311
      %p318 = scmp.eq.s32.totalorder %s44, 1
      %p319 = por %p317, %p318
      %p320 = scmp.ne.s32.totalorder %s311, %s312
      %p321 = scmp.eq.s32.totalorder %s44, 0
      %p322 = por %p320, %p321
      %p323 = scmp.ne.s32.totalorder %s311, %s312
      %p324 = scmp.eq.s32.totalorder %s45, 1
      %p325 = por %p323, %p324
      %p327 = scmp.ne.s32.totalorder %s312, %s326
      %p328 = scmp.eq.s32.totalorder %s45, 0
      %p329 = por %p327, %p328
      %s331 = sadd.s32 %s330, 1
      %p334 = scmp.eq.s32.totalorder %s39, 1
      %p335 = scmp.ne.s32.totalorder %s330, %s332
      %p336 = scmp.eq.s32.totalorder %s39, 0
      %p337 = por %p335, %p336
      %p338 = scmp.ne.s32.totalorder %s330, %s332
      %p339 = scmp.eq.s32.totalorder %s44, 1
      %p340 = por %p338, %p339
      %p341 = scmp.ne.s32.totalorder %s332, %s333
      %p342 = scmp.eq.s32.totalorder %s44, 0
      %p343 = por %p341, %p342
      %p344 = scmp.ne.s32.totalorder %s332, %s333
      %p345 = scmp.eq.s32.totalorder %s45, 1
      %p346 = por %p344, %p345
      %p348 = scmp.ne.s32.totalorder %s333, %s347
      %p349 = scmp.eq.s32.totalorder %s45, 0
      %p350 = por %p348, %p349
      %s352 = sadd.s32 %s351, 1
      %p355 = scmp.eq.s32.totalorder %s39, 1
      %p356 = scmp.ne.s32.totalorder %s351, %s353
      %p357 = scmp.eq.s32.totalorder %s39, 0
      %p358 = por %p356, %p357
      %p359 = scmp.ne.s32.totalorder %s351, %s353
      %p360 = scmp.eq.s32.totalorder %s44, 1
      %p361 = por %p359, %p360
      %p362 = scmp.ne.s32.totalorder %s353, %s354
      %p363 = scmp.eq.s32.totalorder %s44, 0
      %p364 = por %p362, %p363
      %p365 = scmp.ne.s32.totalorder %s353, %s354
      %p366 = scmp.eq.s32.totalorder %s45, 1
      %p367 = por %p365, %p366
      %p369 = scmp.ne.s32.totalorder %s354, %s368
      %p370 = scmp.eq.s32.totalorder %s45, 0
      %p371 = por %p369, %p370
      %s373 = sadd.s32 %s372, 1
      %p376 = scmp.eq.s32.totalorder %s39, 1
      %p377 = scmp.ne.s32.totalorder %s372, %s374
      %p378 = scmp.eq.s32.totalorder %s39, 0
      %p379 = por %p377, %p378
      %p380 = scmp.ne.s32.totalorder %s372, %s374
      %p381 = scmp.eq.s32.totalorder %s44, 1
      %p382 = por %p380, %p381
      %p383 = scmp.ne.s32.totalorder %s374, %s375
      %p384 = scmp.eq.s32.totalorder %s44, 0
      %p385 = por %p383, %p384
      %p386 = scmp.ne.s32.totalorder %s374, %s375
      %p387 = scmp.eq.s32.totalorder %s45, 1
      %p388 = por %p386, %p387
      %p390 = scmp.ne.s32.totalorder %s375, %s389
      %p391 = scmp.eq.s32.totalorder %s45, 0
      %p392 = por %p390, %p391
      %s394 = sadd.s32 %s393, 1
      %p397 = scmp.eq.s32.totalorder %s39, 1
      %p398 = scmp.ne.s32.totalorder %s393, %s395
      %p399 = scmp.eq.s32.totalorder %s39, 0
      %p400 = por %p398, %p399
      %p401 = scmp.ne.s32.totalorder %s393, %s395
      %p402 = scmp.eq.s32.totalorder %s44, 1
      %p403 = por %p401, %p402
      %p404 = scmp.ne.s32.totalorder %s395, %s396
      %p405 = scmp.eq.s32.totalorder %s44, 0
      %p406 = por %p404, %p405
      %p407 = scmp.ne.s32.totalorder %s395, %s396
      %p408 = scmp.eq.s32.totalorder %s45, 1
      %p409 = por %p407, %p408
      %p411 = scmp.ne.s32.totalorder %s396, %s410
      %p412 = scmp.eq.s32.totalorder %s45, 0
      %p413 = por %p411, %p412
      %s415 = sadd.s32 %s414, 1
      %p418 = scmp.eq.s32.totalorder %s39, 1
      %p419 = scmp.ne.s32.totalorder %s414, %s416
      %p420 = scmp.eq.s32.totalorder %s39, 0
      %p421 = por %p419, %p420
      %p422 = scmp.ne.s32.totalorder %s414, %s416
      %p423 = scmp.eq.s32.totalorder %s44, 1
      %p424 = por %p422, %p423
      %p425 = scmp.ne.s32.totalorder %s416, %s417
      %p426 = scmp.eq.s32.totalorder %s44, 0
      %p427 = por %p425, %p426
      %p428 = scmp.ne.s32.totalorder %s416, %s417
      %p429 = scmp.eq.s32.totalorder %s45, 1
      %p430 = por %p428, %p429
      %p432 = scmp.ne.s32.totalorder %s417, %s431
      %p433 = scmp.eq.s32.totalorder %s45, 0
      %p434 = por %p432, %p433
      %s436 = sadd.s32 %s435, 1
      %p439 = scmp.eq.s32.totalorder %s39, 1
      %p440 = scmp.ne.s32.totalorder %s435, %s437
      %p441 = scmp.eq.s32.totalorder %s39, 0
      %p442 = por %p440, %p441
      %p443 = scmp.ne.s32.totalorder %s435, %s437
      %p444 = scmp.eq.s32.totalorder %s44, 1
      %p445 = por %p443, %p444
      %p446 = scmp.ne.s32.totalorder %s437, %s438
      %p447 = scmp.eq.s32.totalorder %s44, 0
      %p448 = por %p446, %p447
      %p449 = scmp.ne.s32.totalorder %s437, %s438
      %p450 = scmp.eq.s32.totalorder %s45, 1
      %p451 = por %p449, %p450
      %p453 = scmp.ne.s32.totalorder %s438, %s452
      %p454 = scmp.eq.s32.totalorder %s45, 0
      %p455 = por %p453, %p454
      %s457 = sadd.s32 %s456, 1
      %p460 = scmp.eq.s32.totalorder %s39, 1
      %p461 = scmp.ne.s32.totalorder %s456, %s458
      %p462 = scmp.eq.s32.totalorder %s39, 0
      %p463 = por %p461, %p462
      %p464 = scmp.ne.s32.totalorder %s456, %s458
      %p465 = scmp.eq.s32.totalorder %s44, 1
      %p466 = por %p464, %p465
      %p467 = scmp.ne.s32.totalorder %s458, %s459
      %p468 = scmp.eq.s32.totalorder %s44, 0
      %p469 = por %p467, %p468
      %p470 = scmp.ne.s32.totalorder %s458, %s459
      %p471 = scmp.eq.s32.totalorder %s45, 1
      %p472 = por %p470, %p471
      %p474 = scmp.ne.s32.totalorder %s459, %s473
      %p475 = scmp.eq.s32.totalorder %s45, 0
      %p476 = por %p474, %p475
      %s477 = ssub.s32 %s39, %s46
      %p478 = scmp.eq.s32.totalorder %s477, 0
      %s480 = sadd.s32 %s479, 1
      %s481 = scalar_select %p478, %s479, %s480
      %p484 = pneg %p478
      %p485 = scmp.eq.s32.totalorder %s39, 1
      %p486 = por %p484, %p485
      %p487 = scmp.ne.s32.totalorder %s479, %s482
      %p488 = scmp.eq.s32.totalorder %s39, 0
      %p489 = por %p487, %p488
      %p490 = scmp.ne.s32.totalorder %s479, %s482
      %p491 = scmp.eq.s32.totalorder %s44, 1
      %p492 = por %p490, %p491
      %p493 = scmp.ne.s32.totalorder %s482, %s483
      %p494 = scmp.eq.s32.totalorder %s44, 0
      %p495 = por %p493, %p494
      %p496 = scmp.ne.s32.totalorder %s482, %s483
      %p497 = scmp.eq.s32.totalorder %s45, 1
      %p498 = por %p496, %p497
      %p500 = scmp.ne.s32.totalorder %s483, %s499
      %p501 = scmp.eq.s32.totalorder %s45, 0
      %p502 = por %p500, %p501
      %s503 = ssub.s32 %s39, %s46
      %p504 = scmp.eq.s32.totalorder %s503, 0
      %s506 = sadd.s32 %s505, 1
      %s507 = scalar_select %p504, %s505, %s506
      %p510 = pneg %p504
      %p511 = scmp.eq.s32.totalorder %s39, 1
      %p512 = por %p510, %p511
      %p513 = scmp.ne.s32.totalorder %s505, %s508
      %p514 = scmp.eq.s32.totalorder %s39, 0
      %p515 = por %p513, %p514
      %p516 = scmp.ne.s32.totalorder %s505, %s508
      %p517 = scmp.eq.s32.totalorder %s44, 1
      %p518 = por %p516, %p517
      %p519 = scmp.ne.s32.totalorder %s508, %s509
      %p520 = scmp.eq.s32.totalorder %s44, 0
      %p521 = por %p519, %p520
      %p522 = scmp.ne.s32.totalorder %s508, %s509
      %p523 = scmp.eq.s32.totalorder %s45, 1
      %p524 = por %p522, %p523
      %p526 = scmp.ne.s32.totalorder %s509, %s525
      %p527 = scmp.eq.s32.totalorder %s45, 0
      %p528 = por %p526, %p527
      %p529 = scmp.le.s32.totalorder 1, %s39
      %p530 = scmp.lt.s32.totalorder %s39, 3
      %p531 = pnand %p529, %p530
      %p532 = pneg %p531
      // Predicated region
      $region9: #{tpu_custom_call.1} parent=5 // pred_check
        _
      $region10: #{tpu_custom_call.1} parent=5 // pred_check_branch
        %534 = sbr.rel (%p531) target = $region12
      $region11: #{tpu_custom_call.1} parent=5 // pred_region
        %s535 = ssub.s32 %s39, 1
        // Predicated region
        $region13: #{tpu_custom_call.1} parent=11 // pred_check
          %p536 = pneg %p112
        $region14: #{tpu_custom_call.1} parent=11 // pred_check_branch
          %538 = sbr.rel (%p536) target = $region16
        $region15: #{tpu_custom_call.1} parent=11 // pred_region
          %s540 = ssub.s32 64, 64
          %541 = vsyncadd [#allocation3], %s540
          %s543 = sshll.u32 [#allocation2], 4
          %s544 = int_to_ptr.vmem [resolvable:$true] %s543
          %546 = dma.hbm_to_vmem [thread:$0]  %s2, 64, %s544, [#allocation3]
        $region16: #{tpu_custom_call.1} parent=11 // pred_fallthru
          _
        // Predicated region
        $region17: #{tpu_custom_call.1} parent=11 // pred_check
          %p547 = pneg %p133
        $region18: #{tpu_custom_call.1} parent=11 // pred_check_branch
          %549 = sbr.rel (%p547) target = $region20
        $region19: #{tpu_custom_call.1} parent=11 // pred_region
          _
        $region20: #{tpu_custom_call.1} parent=11 // pred_fallthru
          _
        // Predicated region
        $region21: #{tpu_custom_call.1} parent=11 // pred_check
          %p550 = pneg %p154
        $region22: #{tpu_custom_call.1} parent=11 // pred_check_branch
          %552 = sbr.rel (%p550) target = $region24
        $region23: #{tpu_custom_call.1} parent=11 // pred_region
          %s554 = ssub.s32 128, 128
          %555 = vsyncadd [#allocation6], %s554
          %s557 = sshll.u32 [#allocation5], 4
          %s558 = int_to_ptr.vmem [resolvable:$true] %s557
          %560 = dma.hbm_to_vmem [thread:$0]  %s4, 128, %s558, [#allocation6]
        $region24: #{tpu_custom_call.1} parent=11 // pred_fallthru
          _
        // Predicated region
        $region25: #{tpu_custom_call.1} parent=11 // pred_check
          %p561 = pneg %p175
        $region26: #{tpu_custom_call.1} parent=11 // pred_check_branch
          %563 = sbr.rel (%p561) target = $region28
        $region27: #{tpu_custom_call.1} parent=11 // pred_region
          %s565 = ssub.s32 512, 512
          %566 = vsyncadd [#allocation6], %s565
          %s567 = sshll.u32 [#allocation7], 4
          %s568 = int_to_ptr.vmem [resolvable:$true] %s567
          %573 = dma.hbm_to_vmem [thread:$0]  %s5, 512, %s568, [#allocation6], 64, 64, 4
        $region28: #{tpu_custom_call.1} parent=11 // pred_fallthru
          _
        // Predicated region
        $region29: #{tpu_custom_call.1} parent=11 // pred_check
          %p574 = pneg %p196
        $region30: #{tpu_custom_call.1} parent=11 // pred_check_branch
          %576 = sbr.rel (%p574) target = $region32
        $region31: #{tpu_custom_call.1} parent=11 // pred_region
          %s578 = ssub.s32 512, 512
          %579 = vsyncadd [#allocation9], %s578
          %s580 = sshll.u32 [#allocation8], 4
          %s581 = int_to_ptr.vmem [resolvable:$true] %s580
          %586 = dma.hbm_to_vmem [thread:$0]  %s6, 512, %s581, [#allocation9], 64, 64, 4
        $region32: #{tpu_custom_call.1} parent=11 // pred_fallthru
          _
        // Predicated region
        $region33: #{tpu_custom_call.1} parent=11 // pred_check
          %p587 = pneg %p217
        $region34: #{tpu_custom_call.1} parent=11 // pred_check_branch
          %589 = sbr.rel (%p587) target = $region36
        $region35: #{tpu_custom_call.1} parent=11 // pred_region
          %s591 = ssub.s32 1024, 1024
          %592 = vsyncadd [#allocation9], %s591
          %s593 = sshll.u32 [#allocation10], 4
          %s594 = int_to_ptr.vmem [resolvable:$true] %s593
          %599 = dma.hbm_to_vmem [thread:$0]  %s7, 1024, %s594, [#allocation9], 64, 64, 4
        $region36: #{tpu_custom_call.1} parent=11 // pred_fallthru
          _
        // Predicated region
        $region37: #{tpu_custom_call.1} parent=11 // pred_check
          %p600 = pneg %p238
        $region38: #{tpu_custom_call.1} parent=11 // pred_check_branch
          %602 = sbr.rel (%p600) target = $region40
        $region39: #{tpu_custom_call.1} parent=11 // pred_region
          _
        $region40: #{tpu_custom_call.1} parent=11 // pred_fallthru
          _
        // Predicated region
        $region41: #{tpu_custom_call.1} parent=11 // pred_check
          %p603 = pneg %p259
        $region42: #{tpu_custom_call.1} parent=11 // pred_check_branch
          %605 = sbr.rel (%p603) target = $region44
        $region43: #{tpu_custom_call.1} parent=11 // pred_region
          %s607 = ssub.s32 16, 16
          %608 = vsyncadd [#allocation12], %s607
          %s610 = sshll.u32 [#allocation11], 4
          %s611 = int_to_ptr.vmem [resolvable:$true] %s610
          %613 = dma.hbm_to_vmem [thread:$0]  %s9, 16, %s611, [#allocation12]
        $region44: #{tpu_custom_call.1} parent=11 // pred_fallthru
          _
        // Predicated region
        $region45: #{tpu_custom_call.1} parent=11 // pred_check
          %p614 = pneg %p280
        $region46: #{tpu_custom_call.1} parent=11 // pred_check_branch
          %616 = sbr.rel (%p614) target = $region48
        $region47: #{tpu_custom_call.1} parent=11 // pred_region
          %s618 = ssub.s32 2048, 2048
          %619 = vsyncadd [#allocation12], %s618
          %s620 = sshll.u32 [#allocation13], 4
          %s621 = int_to_ptr.vmem [resolvable:$true] %s620
          %626 = dma.hbm_to_vmem [thread:$0]  %s10, 2048, %s621, [#allocation12], 128, 128, 8
        $region48: #{tpu_custom_call.1} parent=11 // pred_fallthru
          _
        // Predicated region
        $region49: #{tpu_custom_call.1} parent=11 // pred_check
          %p627 = pneg %p301
        $region50: #{tpu_custom_call.1} parent=11 // pred_check_branch
          %629 = sbr.rel (%p627) target = $region52
        $region51: #{tpu_custom_call.1} parent=11 // pred_region
          _
        $region52: #{tpu_custom_call.1} parent=11 // pred_fallthru
          _
        // Predicated region
        $region53: #{tpu_custom_call.1} parent=11 // pred_check
          %p630 = pneg %p322
        $region54: #{tpu_custom_call.1} parent=11 // pred_check_branch
          %632 = sbr.rel (%p630) target = $region56
        $region55: #{tpu_custom_call.1} parent=11 // pred_region
          %s634 = ssub.s32 2048, 2048
          %635 = vsyncadd [#allocation15], %s634
          %s636 = sshll.u32 [#allocation14], 4
          %s637 = int_to_ptr.vmem [resolvable:$true] %s636
          %642 = dma.hbm_to_vmem [thread:$0]  %s12, 2048, %s637, [#allocation15], 64, 64, 4
        $region56: #{tpu_custom_call.1} parent=11 // pred_fallthru
          _
        // Predicated region
        $region57: #{tpu_custom_call.1} parent=11 // pred_check
          %p643 = pneg %p343
        $region58: #{tpu_custom_call.1} parent=11 // pred_check_branch
          %645 = sbr.rel (%p643) target = $region60
        $region59: #{tpu_custom_call.1} parent=11 // pred_region
          _
        $region60: #{tpu_custom_call.1} parent=11 // pred_fallthru
          _
        // Predicated region
        $region61: #{tpu_custom_call.1} parent=11 // pred_check
          %p646 = pneg %p364
        $region62: #{tpu_custom_call.1} parent=11 // pred_check_branch
          %648 = sbr.rel (%p646) target = $region64
        $region63: #{tpu_custom_call.1} parent=11 // pred_region
          _
        $region64: #{tpu_custom_call.1} parent=11 // pred_fallthru
          _
        // Predicated region
        $region65: #{tpu_custom_call.1} parent=11 // pred_check
          %p649 = pneg %p385
        $region66: #{tpu_custom_call.1} parent=11 // pred_check_branch
          %651 = sbr.rel (%p649) target = $region68
        $region67: #{tpu_custom_call.1} parent=11 // pred_region
          _
        $region68: #{tpu_custom_call.1} parent=11 // pred_fallthru
          _
        // Predicated region
        $region69: #{tpu_custom_call.1} parent=11 // pred_check
          %p652 = pneg %p406
        $region70: #{tpu_custom_call.1} parent=11 // pred_check_branch
          %654 = sbr.rel (%p652) target = $region72
        $region71: #{tpu_custom_call.1} parent=11 // pred_region
          _
        $region72: #{tpu_custom_call.1} parent=11 // pred_fallthru
          _
        // Predicated region
        $region73: #{tpu_custom_call.1} parent=11 // pred_check
          %p655 = pneg %p427
        $region74: #{tpu_custom_call.1} parent=11 // pred_check_branch
          %657 = sbr.rel (%p655) target = $region76
        $region75: #{tpu_custom_call.1} parent=11 // pred_region
          _
        $region76: #{tpu_custom_call.1} parent=11 // pred_fallthru
          _
        // Predicated region
        $region77: #{tpu_custom_call.1} parent=11 // pred_check
          %p658 = pneg %p448
        $region78: #{tpu_custom_call.1} parent=11 // pred_check_branch
          %660 = sbr.rel (%p658) target = $region80
        $region79: #{tpu_custom_call.1} parent=11 // pred_region
          _
        $region80: #{tpu_custom_call.1} parent=11 // pred_fallthru
          _
        // Predicated region
        $region81: #{tpu_custom_call.1} parent=11 // pred_check
          %p661 = pneg %p469
        $region82: #{tpu_custom_call.1} parent=11 // pred_check_branch
          %663 = sbr.rel (%p661) target = $region84
        $region83: #{tpu_custom_call.1} parent=11 // pred_region
          _
        $region84: #{tpu_custom_call.1} parent=11 // pred_fallthru
          _
      $region12: #{tpu_custom_call.1} parent=5 // pred_fallthru
        _
      %p664 = scmp.lt.s32.totalorder %s39, 2
      // Predicated region
      $region85: #{tpu_custom_call.1} parent=5 // pred_check
        %p665 = pneg %p664
      $region86: #{tpu_custom_call.1} parent=5 // pred_check_branch
        %667 = sbr.rel (%p665) target = $region88
      $region87: #{tpu_custom_call.1} parent=5 // pred_region
        // Predicated region
        $region89: #{tpu_custom_call.1} parent=87 // pred_check
          %p668 = pneg %p59
        $region90: #{tpu_custom_call.1} parent=87 // pred_check_branch
          %670 = sbr.rel (%p668) target = $region92
        $region91: #{tpu_custom_call.1} parent=87 // pred_region
          %s671 = smul.u32 16, %s39
          %p672 = scmp.lt.s32.totalorder %s671, 31
          %s673 = scalar_select %p672, %s671, 31
          %s674 = smul.addr %s673, 4
          %s675 = scalar_lea.vmem %s0, %s674
          %s676 = smul.u32 16, %s39
        $region92: #{tpu_custom_call.1} parent=87 // pred_fallthru
          _
        // Predicated region
        $region93: #{tpu_custom_call.1} parent=87 // pred_check
          %p677 = pneg %p85
        $region94: #{tpu_custom_call.1} parent=87 // pred_check_branch
          %679 = sbr.rel (%p677) target = $region96
        $region95: #{tpu_custom_call.1} parent=87 // pred_region
          %s680 = smul.u32 16, %s39
          %p681 = scmp.lt.s32.totalorder %s680, 31
          %s682 = scalar_select %p681, %s680, 31
          %s683 = scalar_lea.vmem %s1, %s682
          %s684 = smul.u32 16, %s39
        $region96: #{tpu_custom_call.1} parent=87 // pred_fallthru
          _
      $region88: #{tpu_custom_call.1} parent=5 // pred_fallthru
        _
      %p685 = scmp.le.s32.totalorder 1, %s39
      %p686 = scmp.lt.s32.totalorder %s39, 3
      %p687 = pnand %p685, %p686
      %p688 = pneg %p687
      // Predicated region
      $region97: #{tpu_custom_call.1} parent=5 // pred_check
        _
      $region98: #{tpu_custom_call.1} parent=5 // pred_check_branch
        %690 = sbr.rel (%p687) target = $region100
      $region99: #{tpu_custom_call.1} parent=5 // pred_region
        %s691 = ssub.s32 %s39, 1
        // Predicated region
        $region101: #{tpu_custom_call.1} parent=99 // pred_check
          %p692 = pneg %p112
        $region102: #{tpu_custom_call.1} parent=99 // pred_check_branch
          %694 = sbr.rel (%p692) target = $region104
        $region103: #{tpu_custom_call.1} parent=99 // pred_region
          %695 = dma.done [#allocation3], 64
        $region104: #{tpu_custom_call.1} parent=99 // pred_fallthru
          _
        // Predicated region
        $region105: #{tpu_custom_call.1} parent=99 // pred_check
          %p696 = pneg %p154
        $region106: #{tpu_custom_call.1} parent=99 // pred_check_branch
          %698 = sbr.rel (%p696) target = $region108
        $region107: #{tpu_custom_call.1} parent=99 // pred_region
          %699 = dma.done [#allocation6], 128
        $region108: #{tpu_custom_call.1} parent=99 // pred_fallthru
          _
        // Predicated region
        $region109: #{tpu_custom_call.1} parent=99 // pred_check
          %p700 = pneg %p175
        $region110: #{tpu_custom_call.1} parent=99 // pred_check_branch
          %702 = sbr.rel (%p700) target = $region112
        $region111: #{tpu_custom_call.1} parent=99 // pred_region
          %703 = dma.done [#allocation6], 512
        $region112: #{tpu_custom_call.1} parent=99 // pred_fallthru
          _
        // Predicated region
        $region113: #{tpu_custom_call.1} parent=99 // pred_check
          %p704 = pneg %p196
        $region114: #{tpu_custom_call.1} parent=99 // pred_check_branch
          %706 = sbr.rel (%p704) target = $region116
        $region115: #{tpu_custom_call.1} parent=99 // pred_region
          %707 = dma.done [#allocation9], 512
        $region116: #{tpu_custom_call.1} parent=99 // pred_fallthru
          _
        // Predicated region
        $region117: #{tpu_custom_call.1} parent=99 // pred_check
          %p708 = pneg %p217
        $region118: #{tpu_custom_call.1} parent=99 // pred_check_branch
          %710 = sbr.rel (%p708) target = $region120
        $region119: #{tpu_custom_call.1} parent=99 // pred_region
          %711 = dma.done [#allocation9], 1024
        $region120: #{tpu_custom_call.1} parent=99 // pred_fallthru
          _
        // Predicated region
        $region121: #{tpu_custom_call.1} parent=99 // pred_check
          %p712 = pneg %p259
        $region122: #{tpu_custom_call.1} parent=99 // pred_check_branch
          %714 = sbr.rel (%p712) target = $region124
        $region123: #{tpu_custom_call.1} parent=99 // pred_region
          %715 = dma.done [#allocation12], 16
        $region124: #{tpu_custom_call.1} parent=99 // pred_fallthru
          _
        // Predicated region
        $region125: #{tpu_custom_call.1} parent=99 // pred_check
          %p716 = pneg %p280
        $region126: #{tpu_custom_call.1} parent=99 // pred_check_branch
          %718 = sbr.rel (%p716) target = $region128
        $region127: #{tpu_custom_call.1} parent=99 // pred_region
          %719 = dma.done [#allocation12], 2048
        $region128: #{tpu_custom_call.1} parent=99 // pred_fallthru
          _
        // Predicated region
        $region129: #{tpu_custom_call.1} parent=99 // pred_check
          %p720 = pneg %p322
        $region130: #{tpu_custom_call.1} parent=99 // pred_check_branch
          %722 = sbr.rel (%p720) target = $region132
        $region131: #{tpu_custom_call.1} parent=99 // pred_region
          %723 = dma.done [#allocation15], 2048
        $region132: #{tpu_custom_call.1} parent=99 // pred_fallthru
          _
        %s724 = smul.u32 16, %s44
        %p725 = scmp.lt.s32.totalorder %s724, 31
        %s726 = scalar_select %p725, %s724, 31
        %s727 = smul.addr %s726, 4
        %s728 = scalar_lea.vmem %s0, %s727
        %p729 = pneg %p65
        %p730 = pneg %p62
        %s731 = smul.u32 16, %s44
        %p732 = scmp.lt.s32.totalorder %s731, 31
        %s733 = scalar_select %p732, %s731, 31
        %s734 = scalar_lea.vmem %s1, %s733
        %p735 = pneg %p91
        %p736 = pneg %p88
        %p737 = pneg %p112
        %p738 = pneg %p109
        %p739 = pneg %p133
        %p740 = pneg %p130
        %p741 = pneg %p154
        %p742 = pneg %p151
        %p743 = pneg %p175
        %p744 = pneg %p172
        %p745 = pneg %p196
        %p746 = pneg %p193
        %p747 = pneg %p217
        %p748 = pneg %p214
        %p749 = pneg %p238
        %p750 = pneg %p235
        %p751 = pneg %p259
        %p752 = pneg %p256
        %p753 = pneg %p280
        %p754 = pneg %p277
        %p755 = pneg %p301
        %p756 = pneg %p298
        %p757 = pneg %p322
        %p758 = pneg %p319
        %p759 = pneg %p343
        %p760 = pneg %p340
        %p761 = pneg %p364
        %p762 = pneg %p361
        %p763 = pneg %p385
        %p764 = pneg %p382
        %p765 = pneg %p406
        %p766 = pneg %p403
        %p767 = pneg %p427
        %p768 = pneg %p424
        %p769 = pneg %p448
        %p770 = pneg %p445
        %p771 = pneg %p469
        %p772 = pneg %p466
        %p773 = pneg %p495
        %p774 = pneg %p492
        %s775 = sand.u32 %s482, 1
        %s776 = scalar_lea.sflag [#allocation4], %s775
        %s777 = sand.u32 %s482, 1
        %s778 = smul.addr %s777, 16
        %s779 = scalar_lea.vmem [#allocation16], %s778
        %p780 = pneg %p521
        %p781 = pneg %p518
        %s782 = sand.u32 %s508, 1
        %s783 = scalar_lea.sflag [#allocation18], %s782
        %s784 = sand.u32 %s508, 1
        %s785 = smul.addr %s784, 16
        %s786 = scalar_lea.vmem [#allocation17], %s785
        %s787 = smul.u32 16, %s44
        %p788 = scmp.lt.s32.totalorder %s787, 31
        %s789 = scalar_select %p788, %s787, 31
        %s790 = smul.addr %s789, 4
        %s791 = scalar_lea.vmem %s0, %s790
        %s792 = smul.u32 16, %s44
        %s793 = smul.u32 16, %s44
        %p794 = scmp.lt.s32.totalorder %s793, 31
        %s795 = scalar_select %p794, %s793, 31
        %s796 = scalar_lea.vmem %s1, %s795
        %s797 = smul.u32 16, %s44
        %s798 = smul.u32 2, %s44
        %s799 = smul.u32 2, %s44
        %v801 = vld [vmem:[%s791] sm:$0xf]
        %v802 = vld [vmem:[%s791 + $0x4] sm:$0xf]
        %v803 = vld [vmem:[%s791 + $0x8] sm:$0xf]
        %v804 = vld [vmem:[%s791 + $0xc] sm:$0xf]
        %v805 = vld [vmem:[%s791 + $0x10] sm:$0xf]
        %v806 = vld [vmem:[%s791 + $0x14] sm:$0xf]
        %v807 = vld [vmem:[%s791 + $0x18] sm:$0xf]
        %v808 = vld [vmem:[%s791 + $0x1c] sm:$0xf]
        %v809 = vld [vmem:[%s791 + $0x20] sm:$0xf]
        %v810 = vld [vmem:[%s791 + $0x24] sm:$0xf]
        %v811 = vld [vmem:[%s791 + $0x28] sm:$0xf]
        %v812 = vld [vmem:[%s791 + $0x2c] sm:$0xf]
        %v813 = vld [vmem:[%s791 + $0x30] sm:$0xf]
        %v814 = vld [vmem:[%s791 + $0x34] sm:$0xf]
        %v815 = vld [vmem:[%s791 + $0x38] sm:$0xf]
        %v816 = vld [vmem:[%s791 + $0x3c] sm:$0xf]
        %v817 = vld [vmem:[#allocation7] sm:$0xf]
        %v818 = vld [vmem:[#allocation7 + $0x4] sm:$0xf]
        %v819 = vld [vmem:[#allocation7 + $0x8] sm:$0xf]
        %v820 = vld [vmem:[#allocation7 + $0xc] sm:$0xf]
        %v821 = vld [vmem:[#allocation7 + $0x10] sm:$0xf]
        %v822 = vld [vmem:[#allocation7 + $0x14] sm:$0xf]
        %v823 = vld [vmem:[#allocation7 + $0x18] sm:$0xf]
        %v824 = vld [vmem:[#allocation7 + $0x1c] sm:$0xf]
        %v841 = vunpack.c.l.b16 %v801
        %v842 = vunpack.c.l.b16 %v802
        %v843 = vunpack.c.l.b16 %v803
        %v844 = vunpack.c.l.b16 %v804
        %v845 = vunpack.c.l.b16 %v805
        %v846 = vunpack.c.l.b16 %v806
        %v847 = vunpack.c.l.b16 %v807
        %v848 = vunpack.c.l.b16 %v808
        %v849 = vunpack.c.l.b16 %v809
        %v850 = vunpack.c.l.b16 %v810
        %v851 = vunpack.c.l.b16 %v811
        %v852 = vunpack.c.l.b16 %v812
        %v853 = vunpack.c.l.b16 %v813
        %v854 = vunpack.c.l.b16 %v814
        %v855 = vunpack.c.l.b16 %v815
        %v856 = vunpack.c.l.b16 %v816
        %v857 = vpack.c.b16 %v842, %v841
        %v858 = vpack.c.b16 %v844, %v843
        %v859 = vpack.c.b16 %v846, %v845
        %v860 = vpack.c.b16 %v848, %v847
        %v861 = vpack.c.b16 %v850, %v849
        %v862 = vpack.c.b16 %v852, %v851
        %v863 = vpack.c.b16 %v854, %v853
        %v864 = vpack.c.b16 %v856, %v855
        %v873 = vunpack.c.l.b16 %v817
        %v874 = vunpack.c.l.b16 %v818
        %v875 = vunpack.c.l.b16 %v819
        %v876 = vunpack.c.l.b16 %v820
        %v877 = vunpack.c.l.b16 %v821
        %v878 = vunpack.c.l.b16 %v822
        %v879 = vunpack.c.l.b16 %v823
        %v880 = vunpack.c.l.b16 %v824
        %v881 = vpack.c.b16 %v874, %v873
        %v882 = vpack.c.b16 %v876, %v875
        %v883 = vpack.c.b16 %v878, %v877
        %v884 = vpack.c.b16 %v880, %v879
        %vm889 = vcmask 523264
        %v891 = vsel %vm889, %v857, 0
        %v894 = vsel %vm889, %v858, 0
        %v897 = vsel %vm889, %v859, 0
        %v900 = vsel %vm889, %v860, 0
        %v903 = vsel %vm889, %v861, 0
        %v906 = vsel %vm889, %v862, 0
        %v909 = vsel %vm889, %v863, 0
        %v912 = vsel %vm889, %v864, 0
        %914 = vmatprep.subr.bf16.mxu0 0
        %915 = vmatpush1.bf16.msra.mxu0 %v881
        %916 = vmatprep.subr.bf16.mxu0 0
        %917 = vmatpush1.bf16.msra.mxu0 %v882
        %918 = vmatprep.subr.bf16.mxu0 0
        %919 = vmatpush1.bf16.msra.mxu0 %v883
        %920 = vmatprep.subr.bf16.mxu0 0
        %921 = vmatpush1.bf16.msra.mxu0 %v884
        %922 = vmatprep.subr.bf16.mxu0 0
        %923 = vmatpush1.bf16.msra.mxu0 0
        %924 = vmatprep.subr.bf16.mxu0 0
        %925 = vmatpush1.bf16.msra.mxu0 0
        %926 = vmatprep.subr.bf16.mxu0 0
        %927 = vmatpush1.bf16.msra.mxu0 0
        %928 = vmatprep.subr.bf16.mxu0 0
        %929 = vmatpush1.bf16.msra.mxu0 0
        %930 = vmatprep.subr.bf16.mxu0 0
        %931 = vmatpush1.bf16.msra.mxu0 0
        %932 = vmatprep.subr.bf16.mxu0 0
        %933 = vmatpush1.bf16.msra.mxu0 0
        %934 = vmatprep.subr.bf16.mxu0 0
        %935 = vmatpush1.bf16.msra.mxu0 0
        %936 = vmatprep.subr.bf16.mxu0 0
        %937 = vmatpush1.bf16.msra.mxu0 0
        %938 = vmatprep.subr.bf16.mxu0 0
        %939 = vmatpush1.bf16.msra.mxu0 0
        %940 = vmatprep.subr.bf16.mxu0 0
        %941 = vmatpush1.bf16.msra.mxu0 0
        %942 = vmatprep.subr.bf16.mxu0 0
        %943 = vmatpush1.bf16.msra.mxu0 0
        %944 = vmatprep.subr.bf16.mxu0 0
        %945 = vmatpush1.bf16.msra.mxu0 0
        %946 = vmatprep.mubr.bf16.mxu0 0
        %947 = vmatmul.mubr.bf16.gmra.mrb[0].mxu0 %v891
        %v948 = vpop.f32.mrb[0].mxu0
        %v949 = vadd.f32 0.0, %v948
        %v950 = vpop.f32.mrb[0].mxu0
        %v951 = vpop.f32.mrb[0].mxu0
        %v952 = vadd.f32 0.0, %v951
        %v953 = vpop.f32.mrb[0].mxu0
        %954 = vmatprep.mubr.bf16.mxu0 0
        %955 = vmatmul.mubr.bf16.gmra.mrb[0].mxu0 %v894
        %v956 = vpop.f32.mrb[0].mxu0
        %v957 = vadd.f32 0.0, %v956
        %v958 = vpop.f32.mrb[0].mxu0
        %v959 = vpop.f32.mrb[0].mxu0
        %v960 = vadd.f32 0.0, %v959
        %v961 = vpop.f32.mrb[0].mxu0
        %962 = vmatprep.mubr.bf16.mxu0 0
        %963 = vmatmul.mubr.bf16.gmra.mrb[0].mxu0 %v897
        %v964 = vpop.f32.mrb[0].mxu0
        %v965 = vadd.f32 0.0, %v964
        %v966 = vpop.f32.mrb[0].mxu0
        %v967 = vpop.f32.mrb[0].mxu0
        %v968 = vadd.f32 0.0, %v967
        %v969 = vpop.f32.mrb[0].mxu0
        %970 = vmatprep.mubr.bf16.mxu0 0
        %971 = vmatmul.mubr.bf16.gmra.mrb[0].mxu0 %v900
        %v972 = vpop.f32.mrb[0].mxu0
        %v973 = vadd.f32 0.0, %v972
        %v974 = vpop.f32.mrb[0].mxu0
        %v975 = vpop.f32.mrb[0].mxu0
        %v976 = vadd.f32 0.0, %v975
        %v977 = vpop.f32.mrb[0].mxu0
        %978 = vmatprep.mubr.bf16.mxu0 0
        %979 = vmatmul.mubr.bf16.gmra.mrb[0].mxu0 %v903
        %v980 = vpop.f32.mrb[0].mxu0
        %v981 = vadd.f32 0.0, %v980
        %v982 = vpop.f32.mrb[0].mxu0
        %v983 = vpop.f32.mrb[0].mxu0
        %v984 = vadd.f32 0.0, %v983
        %v985 = vpop.f32.mrb[0].mxu0
        %986 = vmatprep.mubr.bf16.mxu0 0
        %987 = vmatmul.mubr.bf16.gmra.mrb[0].mxu0 %v906
        %v988 = vpop.f32.mrb[0].mxu0
        %v989 = vadd.f32 0.0, %v988
        %v990 = vpop.f32.mrb[0].mxu0
        %v991 = vpop.f32.mrb[0].mxu0
        %v992 = vadd.f32 0.0, %v991
        %v993 = vpop.f32.mrb[0].mxu0
        %994 = vmatprep.mubr.bf16.mxu0 0
        %995 = vmatmul.mubr.bf16.gmra.mrb[0].mxu0 %v909
        %v996 = vpop.f32.mrb[0].mxu0
        %v997 = vadd.f32 0.0, %v996
        %v998 = vpop.f32.mrb[0].mxu0
        %v999 = vpop.f32.mrb[0].mxu0
        %v1000 = vadd.f32 0.0, %v999
        %v1001 = vpop.f32.mrb[0].mxu0
        %1002 = vmatprep.mubr.bf16.mxu0 0
        %1003 = vmatmul.mubr.bf16.gmra.mrb[0].mxu0 %v912
        %v1004 = vpop.f32.mrb[0].mxu0
        %v1005 = vadd.f32 0.0, %v1004
        %v1006 = vpop.f32.mrb[0].mxu0
        %v1007 = vpop.f32.mrb[0].mxu0
        %v1008 = vadd.f32 0.0, %v1007
        %v1009 = vpop.f32.mrb[0].mxu0
        %1010 = vdwg.mxu0
        %v1011 = vpack.c.bf16 %v952, %v949
        %v1012 = vpack.c.bf16 %v960, %v957
        %v1013 = vpack.c.bf16 %v968, %v965
        %v1014 = vpack.c.bf16 %v976, %v973
        %v1015 = vpack.c.bf16 %v984, %v981
        %v1016 = vpack.c.bf16 %v992, %v989
        %v1017 = vpack.c.bf16 %v1000, %v997
        %v1018 = vpack.c.bf16 %v1008, %v1005
        %v1019 = vld [vmem:[#allocation8] sm:$0xf]
        %v1020 = vld [vmem:[#allocation8 + $0x4] sm:$0xf]
        %v1021 = vld [vmem:[#allocation8 + $0x8] sm:$0xf]
        %v1022 = vld [vmem:[#allocation8 + $0xc] sm:$0xf]
        %v1023 = vld [vmem:[#allocation8 + $0x10] sm:$0xf]
        %v1024 = vld [vmem:[#allocation8 + $0x14] sm:$0xf]
        %v1025 = vld [vmem:[#allocation8 + $0x18] sm:$0xf]
        %v1026 = vld [vmem:[#allocation8 + $0x1c] sm:$0xf]
        %v1035 = vunpack.c.l.b16 %v1019
        %v1036 = vunpack.c.l.b16 %v1020
        %v1037 = vunpack.c.l.b16 %v1021
        %v1038 = vunpack.c.l.b16 %v1022
        %v1039 = vunpack.c.l.b16 %v1023
        %v1040 = vunpack.c.l.b16 %v1024
        %v1041 = vunpack.c.l.b16 %v1025
        %v1042 = vunpack.c.l.b16 %v1026
        %v1043 = vpack.c.b16 %v1036, %v1035
        %v1044 = vpack.c.b16 %v1038, %v1037
        %v1045 = vpack.c.b16 %v1040, %v1039
        %v1046 = vpack.c.b16 %v1042, %v1041
        %1051 = vmatprep.subr.bf16.mxu0 0
        %1052 = vmatpush1.bf16.msra.mxu0 %v1043
        %1053 = vmatprep.subr.bf16.mxu0 0
        %1054 = vmatpush1.bf16.msra.mxu0 %v1044
        %1055 = vmatprep.subr.bf16.mxu0 0
        %1056 = vmatpush1.bf16.msra.mxu0 %v1045
        %1057 = vmatprep.subr.bf16.mxu0 0
        %1058 = vmatpush1.bf16.msra.mxu0 %v1046
        %1059 = vmatprep.subr.bf16.mxu0 0
        %1060 = vmatpush1.bf16.msra.mxu0 0
        %1061 = vmatprep.subr.bf16.mxu0 0
        %1062 = vmatpush1.bf16.msra.mxu0 0
        %1063 = vmatprep.subr.bf16.mxu0 0
        %1064 = vmatpush1.bf16.msra.mxu0 0
        %1065 = vmatprep.subr.bf16.mxu0 0
        %1066 = vmatpush1.bf16.msra.mxu0 0
        %1067 = vmatprep.subr.bf16.mxu0 0
        %1068 = vmatpush1.bf16.msra.mxu0 0
        %1069 = vmatprep.subr.bf16.mxu0 0
        %1070 = vmatpush1.bf16.msra.mxu0 0
        %1071 = vmatprep.subr.bf16.mxu0 0
        %1072 = vmatpush1.bf16.msra.mxu0 0
        %1073 = vmatprep.subr.bf16.mxu0 0
        %1074 = vmatpush1.bf16.msra.mxu0 0
        %1075 = vmatprep.subr.bf16.mxu0 0
        %1076 = vmatpush1.bf16.msra.mxu0 0
        %1077 = vmatprep.subr.bf16.mxu0 0
        %1078 = vmatpush1.bf16.msra.mxu0 0
        %1079 = vmatprep.subr.bf16.mxu0 0
        %1080 = vmatpush1.bf16.msra.mxu0 0
        %1081 = vmatprep.subr.bf16.mxu0 0
        %1082 = vmatpush1.bf16.msra.mxu0 0
        %1083 = vmatprep.mubr.bf16.mxu0 0
        %1084 = vmatmul.mubr.bf16.gmra.mrb[0].mxu0 %v891
        %v1085 = vpop.f32.mrb[0].mxu0
        %v1086 = vadd.f32 0.0, %v1085
        %v1087 = vpop.f32.mrb[0].mxu0
        %v1088 = vpop.f32.mrb[0].mxu0
        %v1089 = vadd.f32 0.0, %v1088
        %v1090 = vpop.f32.mrb[0].mxu0
        %1091 = vmatprep.mubr.bf16.mxu0 0
        %1092 = vmatmul.mubr.bf16.gmra.mrb[0].mxu0 %v894
        %v1093 = vpop.f32.mrb[0].mxu0
        %v1094 = vadd.f32 0.0, %v1093
        %v1095 = vpop.f32.mrb[0].mxu0
        %v1096 = vpop.f32.mrb[0].mxu0
        %v1097 = vadd.f32 0.0, %v1096
        %v1098 = vpop.f32.mrb[0].mxu0
        %1099 = vmatprep.mubr.bf16.mxu0 0
        %1100 = vmatmul.mubr.bf16.gmra.mrb[0].mxu0 %v897
        %v1101 = vpop.f32.mrb[0].mxu0
        %v1102 = vadd.f32 0.0, %v1101
        %v1103 = vpop.f32.mrb[0].mxu0
        %v1104 = vpop.f32.mrb[0].mxu0
        %v1105 = vadd.f32 0.0, %v1104
        %v1106 = vpop.f32.mrb[0].mxu0
        %1107 = vmatprep.mubr.bf16.mxu0 0
        %1108 = vmatmul.mubr.bf16.gmra.mrb[0].mxu0 %v900
        %v1109 = vpop.f32.mrb[0].mxu0
        %v1110 = vadd.f32 0.0, %v1109
        %v1111 = vpop.f32.mrb[0].mxu0
        %v1112 = vpop.f32.mrb[0].mxu0
        %v1113 = vadd.f32 0.0, %v1112
        %v1114 = vpop.f32.mrb[0].mxu0
        %1115 = vmatprep.mubr.bf16.mxu0 0
        %1116 = vmatmul.mubr.bf16.gmra.mrb[0].mxu0 %v903
        %v1117 = vpop.f32.mrb[0].mxu0
        %v1118 = vadd.f32 0.0, %v1117
        %v1119 = vpop.f32.mrb[0].mxu0
        %v1120 = vpop.f32.mrb[0].mxu0
        %v1121 = vadd.f32 0.0, %v1120
        %v1122 = vpop.f32.mrb[0].mxu0
        %1123 = vmatprep.mubr.bf16.mxu0 0
        %1124 = vmatmul.mubr.bf16.gmra.mrb[0].mxu0 %v906
        %v1125 = vpop.f32.mrb[0].mxu0
        %v1126 = vadd.f32 0.0, %v1125
        %v1127 = vpop.f32.mrb[0].mxu0
        %v1128 = vpop.f32.mrb[0].mxu0
        %v1129 = vadd.f32 0.0, %v1128
        %v1130 = vpop.f32.mrb[0].mxu0
        %1131 = vmatprep.mubr.bf16.mxu0 0
        %1132 = vmatmul.mubr.bf16.gmra.mrb[0].mxu0 %v909
        %v1133 = vpop.f32.mrb[0].mxu0
        %v1134 = vadd.f32 0.0, %v1133
        %v1135 = vpop.f32.mrb[0].mxu0
        %v1136 = vpop.f32.mrb[0].mxu0
        %v1137 = vadd.f32 0.0, %v1136
        %v1138 = vpop.f32.mrb[0].mxu0
        %1139 = vmatprep.mubr.bf16.mxu0 0
        %1140 = vmatmul.mubr.bf16.gmra.mrb[0].mxu0 %v912
        %v1141 = vpop.f32.mrb[0].mxu0
        %v1142 = vadd.f32 0.0, %v1141
        %v1143 = vpop.f32.mrb[0].mxu0
        %v1144 = vpop.f32.mrb[0].mxu0
        %v1145 = vadd.f32 0.0, %v1144
        %v1146 = vpop.f32.mrb[0].mxu0
        %1147 = vdwg.mxu0
        %v1148 = vpack.c.bf16 %v1089, %v1086
        %v1149 = vpack.c.bf16 %v1097, %v1094
        %v1150 = vpack.c.bf16 %v1105, %v1102
        %v1151 = vpack.c.bf16 %v1113, %v1110
        %v1152 = vpack.c.bf16 %v1121, %v1118
        %v1153 = vpack.c.bf16 %v1129, %v1126
        %v1154 = vpack.c.bf16 %v1137, %v1134
        %v1155 = vpack.c.bf16 %v1145, %v1142
        %v1164 = vunpack.c.l.b16 %v1011
        %v1165 = vunpack.c.h.b16 %v1011
        %v1166 = vunpack.c.l.b16 %v1012
        %v1167 = vunpack.c.h.b16 %v1012
        %v1168 = vunpack.c.l.b16 %v1013
        %v1169 = vunpack.c.h.b16 %v1013
        %v1170 = vunpack.c.l.b16 %v1014
        %v1171 = vunpack.c.h.b16 %v1014
        %v1172 = vunpack.c.l.b16 %v1015
        %v1173 = vunpack.c.h.b16 %v1015
        %v1174 = vunpack.c.l.b16 %v1016
        %v1175 = vunpack.c.h.b16 %v1016
        %v1176 = vunpack.c.l.b16 %v1017
        %v1177 = vunpack.c.h.b16 %v1017
        %v1178 = vunpack.c.l.b16 %v1018
        %v1179 = vunpack.c.h.b16 %v1018
        %v1180 = vpack.c.b16 %v1164, %v1164
        %v1181 = vpack.c.b16 %v1165, %v1165
        %v1182 = vpack.c.b16 %v1166, %v1166
        %v1183 = vpack.c.b16 %v1167, %v1167
        %v1184 = vpack.c.b16 %v1168, %v1168
        %v1185 = vpack.c.b16 %v1169, %v1169
        %v1186 = vpack.c.b16 %v1170, %v1170
        %v1187 = vpack.c.b16 %v1171, %v1171
        %v1188 = vpack.c.b16 %v1172, %v1172
        %v1189 = vpack.c.b16 %v1173, %v1173
        %v1190 = vpack.c.b16 %v1174, %v1174
        %v1191 = vpack.c.b16 %v1175, %v1175
        %v1192 = vpack.c.b16 %v1176, %v1176
        %v1193 = vpack.c.b16 %v1177, %v1177
        %v1194 = vpack.c.b16 %v1178, %v1178
        %v1195 = vpack.c.b16 %v1179, %v1179
        %v1220 = vunpack.c.l.b16 %v1148
        %v1221 = vunpack.c.h.b16 %v1148
        %v1222 = vunpack.c.l.b16 %v1149
        %v1223 = vunpack.c.h.b16 %v1149
        %v1224 = vunpack.c.l.b16 %v1150
        %v1225 = vunpack.c.h.b16 %v1150
        %v1226 = vunpack.c.l.b16 %v1151
        %v1227 = vunpack.c.h.b16 %v1151
        %v1228 = vunpack.c.l.b16 %v1152
        %v1229 = vunpack.c.h.b16 %v1152
        %v1230 = vunpack.c.l.b16 %v1153
        %v1231 = vunpack.c.h.b16 %v1153
        %v1232 = vunpack.c.l.b16 %v1154
        %v1233 = vunpack.c.h.b16 %v1154
        %v1234 = vunpack.c.l.b16 %v1155
        %v1235 = vunpack.c.h.b16 %v1155
        %v1236 = vpack.c.b16 %v1220, %v1220
        %v1237 = vpack.c.b16 %v1221, %v1221
        %v1238 = vpack.c.b16 %v1222, %v1222
        %v1239 = vpack.c.b16 %v1223, %v1223
        %v1240 = vpack.c.b16 %v1224, %v1224
        %v1241 = vpack.c.b16 %v1225, %v1225
        %v1242 = vpack.c.b16 %v1226, %v1226
        %v1243 = vpack.c.b16 %v1227, %v1227
        %v1244 = vpack.c.b16 %v1228, %v1228
        %v1245 = vpack.c.b16 %v1229, %v1229
        %v1246 = vpack.c.b16 %v1230, %v1230
        %v1247 = vpack.c.b16 %v1231, %v1231
        %v1248 = vpack.c.b16 %v1232, %v1232
        %v1249 = vpack.c.b16 %v1233, %v1233
        %v1250 = vpack.c.b16 %v1234, %v1234
        %v1251 = vpack.c.b16 %v1235, %v1235
        %v1252 = vld [vmem:[#allocation2] sm:$0xf]
        %v1253 = vld [vmem:[%s3] sm:$0xff]
        %1255 = vset.pattern.permute.xlu0 0
        %1256 = vperm.xlu0 %1255, %v1253
        %v1257 = vpop.permute.xlu0 %1256
        %1259 = vmatprep.subr.bf16.mxu0 0
        %1260 = vmatpush1.bf16.xpose.msra.mxu0 %v1180
        %1261 = vmatprep.subr.bf16.mxu0 0
        %1262 = vmatpush1.bf16.xpose.msra.mxu0 0
        %1263 = vmatprep.subr.bf16.mxu0 0
        %1264 = vmatpush1.bf16.xpose.msra.mxu0 0
        %1265 = vmatprep.subr.bf16.mxu0 0
        %1266 = vmatpush1.bf16.xpose.msra.mxu0 0
        %1267 = vmatprep.subr.bf16.mxu0 0
        %1268 = vmatpush1.bf16.xpose.msra.mxu0 0
        %1269 = vmatprep.subr.bf16.mxu0 0
        %1270 = vmatpush1.bf16.xpose.msra.mxu0 0
        %1271 = vmatprep.subr.bf16.mxu0 0
        %1272 = vmatpush1.bf16.xpose.msra.mxu0 0
        %1273 = vmatprep.subr.bf16.mxu0 0
        %1274 = vmatpush1.bf16.xpose.msra.mxu0 0
        %1275 = vmatprep.subr.bf16.mxu0 0
        %1276 = vmatpush1.bf16.xpose.msra.mxu0 0
        %1277 = vmatprep.subr.bf16.mxu0 0
        %1278 = vmatpush1.bf16.xpose.msra.mxu0 0
        %1279 = vmatprep.subr.bf16.mxu0 0
        %1280 = vmatpush1.bf16.xpose.msra.mxu0 0
        %1281 = vmatprep.subr.bf16.mxu0 0
        %1282 = vmatpush1.bf16.xpose.msra.mxu0 0
        %1283 = vmatprep.subr.bf16.mxu0 0
        %1284 = vmatpush1.bf16.xpose.msra.mxu0 0
        %1285 = vmatprep.subr.bf16.mxu0 0
        %1286 = vmatpush1.bf16.xpose.msra.mxu0 0
        %1287 = vmatprep.subr.bf16.mxu0 0
        %1288 = vmatpush1.bf16.xpose.msra.mxu0 0
        %1289 = vmatprep.subr.bf16.mxu0 0
        %1290 = vmatpush1.bf16.xpose.msra.mxu0 0
        %1291 = vmatprep.mubr.bf16.mxu0 0
        %1292 = vmatmul.mubr.bf16.gmra.mrb[0].mxu0 %v1252
        %v1293 = vpop.f32.mrb[0].mxu0
        %v1294 = vadd.f32 %v1257, %v1293
        %v1295 = vpop.f32.mrb[0].mxu0
        %v1296 = vpop.f32.mrb[0].mxu0
        %v1297 = vpop.f32.mrb[0].mxu0
        %1298 = vdwg.mxu0
        %1299 = vmatprep.subr.bf16.mxu0 0
        %1300 = vmatpush1.bf16.xpose.msra.mxu0 %v1181
        %1301 = vmatprep.subr.bf16.mxu0 0
        %1302 = vmatpush1.bf16.xpose.msra.mxu0 0
        %1303 = vmatprep.subr.bf16.mxu0 0
        %1304 = vmatpush1.bf16.xpose.msra.mxu0 0
        %1305 = vmatprep.subr.bf16.mxu0 0
        %1306 = vmatpush1.bf16.xpose.msra.mxu0 0
        %1307 = vmatprep.subr.bf16.mxu0 0
        %1308 = vmatpush1.bf16.xpose.msra.mxu0 0
        %1309 = vmatprep.subr.bf16.mxu0 0
        %1310 = vmatpush1.bf16.xpose.msra.mxu0 0
        %1311 = vmatprep.subr.bf16.mxu0 0
        %1312 = vmatpush1.bf16.xpose.msra.mxu0 0
        %1313 = vmatprep.subr.bf16.mxu0 0
        %1314 = vmatpush1.bf16.xpose.msra.mxu0 0
        %1315 = vmatprep.subr.bf16.mxu0 0
        %1316 = vmatpush1.bf16.xpose.msra.mxu0 0
        %1317 = vmatprep.subr.bf16.mxu0 0
        %1318 = vmatpush1.bf16.xpose.msra.mxu0 0
        %1319 = vmatprep.subr.bf16.mxu0 0
        %1320 = vmatpush1.bf16.xpose.msra.mxu0 0
        %1321 = vmatprep.subr.bf16.mxu0 0
        %1322 = vmatpush1.bf16.xpose.msra.mxu0 0
        %1323 = vmatprep.subr.bf16.mxu0 0
        %1324 = vmatpush1.bf16.xpose.msra.mxu0 0
        %1325 = vmatprep.subr.bf16.mxu0 0
        %1326 = vmatpush1.bf16.xpose.msra.mxu0 0
        %1327 = vmatprep.subr.bf16.mxu0 0
        %1328 = vmatpush1.bf16.xpose.msra.mxu0 0
        %1329 = vmatprep.subr.bf16.mxu0 0
        %1330 = vmatpush1.bf16.xpose.msra.mxu0 0
        %1331 = vmatprep.mubr.bf16.mxu0 0
        %1332 = vmatmul.mubr.bf16.gmra.mrb[0].mxu0 %v1252
        %v1333 = vpop.f32.mrb[0].mxu0
        %v1334 = vadd.f32 %v1257, %v1333
        %v1335 = vpop.f32.mrb[0].mxu0
        %v1336 = vpop.f32.mrb[0].mxu0
        %v1337 = vpop.f32.mrb[0].mxu0
        %1338 = vdwg.mxu0
        %1339 = vmatprep.subr.bf16.mxu0 0
        %1340 = vmatpush1.bf16.xpose.msra.mxu0 %v1182
        %1341 = vmatprep.subr.bf16.mxu0 0
        %1342 = vmatpush1.bf16.xpose.msra.mxu0 0
        %1343 = vmatprep.subr.bf16.mxu0 0
        %1344 = vmatpush1.bf16.xpose.msra.mxu0 0
        %1345 = vmatprep.subr.bf16.mxu0 0
        %1346 = vmatpush1.bf16.xpose.msra.mxu0 0
        %1347 = vmatprep.subr.bf16.mxu0 0
        %1348 = vmatpush1.bf16.xpose.msra.mxu0 0
        %1349 = vmatprep.subr.bf16.mxu0 0
        %1350 = vmatpush1.bf16.xpose.msra.mxu0 0
        %1351 = vmatprep.subr.bf16.mxu0 0
        %1352 = vmatpush1.bf16.xpose.msra.mxu0 0
        %1353 = vmatprep.subr.bf16.mxu0 0
        %1354 = vmatpush1.bf16.xpose.msra.mxu0 0
        %1355 = vmatprep.subr.bf16.mxu0 0
        %1356 = vmatpush1.bf16.xpose.msra.mxu0 0
        %1357 = vmatprep.subr.bf16.mxu0 0
        %1358 = vmatpush1.bf16.xpose.msra.mxu0 0
        %1359 = vmatprep.subr.bf16.mxu0 0
        %1360 = vmatpush1.bf16.xpose.msra.mxu0 0
        %1361 = vmatprep.subr.bf16.mxu0 0
        %1362 = vmatpush1.bf16.xpose.msra.mxu0 0
        %1363 = vmatprep.subr.bf16.mxu0 0
        %1364 = vmatpush1.bf16.xpose.msra.mxu0 0
        %1365 = vmatprep.subr.bf16.mxu0 0
        %1366 = vmatpush1.bf16.xpose.msra.mxu0 0
        %1367 = vmatprep.subr.bf16.mxu0 0
        %1368 = vmatpush1.bf16.xpose.msra.mxu0 0
        %1369 = vmatprep.subr.bf16.mxu0 0
        %1370 = vmatpush1.bf16.xpose.msra.mxu0 0
        %1371 = vmatprep.mubr.bf16.mxu0 0
        %1372 = vmatmul.mubr.bf16.gmra.mrb[0].mxu0 %v1252
        %v1373 = vpop.f32.mrb[0].mxu0
        %v1374 = vadd.f32 %v1257, %v1373
        %v1375 = vpop.f32.mrb[0].mxu0
        %v1376 = vpop.f32.mrb[0].mxu0
        %v1377 = vpop.f32.mrb[0].mxu0
        %1378 = vdwg.mxu0
        %1379 = vmatprep.subr.bf16.mxu0 0
        %1380 = vmatpush1.bf16.xpose.msra.mxu0 %v1183
        %1381 = vmatprep.subr.bf16.mxu0 0
        %1382 = vmatpush1.bf16.xpose.msra.mxu0 0
        %1383 = vmatprep.subr.bf16.mxu0 0
        %1384 = vmatpush1.bf16.xpose.msra.mxu0 0
        %1385 = vmatprep.subr.bf16.mxu0 0
        %1386 = vmatpush1.bf16.xpose.msra.mxu0 0
        %1387 = vmatprep.subr.bf16.mxu0 0
        %1388 = vmatpush1.bf16.xpose.msra.mxu0 0
        %1389 = vmatprep.subr.bf16.mxu0 0
        %1390 = vmatpush1.bf16.xpose.msra.mxu0 0
        %1391 = vmatprep.subr.bf16.mxu0 0
        %1392 = vmatpush1.bf16.xpose.msra.mxu0 0
        %1393 = vmatprep.subr.bf16.mxu0 0
        %1394 = vmatpush1.bf16.xpose.msra.mxu0 0
        %1395 = vmatprep.subr.bf16.mxu0 0
        %1396 = vmatpush1.bf16.xpose.msra.mxu0 0
        %1397 = vmatprep.subr.bf16.mxu0 0
        %1398 = vmatpush1.bf16.xpose.msra.mxu0 0
        %1399 = vmatprep.subr.bf16.mxu0 0
        %1400 = vmatpush1.bf16.xpose.msra.mxu0 0
        %1401 = vmatprep.subr.bf16.mxu0 0
        %1402 = vmatpush1.bf16.xpose.msra.mxu0 0
        %1403 = vmatprep.subr.bf16.mxu0 0
        %1404 = vmatpush1.bf16.xpose.msra.mxu0 0
        %1405 = vmatprep.subr.bf16.mxu0 0
        %1406 = vmatpush1.bf16.xpose.msra.mxu0 0
        %1407 = vmatprep.subr.bf16.mxu0 0
        %1408 = vmatpush1.bf16.xpose.msra.mxu0 0
        %1409 = vmatprep.subr.bf16.mxu0 0
        %1410 = vmatpush1.bf16.xpose.msra.mxu0 0
        %1411 = vmatprep.mubr.bf16.mxu0 0
        %1412 = vmatmul.mubr.bf16.gmra.mrb[0].mxu0 %v1252
        %v1413 = vpop.f32.mrb[0].mxu0
        %v1414 = vadd.f32 %v1257, %v1413
        %v1415 = vpop.f32.mrb[0].mxu0
        %v1416 = vpop.f32.mrb[0].mxu0
        %v1417 = vpop.f32.mrb[0].mxu0
        %1418 = vdwg.mxu0
        %1419 = vmatprep.subr.bf16.mxu0 0
        %1420 = vmatpush1.bf16.xpose.msra.mxu0 %v1184
        %1421 = vmatprep.subr.bf16.mxu0 0
        %1422 = vmatpush1.bf16.xpose.msra.mxu0 0
        %1423 = vmatprep.subr.bf16.mxu0 0
        %1424 = vmatpush1.bf16.xpose.msra.mxu0 0
        %1425 = vmatprep.subr.bf16.mxu0 0
        %1426 = vmatpush1.bf16.xpose.msra.mxu0 0
        %1427 = vmatprep.subr.bf16.mxu0 0
        %1428 = vmatpush1.bf16.xpose.msra.mxu0 0
        %1429 = vmatprep.subr.bf16.mxu0 0
        %1430 = vmatpush1.bf16.xpose.msra.mxu0 0
        %1431 = vmatprep.subr.bf16.mxu0 0
        %1432 = vmatpush1.bf16.xpose.msra.mxu0 0
        %1433 = vmatprep.subr.bf16.mxu0 0
        %1434 = vmatpush1.bf16.xpose.msra.mxu0 0
        %1435 = vmatprep.subr.bf16.mxu0 0
        %1436 = vmatpush1.bf16.xpose.msra.mxu0 0
        %1437 = vmatprep.subr.bf16.mxu0 0
        %1438 = vmatpush1.bf16.xpose.msra.mxu0 0
        %1439 = vmatprep.subr.bf16.mxu0 0
        %1440 = vmatpush1.bf16.xpose.msra.mxu0 0
        %1441 = vmatprep.subr.bf16.mxu0 0
        %1442 = vmatpush1.bf16.xpose.msra.mxu0 0
        %1443 = vmatprep.subr.bf16.mxu0 0
        %1444 = vmatpush1.bf16.xpose.msra.mxu0 0
        %1445 = vmatprep.subr.bf16.mxu0 0
        %1446 = vmatpush1.bf16.xpose.msra.mxu0 0
        %1447 = vmatprep.subr.bf16.mxu0 0
        %1448 = vmatpush1.bf16.xpose.msra.mxu0 0
        %1449 = vmatprep.subr.bf16.mxu0 0
        %1450 = vmatpush1.bf16.xpose.msra.mxu0 0
        %1451 = vmatprep.mubr.bf16.mxu0 0
        %1452 = vmatmul.mubr.bf16.gmra.mrb[0].mxu0 %v1252
        %v1453 = vpop.f32.mrb[0].mxu0
        %v1454 = vadd.f32 %v1257, %v1453
        %v1455 = vpop.f32.mrb[0].mxu0
        %v1456 = vpop.f32.mrb[0].mxu0
        %v1457 = vpop.f32.mrb[0].mxu0
        %1458 = vdwg.mxu0
        %1459 = vmatprep.subr.bf16.mxu0 0
        %1460 = vmatpush1.bf16.xpose.msra.mxu0 %v1185
        %1461 = vmatprep.subr.bf16.mxu0 0
        %1462 = vmatpush1.bf16.xpose.msra.mxu0 0
        %1463 = vmatprep.subr.bf16.mxu0 0
        %1464 = vmatpush1.bf16.xpose.msra.mxu0 0
        %1465 = vmatprep.subr.bf16.mxu0 0
        %1466 = vmatpush1.bf16.xpose.msra.mxu0 0
        %1467 = vmatprep.subr.bf16.mxu0 0
        %1468 = vmatpush1.bf16.xpose.msra.mxu0 0
        %1469 = vmatprep.subr.bf16.mxu0 0
        %1470 = vmatpush1.bf16.xpose.msra.mxu0 0
        %1471 = vmatprep.subr.bf16.mxu0 0
        %1472 = vmatpush1.bf16.xpose.msra.mxu0 0
        %1473 = vmatprep.subr.bf16.mxu0 0
        %1474 = vmatpush1.bf16.xpose.msra.mxu0 0
        %1475 = vmatprep.subr.bf16.mxu0 0
        %1476 = vmatpush1.bf16.xpose.msra.mxu0 0
        %1477 = vmatprep.subr.bf16.mxu0 0
        %1478 = vmatpush1.bf16.xpose.msra.mxu0 0
        %1479 = vmatprep.subr.bf16.mxu0 0
        %1480 = vmatpush1.bf16.xpose.msra.mxu0 0
        %1481 = vmatprep.subr.bf16.mxu0 0
        %1482 = vmatpush1.bf16.xpose.msra.mxu0 0
        %1483 = vmatprep.subr.bf16.mxu0 0
        %1484 = vmatpush1.bf16.xpose.msra.mxu0 0
        %1485 = vmatprep.subr.bf16.mxu0 0
        %1486 = vmatpush1.bf16.xpose.msra.mxu0 0
        %1487 = vmatprep.subr.bf16.mxu0 0
        %1488 = vmatpush1.bf16.xpose.msra.mxu0 0
        %1489 = vmatprep.subr.bf16.mxu0 0
        %1490 = vmatpush1.bf16.xpose.msra.mxu0 0
        %1491 = vmatprep.mubr.bf16.mxu0 0
        %1492 = vmatmul.mubr.bf16.gmra.mrb[0].mxu0 %v1252
        %v1493 = vpop.f32.mrb[0].mxu0
        %v1494 = vadd.f32 %v1257, %v1493
        %v1495 = vpop.f32.mrb[0].mxu0
        %v1496 = vpop.f32.mrb[0].mxu0
        %v1497 = vpop.f32.mrb[0].mxu0
        %1498 = vdwg.mxu0
        %1499 = vmatprep.subr.bf16.mxu0 0
        %1500 = vmatpush1.bf16.xpose.msra.mxu0 %v1186
        %1501 = vmatprep.subr.bf16.mxu0 0
        %1502 = vmatpush1.bf16.xpose.msra.mxu0 0
        %1503 = vmatprep.subr.bf16.mxu0 0
        %1504 = vmatpush1.bf16.xpose.msra.mxu0 0
        %1505 = vmatprep.subr.bf16.mxu0 0
        %1506 = vmatpush1.bf16.xpose.msra.mxu0 0
        %1507 = vmatprep.subr.bf16.mxu0 0
        %1508 = vmatpush1.bf16.xpose.msra.mxu0 0
        %1509 = vmatprep.subr.bf16.mxu0 0
        %1510 = vmatpush1.bf16.xpose.msra.mxu0 0
        %1511 = vmatprep.subr.bf16.mxu0 0
        %1512 = vmatpush1.bf16.xpose.msra.mxu0 0
        %1513 = vmatprep.subr.bf16.mxu0 0
        %1514 = vmatpush1.bf16.xpose.msra.mxu0 0
        %1515 = vmatprep.subr.bf16.mxu0 0
        %1516 = vmatpush1.bf16.xpose.msra.mxu0 0
        %1517 = vmatprep.subr.bf16.mxu0 0
        %1518 = vmatpush1.bf16.xpose.msra.mxu0 0
        %1519 = vmatprep.subr.bf16.mxu0 0
        %1520 = vmatpush1.bf16.xpose.msra.mxu0 0
        %1521 = vmatprep.subr.bf16.mxu0 0
        %1522 = vmatpush1.bf16.xpose.msra.mxu0 0
        %1523 = vmatprep.subr.bf16.mxu0 0
        %1524 = vmatpush1.bf16.xpose.msra.mxu0 0
        %1525 = vmatprep.subr.bf16.mxu0 0
        %1526 = vmatpush1.bf16.xpose.msra.mxu0 0
        %1527 = vmatprep.subr.bf16.mxu0 0
        %1528 = vmatpush1.bf16.xpose.msra.mxu0 0
        %1529 = vmatprep.subr.bf16.mxu0 0
        %1530 = vmatpush1.bf16.xpose.msra.mxu0 0
        %1531 = vmatprep.mubr.bf16.mxu0 0
        %1532 = vmatmul.mubr.bf16.gmra.mrb[0].mxu0 %v1252
        %v1533 = vpop.f32.mrb[0].mxu0
        %v1534 = vadd.f32 %v1257, %v1533
        %v1535 = vpop.f32.mrb[0].mxu0
        %v1536 = vpop.f32.mrb[0].mxu0
        %v1537 = vpop.f32.mrb[0].mxu0
        %1538 = vdwg.mxu0
        %1539 = vmatprep.subr.bf16.mxu0 0
        %1540 = vmatpush1.bf16.xpose.msra.mxu0 %v1187
        %1541 = vmatprep.subr.bf16.mxu0 0
        %1542 = vmatpush1.bf16.xpose.msra.mxu0 0
        %1543 = vmatprep.subr.bf16.mxu0 0
        %1544 = vmatpush1.bf16.xpose.msra.mxu0 0
        %1545 = vmatprep.subr.bf16.mxu0 0
        %1546 = vmatpush1.bf16.xpose.msra.mxu0 0
        %1547 = vmatprep.subr.bf16.mxu0 0
        %1548 = vmatpush1.bf16.xpose.msra.mxu0 0
        %1549 = vmatprep.subr.bf16.mxu0 0
        %1550 = vmatpush1.bf16.xpose.msra.mxu0 0
        %1551 = vmatprep.subr.bf16.mxu0 0
        %1552 = vmatpush1.bf16.xpose.msra.mxu0 0
        %1553 = vmatprep.subr.bf16.mxu0 0
        %1554 = vmatpush1.bf16.xpose.msra.mxu0 0
        %1555 = vmatprep.subr.bf16.mxu0 0
        %1556 = vmatpush1.bf16.xpose.msra.mxu0 0
        %1557 = vmatprep.subr.bf16.mxu0 0
        %1558 = vmatpush1.bf16.xpose.msra.mxu0 0
        %1559 = vmatprep.subr.bf16.mxu0 0
        %1560 = vmatpush1.bf16.xpose.msra.mxu0 0
        %1561 = vmatprep.subr.bf16.mxu0 0
        %1562 = vmatpush1.bf16.xpose.msra.mxu0 0
        %1563 = vmatprep.subr.bf16.mxu0 0
        %1564 = vmatpush1.bf16.xpose.msra.mxu0 0
        %1565 = vmatprep.subr.bf16.mxu0 0
        %1566 = vmatpush1.bf16.xpose.msra.mxu0 0
        %1567 = vmatprep.subr.bf16.mxu0 0
        %1568 = vmatpush1.bf16.xpose.msra.mxu0 0
        %1569 = vmatprep.subr.bf16.mxu0 0
        %1570 = vmatpush1.bf16.xpose.msra.mxu0 0
        %1571 = vmatprep.mubr.bf16.mxu0 0
        %1572 = vmatmul.mubr.bf16.gmra.mrb[0].mxu0 %v1252
        %v1573 = vpop.f32.mrb[0].mxu0
        %v1574 = vadd.f32 %v1257, %v1573
        %v1575 = vpop.f32.mrb[0].mxu0
        %v1576 = vpop.f32.mrb[0].mxu0
        %v1577 = vpop.f32.mrb[0].mxu0
        %1578 = vdwg.mxu0
        %1579 = vmatprep.subr.bf16.mxu0 0
        %1580 = vmatpush1.bf16.xpose.msra.mxu0 %v1188
        %1581 = vmatprep.subr.bf16.mxu0 0
        %1582 = vmatpush1.bf16.xpose.msra.mxu0 0
        %1583 = vmatprep.subr.bf16.mxu0 0
        %1584 = vmatpush1.bf16.xpose.msra.mxu0 0
        %1585 = vmatprep.subr.bf16.mxu0 0
        %1586 = vmatpush1.bf16.xpose.msra.mxu0 0
        %1587 = vmatprep.subr.bf16.mxu0 0
        %1588 = vmatpush1.bf16.xpose.msra.mxu0 0
        %1589 = vmatprep.subr.bf16.mxu0 0
        %1590 = vmatpush1.bf16.xpose.msra.mxu0 0
        %1591 = vmatprep.subr.bf16.mxu0 0
        %1592 = vmatpush1.bf16.xpose.msra.mxu0 0
        %1593 = vmatprep.subr.bf16.mxu0 0
        %1594 = vmatpush1.bf16.xpose.msra.mxu0 0
        %1595 = vmatprep.subr.bf16.mxu0 0
        %1596 = vmatpush1.bf16.xpose.msra.mxu0 0
        %1597 = vmatprep.subr.bf16.mxu0 0
        %1598 = vmatpush1.bf16.xpose.msra.mxu0 0
        %1599 = vmatprep.subr.bf16.mxu0 0
        %1600 = vmatpush1.bf16.xpose.msra.mxu0 0
        %1601 = vmatprep.subr.bf16.mxu0 0
        %1602 = vmatpush1.bf16.xpose.msra.mxu0 0
        %1603 = vmatprep.subr.bf16.mxu0 0
        %1604 = vmatpush1.bf16.xpose.msra.mxu0 0
        %1605 = vmatprep.subr.bf16.mxu0 0
        %1606 = vmatpush1.bf16.xpose.msra.mxu0 0
        %1607 = vmatprep.subr.bf16.mxu0 0
        %1608 = vmatpush1.bf16.xpose.msra.mxu0 0
        %1609 = vmatprep.subr.bf16.mxu0 0
        %1610 = vmatpush1.bf16.xpose.msra.mxu0 0
        %1611 = vmatprep.mubr.bf16.mxu0 0
        %1612 = vmatmul.mubr.bf16.gmra.mrb[0].mxu0 %v1252
        %v1613 = vpop.f32.mrb[0].mxu0
        %v1614 = vadd.f32 %v1257, %v1613
        %v1615 = vpop.f32.mrb[0].mxu0
        %v1616 = vpop.f32.mrb[0].mxu0
        %v1617 = vpop.f32.mrb[0].mxu0
        %1618 = vdwg.mxu0
        %1619 = vmatprep.subr.bf16.mxu0 0
        %1620 = vmatpush1.bf16.xpose.msra.mxu0 %v1189
        %1621 = vmatprep.subr.bf16.mxu0 0
        %1622 = vmatpush1.bf16.xpose.msra.mxu0 0
        %1623 = vmatprep.subr.bf16.mxu0 0
        %1624 = vmatpush1.bf16.xpose.msra.mxu0 0
        %1625 = vmatprep.subr.bf16.mxu0 0
        %1626 = vmatpush1.bf16.xpose.msra.mxu0 0
        %1627 = vmatprep.subr.bf16.mxu0 0
        %1628 = vmatpush1.bf16.xpose.msra.mxu0 0
        %1629 = vmatprep.subr.bf16.mxu0 0
        %1630 = vmatpush1.bf16.xpose.msra.mxu0 0
        %1631 = vmatprep.subr.bf16.mxu0 0
        %1632 = vmatpush1.bf16.xpose.msra.mxu0 0
        %1633 = vmatprep.subr.bf16.mxu0 0
        %1634 = vmatpush1.bf16.xpose.msra.mxu0 0
        %1635 = vmatprep.subr.bf16.mxu0 0
        %1636 = vmatpush1.bf16.xpose.msra.mxu0 0
        %1637 = vmatprep.subr.bf16.mxu0 0
        %1638 = vmatpush1.bf16.xpose.msra.mxu0 0
        %1639 = vmatprep.subr.bf16.mxu0 0
        %1640 = vmatpush1.bf16.xpose.msra.mxu0 0
        %1641 = vmatprep.subr.bf16.mxu0 0
        %1642 = vmatpush1.bf16.xpose.msra.mxu0 0
        %1643 = vmatprep.subr.bf16.mxu0 0
        %1644 = vmatpush1.bf16.xpose.msra.mxu0 0
        %1645 = vmatprep.subr.bf16.mxu0 0
        %1646 = vmatpush1.bf16.xpose.msra.mxu0 0
        %1647 = vmatprep.subr.bf16.mxu0 0
        %1648 = vmatpush1.bf16.xpose.msra.mxu0 0
        %1649 = vmatprep.subr.bf16.mxu0 0
        %1650 = vmatpush1.bf16.xpose.msra.mxu0 0
        %1651 = vmatprep.mubr.bf16.mxu0 0
        %1652 = vmatmul.mubr.bf16.gmra.mrb[0].mxu0 %v1252
        %v1653 = vpop.f32.mrb[0].mxu0
        %v1654 = vadd.f32 %v1257, %v1653
        %v1655 = vpop.f32.mrb[0].mxu0
        %v1656 = vpop.f32.mrb[0].mxu0
        %v1657 = vpop.f32.mrb[0].mxu0
        %1658 = vdwg.mxu0
        %1659 = vmatprep.subr.bf16.mxu0 0
        %1660 = vmatpush1.bf16.xpose.msra.mxu0 %v1190
        %1661 = vmatprep.subr.bf16.mxu0 0
        %1662 = vmatpush1.bf16.xpose.msra.mxu0 0
        %1663 = vmatprep.subr.bf16.mxu0 0
        %1664 = vmatpush1.bf16.xpose.msra.mxu0 0
        %1665 = vmatprep.subr.bf16.mxu0 0
        %1666 = vmatpush1.bf16.xpose.msra.mxu0 0
        %1667 = vmatprep.subr.bf16.mxu0 0
        %1668 = vmatpush1.bf16.xpose.msra.mxu0 0
        %1669 = vmatprep.subr.bf16.mxu0 0
        %1670 = vmatpush1.bf16.xpose.msra.mxu0 0
        %1671 = vmatprep.subr.bf16.mxu0 0
        %1672 = vmatpush1.bf16.xpose.msra.mxu0 0
        %1673 = vmatprep.subr.bf16.mxu0 0
        %1674 = vmatpush1.bf16.xpose.msra.mxu0 0
        %1675 = vmatprep.subr.bf16.mxu0 0
        %1676 = vmatpush1.bf16.xpose.msra.mxu0 0
        %1677 = vmatprep.subr.bf16.mxu0 0
        %1678 = vmatpush1.bf16.xpose.msra.mxu0 0
        %1679 = vmatprep.subr.bf16.mxu0 0
        %1680 = vmatpush1.bf16.xpose.msra.mxu0 0
        %1681 = vmatprep.subr.bf16.mxu0 0
        %1682 = vmatpush1.bf16.xpose.msra.mxu0 0
        %1683 = vmatprep.subr.bf16.mxu0 0
        %1684 = vmatpush1.bf16.xpose.msra.mxu0 0
        %1685 = vmatprep.subr.bf16.mxu0 0
        %1686 = vmatpush1.bf16.xpose.msra.mxu0 0
        %1687 = vmatprep.subr.bf16.mxu0 0
        %1688 = vmatpush1.bf16.xpose.msra.mxu0 0
        %1689 = vmatprep.subr.bf16.mxu0 0
        %1690 = vmatpush1.bf16.xpose.msra.mxu0 0
        %1691 = vmatprep.mubr.bf16.mxu0 0
        %1692 = vmatmul.mubr.bf16.gmra.mrb[0].mxu0 %v1252
        %v1693 = vpop.f32.mrb[0].mxu0
        %v1694 = vadd.f32 %v1257, %v1693
        %v1695 = vpop.f32.mrb[0].mxu0
        %v1696 = vpop.f32.mrb[0].mxu0
        %v1697 = vpop.f32.mrb[0].mxu0
        %1698 = vdwg.mxu0
        %1699 = vmatprep.subr.bf16.mxu0 0
        %1700 = vmatpush1.bf16.xpose.msra.mxu0 %v1191
        %1701 = vmatprep.subr.bf16.mxu0 0
        %1702 = vmatpush1.bf16.xpose.msra.mxu0 0
        %1703 = vmatprep.subr.bf16.mxu0 0
        %1704 = vmatpush1.bf16.xpose.msra.mxu0 0
        %1705 = vmatprep.subr.bf16.mxu0 0
        %1706 = vmatpush1.bf16.xpose.msra.mxu0 0
        %1707 = vmatprep.subr.bf16.mxu0 0
        %1708 = vmatpush1.bf16.xpose.msra.mxu0 0
        %1709 = vmatprep.subr.bf16.mxu0 0
        %1710 = vmatpush1.bf16.xpose.msra.mxu0 0
        %1711 = vmatprep.subr.bf16.mxu0 0
        %1712 = vmatpush1.bf16.xpose.msra.mxu0 0
        %1713 = vmatprep.subr.bf16.mxu0 0
        %1714 = vmatpush1.bf16.xpose.msra.mxu0 0
        %1715 = vmatprep.subr.bf16.mxu0 0
        %1716 = vmatpush1.bf16.xpose.msra.mxu0 0
        %1717 = vmatprep.subr.bf16.mxu0 0
        %1718 = vmatpush1.bf16.xpose.msra.mxu0 0
        %1719 = vmatprep.subr.bf16.mxu0 0
        %1720 = vmatpush1.bf16.xpose.msra.mxu0 0
        %1721 = vmatprep.subr.bf16.mxu0 0
        %1722 = vmatpush1.bf16.xpose.msra.mxu0 0
        %1723 = vmatprep.subr.bf16.mxu0 0
        %1724 = vmatpush1.bf16.xpose.msra.mxu0 0
        %1725 = vmatprep.subr.bf16.mxu0 0
        %1726 = vmatpush1.bf16.xpose.msra.mxu0 0
        %1727 = vmatprep.subr.bf16.mxu0 0
        %1728 = vmatpush1.bf16.xpose.msra.mxu0 0
        %1729 = vmatprep.subr.bf16.mxu0 0
        %1730 = vmatpush1.bf16.xpose.msra.mxu0 0
        %1731 = vmatprep.mubr.bf16.mxu0 0
        %1732 = vmatmul.mubr.bf16.gmra.mrb[0].mxu0 %v1252
        %v1733 = vpop.f32.mrb[0].mxu0
        %v1734 = vadd.f32 %v1257, %v1733
        %v1735 = vpop.f32.mrb[0].mxu0
        %v1736 = vpop.f32.mrb[0].mxu0
        %v1737 = vpop.f32.mrb[0].mxu0
        %1738 = vdwg.mxu0
        %1739 = vmatprep.subr.bf16.mxu0 0
        %1740 = vmatpush1.bf16.xpose.msra.mxu0 %v1192
        %1741 = vmatprep.subr.bf16.mxu0 0
        %1742 = vmatpush1.bf16.xpose.msra.mxu0 0
        %1743 = vmatprep.subr.bf16.mxu0 0
        %1744 = vmatpush1.bf16.xpose.msra.mxu0 0
        %1745 = vmatprep.subr.bf16.mxu0 0
        %1746 = vmatpush1.bf16.xpose.msra.mxu0 0
        %1747 = vmatprep.subr.bf16.mxu0 0
        %1748 = vmatpush1.bf16.xpose.msra.mxu0 0
        %1749 = vmatprep.subr.bf16.mxu0 0
        %1750 = vmatpush1.bf16.xpose.msra.mxu0 0
        %1751 = vmatprep.subr.bf16.mxu0 0
        %1752 = vmatpush1.bf16.xpose.msra.mxu0 0
        %1753 = vmatprep.subr.bf16.mxu0 0
        %1754 = vmatpush1.bf16.xpose.msra.mxu0 0
        %1755 = vmatprep.subr.bf16.mxu0 0
        %1756 = vmatpush1.bf16.xpose.msra.mxu0 0
        %1757 = vmatprep.subr.bf16.mxu0 0
        %1758 = vmatpush1.bf16.xpose.msra.mxu0 0
        %1759 = vmatprep.subr.bf16.mxu0 0
        %1760 = vmatpush1.bf16.xpose.msra.mxu0 0
        %1761 = vmatprep.subr.bf16.mxu0 0
        %1762 = vmatpush1.bf16.xpose.msra.mxu0 0
        %1763 = vmatprep.subr.bf16.mxu0 0
        %1764 = vmatpush1.bf16.xpose.msra.mxu0 0
        %1765 = vmatprep.subr.bf16.mxu0 0
        %1766 = vmatpush1.bf16.xpose.msra.mxu0 0
        %1767 = vmatprep.subr.bf16.mxu0 0
        %1768 = vmatpush1.bf16.xpose.msra.mxu0 0
        %1769 = vmatprep.subr.bf16.mxu0 0
        %1770 = vmatpush1.bf16.xpose.msra.mxu0 0
        %1771 = vmatprep.mubr.bf16.mxu0 0
        %1772 = vmatmul.mubr.bf16.gmra.mrb[0].mxu0 %v1252
        %v1773 = vpop.f32.mrb[0].mxu0
        %v1774 = vadd.f32 %v1257, %v1773
        %v1775 = vpop.f32.mrb[0].mxu0
        %v1776 = vpop.f32.mrb[0].mxu0
        %v1777 = vpop.f32.mrb[0].mxu0
        %1778 = vdwg.mxu0
        %1779 = vmatprep.subr.bf16.mxu0 0
        %1780 = vmatpush1.bf16.xpose.msra.mxu0 %v1193
        %1781 = vmatprep.subr.bf16.mxu0 0
        %1782 = vmatpush1.bf16.xpose.msra.mxu0 0
        %1783 = vmatprep.subr.bf16.mxu0 0
        %1784 = vmatpush1.bf16.xpose.msra.mxu0 0
        %1785 = vmatprep.subr.bf16.mxu0 0
        %1786 = vmatpush1.bf16.xpose.msra.mxu0 0
        %1787 = vmatprep.subr.bf16.mxu0 0
        %1788 = vmatpush1.bf16.xpose.msra.mxu0 0
        %1789 = vmatprep.subr.bf16.mxu0 0
        %1790 = vmatpush1.bf16.xpose.msra.mxu0 0
        %1791 = vmatprep.subr.bf16.mxu0 0
        %1792 = vmatpush1.bf16.xpose.msra.mxu0 0
        %1793 = vmatprep.subr.bf16.mxu0 0
        %1794 = vmatpush1.bf16.xpose.msra.mxu0 0
        %1795 = vmatprep.subr.bf16.mxu0 0
        %1796 = vmatpush1.bf16.xpose.msra.mxu0 0
        %1797 = vmatprep.subr.bf16.mxu0 0
        %1798 = vmatpush1.bf16.xpose.msra.mxu0 0
        %1799 = vmatprep.subr.bf16.mxu0 0
        %1800 = vmatpush1.bf16.xpose.msra.mxu0 0
        %1801 = vmatprep.subr.bf16.mxu0 0
        %1802 = vmatpush1.bf16.xpose.msra.mxu0 0
        %1803 = vmatprep.subr.bf16.mxu0 0
        %1804 = vmatpush1.bf16.xpose.msra.mxu0 0
        %1805 = vmatprep.subr.bf16.mxu0 0
        %1806 = vmatpush1.bf16.xpose.msra.mxu0 0
        %1807 = vmatprep.subr.bf16.mxu0 0
        %1808 = vmatpush1.bf16.xpose.msra.mxu0 0
        %1809 = vmatprep.subr.bf16.mxu0 0
        %1810 = vmatpush1.bf16.xpose.msra.mxu0 0
        %1811 = vmatprep.mubr.bf16.mxu0 0
        %1812 = vmatmul.mubr.bf16.gmra.mrb[0].mxu0 %v1252
        %v1813 = vpop.f32.mrb[0].mxu0
        %v1814 = vadd.f32 %v1257, %v1813
        %v1815 = vpop.f32.mrb[0].mxu0
        %v1816 = vpop.f32.mrb[0].mxu0
        %v1817 = vpop.f32.mrb[0].mxu0
        %1818 = vdwg.mxu0
        %1819 = vmatprep.subr.bf16.mxu0 0
        %1820 = vmatpush1.bf16.xpose.msra.mxu0 %v1194
        %1821 = vmatprep.subr.bf16.mxu0 0
        %1822 = vmatpush1.bf16.xpose.msra.mxu0 0
        %1823 = vmatprep.subr.bf16.mxu0 0
        %1824 = vmatpush1.bf16.xpose.msra.mxu0 0
        %1825 = vmatprep.subr.bf16.mxu0 0
        %1826 = vmatpush1.bf16.xpose.msra.mxu0 0
        %1827 = vmatprep.subr.bf16.mxu0 0
        %1828 = vmatpush1.bf16.xpose.msra.mxu0 0
        %1829 = vmatprep.subr.bf16.mxu0 0
        %1830 = vmatpush1.bf16.xpose.msra.mxu0 0
        %1831 = vmatprep.subr.bf16.mxu0 0
        %1832 = vmatpush1.bf16.xpose.msra.mxu0 0
        %1833 = vmatprep.subr.bf16.mxu0 0
        %1834 = vmatpush1.bf16.xpose.msra.mxu0 0
        %1835 = vmatprep.subr.bf16.mxu0 0
        %1836 = vmatpush1.bf16.xpose.msra.mxu0 0
        %1837 = vmatprep.subr.bf16.mxu0 0
        %1838 = vmatpush1.bf16.xpose.msra.mxu0 0
        %1839 = vmatprep.subr.bf16.mxu0 0
        %1840 = vmatpush1.bf16.xpose.msra.mxu0 0
        %1841 = vmatprep.subr.bf16.mxu0 0
        %1842 = vmatpush1.bf16.xpose.msra.mxu0 0
        %1843 = vmatprep.subr.bf16.mxu0 0
        %1844 = vmatpush1.bf16.xpose.msra.mxu0 0
        %1845 = vmatprep.subr.bf16.mxu0 0
        %1846 = vmatpush1.bf16.xpose.msra.mxu0 0
        %1847 = vmatprep.subr.bf16.mxu0 0
        %1848 = vmatpush1.bf16.xpose.msra.mxu0 0
        %1849 = vmatprep.subr.bf16.mxu0 0
        %1850 = vmatpush1.bf16.xpose.msra.mxu0 0
        %1851 = vmatprep.mubr.bf16.mxu0 0
        %1852 = vmatmul.mubr.bf16.gmra.mrb[0].mxu0 %v1252
        %v1853 = vpop.f32.mrb[0].mxu0
        %v1854 = vadd.f32 %v1257, %v1853
        %v1855 = vpop.f32.mrb[0].mxu0
        %v1856 = vpop.f32.mrb[0].mxu0
        %v1857 = vpop.f32.mrb[0].mxu0
        %1858 = vdwg.mxu0
        %1859 = vmatprep.subr.bf16.mxu0 0
        %1860 = vmatpush1.bf16.xpose.msra.mxu0 %v1195
        %1861 = vmatprep.subr.bf16.mxu0 0
        %1862 = vmatpush1.bf16.xpose.msra.mxu0 0
        %1863 = vmatprep.subr.bf16.mxu0 0
        %1864 = vmatpush1.bf16.xpose.msra.mxu0 0
        %1865 = vmatprep.subr.bf16.mxu0 0
        %1866 = vmatpush1.bf16.xpose.msra.mxu0 0
        %1867 = vmatprep.subr.bf16.mxu0 0
        %1868 = vmatpush1.bf16.xpose.msra.mxu0 0
        %1869 = vmatprep.subr.bf16.mxu0 0
        %1870 = vmatpush1.bf16.xpose.msra.mxu0 0
        %1871 = vmatprep.subr.bf16.mxu0 0
        %1872 = vmatpush1.bf16.xpose.msra.mxu0 0
        %1873 = vmatprep.subr.bf16.mxu0 0
        %1874 = vmatpush1.bf16.xpose.msra.mxu0 0
        %1875 = vmatprep.subr.bf16.mxu0 0
        %1876 = vmatpush1.bf16.xpose.msra.mxu0 0
        %1877 = vmatprep.subr.bf16.mxu0 0
        %1878 = vmatpush1.bf16.xpose.msra.mxu0 0
        %1879 = vmatprep.subr.bf16.mxu0 0
        %1880 = vmatpush1.bf16.xpose.msra.mxu0 0
        %1881 = vmatprep.subr.bf16.mxu0 0
        %1882 = vmatpush1.bf16.xpose.msra.mxu0 0
        %1883 = vmatprep.subr.bf16.mxu0 0
        %1884 = vmatpush1.bf16.xpose.msra.mxu0 0
        %1885 = vmatprep.subr.bf16.mxu0 0
        %1886 = vmatpush1.bf16.xpose.msra.mxu0 0
        %1887 = vmatprep.subr.bf16.mxu0 0
        %1888 = vmatpush1.bf16.xpose.msra.mxu0 0
        %1889 = vmatprep.subr.bf16.mxu0 0
        %1890 = vmatpush1.bf16.xpose.msra.mxu0 0
        %1891 = vmatprep.mubr.bf16.mxu0 0
        %1892 = vmatmul.mubr.bf16.gmra.mrb[0].mxu0 %v1252
        %v1893 = vpop.f32.mrb[0].mxu0
        %v1894 = vadd.f32 %v1257, %v1893
        %v1895 = vpop.f32.mrb[0].mxu0
        %v1896 = vpop.f32.mrb[0].mxu0
        %v1897 = vpop.f32.mrb[0].mxu0
        %1898 = vdwg.mxu0
        %v1899 = vld [vmem:[%s796] sm:$0x1]
        %v1900 = vld [vmem:[%s796 + $0x1] sm:$0x1]
        %v1901 = vld [vmem:[%s796 + $0x2] sm:$0x1]
        %v1902 = vld [vmem:[%s796 + $0x3] sm:$0x1]
        %v1903 = vld [vmem:[%s796 + $0x4] sm:$0x1]
        %v1904 = vld [vmem:[%s796 + $0x5] sm:$0x1]
        %v1905 = vld [vmem:[%s796 + $0x6] sm:$0x1]
        %v1906 = vld [vmem:[%s796 + $0x7] sm:$0x1]
        %v1907 = vld [vmem:[%s796 + $0x8] sm:$0x1]
        %v1908 = vld [vmem:[%s796 + $0x9] sm:$0x1]
        %v1909 = vld [vmem:[%s796 + $0xa] sm:$0x1]
        %v1910 = vld [vmem:[%s796 + $0xb] sm:$0x1]
        %v1911 = vld [vmem:[%s796 + $0xc] sm:$0x1]
        %v1912 = vld [vmem:[%s796 + $0xd] sm:$0x1]
        %v1913 = vld [vmem:[%s796 + $0xe] sm:$0x1]
        %v1914 = vld [vmem:[%s796 + $0xf] sm:$0x1]
        %v1931 = vlaneseq
        %v1932 = vshrl.u32 %v1931, 7
        %v1933 = vsub.s32 0, %v1932
        %v1934 = vrot.slane %v1899, %v1933
        %v1935 = vlaneseq
        %v1936 = vshrl.u32 %v1935, 7
        %v1937 = vsub.s32 0, %v1936
        %v1938 = vrot.slane %v1900, %v1937
        %v1939 = vlaneseq
        %v1940 = vshrl.u32 %v1939, 7
        %v1941 = vsub.s32 0, %v1940
        %v1942 = vrot.slane %v1901, %v1941
        %v1943 = vlaneseq
        %v1944 = vshrl.u32 %v1943, 7
        %v1945 = vsub.s32 0, %v1944
        %v1946 = vrot.slane %v1902, %v1945
        %v1947 = vlaneseq
        %v1948 = vshrl.u32 %v1947, 7
        %v1949 = vsub.s32 0, %v1948
        %v1950 = vrot.slane %v1903, %v1949
        %v1951 = vlaneseq
        %v1952 = vshrl.u32 %v1951, 7
        %v1953 = vsub.s32 0, %v1952
        %v1954 = vrot.slane %v1904, %v1953
        %v1955 = vlaneseq
        %v1956 = vshrl.u32 %v1955, 7
        %v1957 = vsub.s32 0, %v1956
        %v1958 = vrot.slane %v1905, %v1957
        %v1959 = vlaneseq
        %v1960 = vshrl.u32 %v1959, 7
        %v1961 = vsub.s32 0, %v1960
        %v1962 = vrot.slane %v1906, %v1961
        %v1963 = vlaneseq
        %v1964 = vshrl.u32 %v1963, 7
        %v1965 = vsub.s32 0, %v1964
        %v1966 = vrot.slane %v1907, %v1965
        %v1967 = vlaneseq
        %v1968 = vshrl.u32 %v1967, 7
        %v1969 = vsub.s32 0, %v1968
        %v1970 = vrot.slane %v1908, %v1969
        %v1971 = vlaneseq
        %v1972 = vshrl.u32 %v1971, 7
        %v1973 = vsub.s32 0, %v1972
        %v1974 = vrot.slane %v1909, %v1973
        %v1975 = vlaneseq
        %v1976 = vshrl.u32 %v1975, 7
        %v1977 = vsub.s32 0, %v1976
        %v1978 = vrot.slane %v1910, %v1977
        %v1979 = vlaneseq
        %v1980 = vshrl.u32 %v1979, 7
        %v1981 = vsub.s32 0, %v1980
        %v1982 = vrot.slane %v1911, %v1981
        %v1983 = vlaneseq
        %v1984 = vshrl.u32 %v1983, 7
        %v1985 = vsub.s32 0, %v1984
        %v1986 = vrot.slane %v1912, %v1985
        %v1987 = vlaneseq
        %v1988 = vshrl.u32 %v1987, 7
        %v1989 = vsub.s32 0, %v1988
        %v1990 = vrot.slane %v1913, %v1989
        %v1991 = vlaneseq
        %v1992 = vshrl.u32 %v1991, 7
        %v1993 = vsub.s32 0, %v1992
        %v1994 = vrot.slane %v1914, %v1993
        %v2011 = vadd.f32 %v1294, %v1934
        %v2012 = vadd.f32 %v1334, %v1938
        %v2013 = vadd.f32 %v1374, %v1942
        %v2014 = vadd.f32 %v1414, %v1946
        %v2015 = vadd.f32 %v1454, %v1950
        %v2016 = vadd.f32 %v1494, %v1954
        %v2017 = vadd.f32 %v1534, %v1958
        %v2018 = vadd.f32 %v1574, %v1962
        %v2019 = vadd.f32 %v1614, %v1966
        %v2020 = vadd.f32 %v1654, %v1970
        %v2021 = vadd.f32 %v1694, %v1974
        %v2022 = vadd.f32 %v1734, %v1978
        %v2023 = vadd.f32 %v1774, %v1982
        %v2024 = vadd.f32 %v1814, %v1986
        %v2025 = vadd.f32 %v1854, %v1990
        %v2026 = vadd.f32 %v1894, %v1994
        %vm2027 = vcmask 64512
        %v2028 = vsel %vm2027, %v2011, -inf
        %2029 = vmax.xlane.f32.xlu0 %v2028
        %v2030 = vpop.xlane.xlu0 %2029
        %v2031 = vsel %vm2027, %v2012, -inf
        %2032 = vmax.xlane.f32.xlu0 %v2031
        %v2033 = vpop.xlane.xlu0 %2032
        %v2034 = vsel %vm2027, %v2013, -inf
        %2035 = vmax.xlane.f32.xlu0 %v2034
        %v2036 = vpop.xlane.xlu0 %2035
        %v2037 = vsel %vm2027, %v2014, -inf
        %2038 = vmax.xlane.f32.xlu0 %v2037
        %v2039 = vpop.xlane.xlu0 %2038
        %v2040 = vsel %vm2027, %v2015, -inf
        %2041 = vmax.xlane.f32.xlu0 %v2040
        %v2042 = vpop.xlane.xlu0 %2041
        %v2043 = vsel %vm2027, %v2016, -inf
        %2044 = vmax.xlane.f32.xlu0 %v2043
        %v2045 = vpop.xlane.xlu0 %2044
        %v2046 = vsel %vm2027, %v2017, -inf
        %2047 = vmax.xlane.f32.xlu0 %v2046
        %v2048 = vpop.xlane.xlu0 %2047
        %v2049 = vsel %vm2027, %v2018, -inf
        %2050 = vmax.xlane.f32.xlu0 %v2049
        %v2051 = vpop.xlane.xlu0 %2050
        %v2052 = vsel %vm2027, %v2019, -inf
        %2053 = vmax.xlane.f32.xlu0 %v2052
        %v2054 = vpop.xlane.xlu0 %2053
        %v2055 = vsel %vm2027, %v2020, -inf
        %2056 = vmax.xlane.f32.xlu0 %v2055
        %v2057 = vpop.xlane.xlu0 %2056
        %v2058 = vsel %vm2027, %v2021, -inf
        %2059 = vmax.xlane.f32.xlu0 %v2058
        %v2060 = vpop.xlane.xlu0 %2059
        %v2061 = vsel %vm2027, %v2022, -inf
        %2062 = vmax.xlane.f32.xlu0 %v2061
        %v2063 = vpop.xlane.xlu0 %2062
        %v2064 = vsel %vm2027, %v2023, -inf
        %2065 = vmax.xlane.f32.xlu0 %v2064
        %v2066 = vpop.xlane.xlu0 %2065
        %v2067 = vsel %vm2027, %v2024, -inf
        %2068 = vmax.xlane.f32.xlu0 %v2067
        %v2069 = vpop.xlane.xlu0 %2068
        %v2070 = vsel %vm2027, %v2025, -inf
        %2071 = vmax.xlane.f32.xlu0 %v2070
        %v2072 = vpop.xlane.xlu0 %2071
        %v2073 = vsel %vm2027, %v2026, -inf
        %2074 = vmax.xlane.f32.xlu0 %v2073
        %v2075 = vpop.xlane.xlu0 %2074
        %v2076 = vsub.f32 %v2011, %v2030
        %v2077 = vsub.f32 %v2012, %v2033
        %v2078 = vsub.f32 %v2013, %v2036
        %v2079 = vsub.f32 %v2014, %v2039
        %v2080 = vsub.f32 %v2015, %v2042
        %v2081 = vsub.f32 %v2016, %v2045
        %v2082 = vsub.f32 %v2017, %v2048
        %v2083 = vsub.f32 %v2018, %v2051
        %v2084 = vsub.f32 %v2019, %v2054
        %v2085 = vsub.f32 %v2020, %v2057
        %v2086 = vsub.f32 %v2021, %v2060
        %v2087 = vsub.f32 %v2022, %v2063
        %v2088 = vsub.f32 %v2023, %v2066
        %v2089 = vsub.f32 %v2024, %v2069
        %v2090 = vsub.f32 %v2025, %v2072
        %v2091 = vsub.f32 %v2026, %v2075
        %v2092 = vmul.f32 %v2076, 1.442695
        %v2093 = vpow.pop %v2092
        %v2094 = vmul.f32 %v2077, 1.442695
        %v2095 = vpow.pop %v2094
        %v2096 = vmul.f32 %v2078, 1.442695
        %v2097 = vpow.pop %v2096
        %v2098 = vmul.f32 %v2079, 1.442695
        %v2099 = vpow.pop %v2098
        %v2100 = vmul.f32 %v2080, 1.442695
        %v2101 = vpow.pop %v2100
        %v2102 = vmul.f32 %v2081, 1.442695
        %v2103 = vpow.pop %v2102
        %v2104 = vmul.f32 %v2082, 1.442695
        %v2105 = vpow.pop %v2104
        %v2106 = vmul.f32 %v2083, 1.442695
        %v2107 = vpow.pop %v2106
        %v2108 = vmul.f32 %v2084, 1.442695
        %v2109 = vpow.pop %v2108
        %v2110 = vmul.f32 %v2085, 1.442695
        %v2111 = vpow.pop %v2110
        %v2112 = vmul.f32 %v2086, 1.442695
        %v2113 = vpow.pop %v2112
        %v2114 = vmul.f32 %v2087, 1.442695
        %v2115 = vpow.pop %v2114
        %v2116 = vmul.f32 %v2088, 1.442695
        %v2117 = vpow.pop %v2116
        %v2118 = vmul.f32 %v2089, 1.442695
        %v2119 = vpow.pop %v2118
        %v2120 = vmul.f32 %v2090, 1.442695
        %v2121 = vpow.pop %v2120
        %v2122 = vmul.f32 %v2091, 1.442695
        %v2123 = vpow.pop %v2122
        %v2124 = vsel %vm2027, %v2093, 0.0
        %2125 = vadd.xlane.f32.xlu0 %v2124
        %v2126 = vpop.xlane.xlu0 %2125
        %v2127 = vsel %vm2027, %v2095, 0.0
        %2128 = vadd.xlane.f32.xlu0 %v2127
        %v2129 = vpop.xlane.xlu0 %2128
        %v2130 = vsel %vm2027, %v2097, 0.0
        %2131 = vadd.xlane.f32.xlu0 %v2130
        %v2132 = vpop.xlane.xlu0 %2131
        %v2133 = vsel %vm2027, %v2099, 0.0
        %2134 = vadd.xlane.f32.xlu0 %v2133
        %v2135 = vpop.xlane.xlu0 %2134
        %v2136 = vsel %vm2027, %v2101, 0.0
        %2137 = vadd.xlane.f32.xlu0 %v2136
        %v2138 = vpop.xlane.xlu0 %2137
        %v2139 = vsel %vm2027, %v2103, 0.0
        %2140 = vadd.xlane.f32.xlu0 %v2139
        %v2141 = vpop.xlane.xlu0 %2140
        %v2142 = vsel %vm2027, %v2105, 0.0
        %2143 = vadd.xlane.f32.xlu0 %v2142
        %v2144 = vpop.xlane.xlu0 %2143
        %v2145 = vsel %vm2027, %v2107, 0.0
        %2146 = vadd.xlane.f32.xlu0 %v2145
        %v2147 = vpop.xlane.xlu0 %2146
        %v2148 = vsel %vm2027, %v2109, 0.0
        %2149 = vadd.xlane.f32.xlu0 %v2148
        %v2150 = vpop.xlane.xlu0 %2149
        %v2151 = vsel %vm2027, %v2111, 0.0
        %2152 = vadd.xlane.f32.xlu0 %v2151
        %v2153 = vpop.xlane.xlu0 %2152
        %v2154 = vsel %vm2027, %v2113, 0.0
        %2155 = vadd.xlane.f32.xlu0 %v2154
        %v2156 = vpop.xlane.xlu0 %2155
        %v2157 = vsel %vm2027, %v2115, 0.0
        %2158 = vadd.xlane.f32.xlu0 %v2157
        %v2159 = vpop.xlane.xlu0 %2158
        %v2160 = vsel %vm2027, %v2117, 0.0
        %2161 = vadd.xlane.f32.xlu0 %v2160
        %v2162 = vpop.xlane.xlu0 %2161
        %v2163 = vsel %vm2027, %v2119, 0.0
        %2164 = vadd.xlane.f32.xlu0 %v2163
        %v2165 = vpop.xlane.xlu0 %2164
        %v2166 = vsel %vm2027, %v2121, 0.0
        %2167 = vadd.xlane.f32.xlu0 %v2166
        %v2168 = vpop.xlane.xlu0 %2167
        %v2169 = vsel %vm2027, %v2123, 0.0
        %2170 = vadd.xlane.f32.xlu0 %v2169
        %v2171 = vpop.xlane.xlu0 %2170
        %v2172 = vrcp.pop %v2126
        %v2173 = vrcp.pop %v2129
        %v2174 = vrcp.pop %v2132
        %v2175 = vrcp.pop %v2135
        %v2176 = vrcp.pop %v2138
        %v2177 = vrcp.pop %v2141
        %v2178 = vrcp.pop %v2144
        %v2179 = vrcp.pop %v2147
        %v2180 = vrcp.pop %v2150
        %v2181 = vrcp.pop %v2153
        %v2182 = vrcp.pop %v2156
        %v2183 = vrcp.pop %v2159
        %v2184 = vrcp.pop %v2162
        %v2185 = vrcp.pop %v2165
        %v2186 = vrcp.pop %v2168
        %v2187 = vrcp.pop %v2171
        %v2188 = vmul.f32 %v2093, %v2172
        %v2189 = vmul.f32 %v2095, %v2173
        %v2190 = vmul.f32 %v2097, %v2174
        %v2191 = vmul.f32 %v2099, %v2175
        %v2192 = vmul.f32 %v2101, %v2176
        %v2193 = vmul.f32 %v2103, %v2177
        %v2194 = vmul.f32 %v2105, %v2178
        %v2195 = vmul.f32 %v2107, %v2179
        %v2196 = vmul.f32 %v2109, %v2180
        %v2197 = vmul.f32 %v2111, %v2181
        %v2198 = vmul.f32 %v2113, %v2182
        %v2199 = vmul.f32 %v2115, %v2183
        %v2200 = vmul.f32 %v2117, %v2184
        %v2201 = vmul.f32 %v2119, %v2185
        %v2202 = vmul.f32 %v2121, %v2186
        %v2203 = vmul.f32 %v2123, %v2187
        %v2204 = vpack.c.bf16 %v2188, %v2188
        %v2205 = vpack.c.bf16 %v2189, %v2189
        %v2206 = vpack.c.bf16 %v2190, %v2190
        %v2207 = vpack.c.bf16 %v2191, %v2191
        %v2208 = vpack.c.bf16 %v2192, %v2192
        %v2209 = vpack.c.bf16 %v2193, %v2193
        %v2210 = vpack.c.bf16 %v2194, %v2194
        %v2211 = vpack.c.bf16 %v2195, %v2195
        %v2212 = vpack.c.bf16 %v2196, %v2196
        %v2213 = vpack.c.bf16 %v2197, %v2197
        %v2214 = vpack.c.bf16 %v2198, %v2198
        %v2215 = vpack.c.bf16 %v2199, %v2199
        %v2216 = vpack.c.bf16 %v2200, %v2200
        %v2217 = vpack.c.bf16 %v2201, %v2201
        %v2218 = vpack.c.bf16 %v2202, %v2202
        %v2219 = vpack.c.bf16 %v2203, %v2203
        %v2221 = vsel %vm2027, %v2204, 0
        %vm2223 = vcmask 1043456
        %v2225 = vsel %vm2223, %v1236, 0
        %2227 = vmatprep.subr.bf16.mxu0 0
        %2228 = vmatpush1.bf16.msra.mxu0 %v2225
        %2229 = vmatprep.subr.bf16.mxu0 0
        %2230 = vmatpush1.bf16.msra.mxu0 0
        %2231 = vmatprep.subr.bf16.mxu0 0
        %2232 = vmatpush1.bf16.msra.mxu0 0
        %2233 = vmatprep.subr.bf16.mxu0 0
        %2234 = vmatpush1.bf16.msra.mxu0 0
        %2235 = vmatprep.subr.bf16.mxu0 0
        %2236 = vmatpush1.bf16.msra.mxu0 0
        %2237 = vmatprep.subr.bf16.mxu0 0
        %2238 = vmatpush1.bf16.msra.mxu0 0
        %2239 = vmatprep.subr.bf16.mxu0 0
        %2240 = vmatpush1.bf16.msra.mxu0 0
        %2241 = vmatprep.subr.bf16.mxu0 0
        %2242 = vmatpush1.bf16.msra.mxu0 0
        %2243 = vmatprep.subr.bf16.mxu0 0
        %2244 = vmatpush1.bf16.msra.mxu0 0
        %2245 = vmatprep.subr.bf16.mxu0 0
        %2246 = vmatpush1.bf16.msra.mxu0 0
        %2247 = vmatprep.subr.bf16.mxu0 0
        %2248 = vmatpush1.bf16.msra.mxu0 0
        %2249 = vmatprep.subr.bf16.mxu0 0
        %2250 = vmatpush1.bf16.msra.mxu0 0
        %2251 = vmatprep.subr.bf16.mxu0 0
        %2252 = vmatpush1.bf16.msra.mxu0 0
        %2253 = vmatprep.subr.bf16.mxu0 0
        %2254 = vmatpush1.bf16.msra.mxu0 0
        %2255 = vmatprep.subr.bf16.mxu0 0
        %2256 = vmatpush1.bf16.msra.mxu0 0
        %2257 = vmatprep.subr.bf16.mxu0 0
        %2258 = vmatpush1.bf16.msra.mxu0 0
        %2259 = vmatprep.mubr.bf16.mxu0 0
        %2260 = vmatmul.mubr.bf16.gmra.mrb[0].mxu0 %v2221
        %v2261 = vpop.f32.mrb[0].mxu0
        %v2262 = vadd.f32 0.0, %v2261
        %v2263 = vpop.f32.mrb[0].mxu0
        %v2264 = vpop.f32.mrb[0].mxu0
        %v2265 = vpop.f32.mrb[0].mxu0
        %2266 = vdwg.mxu0
        %v2268 = vsel %vm2027, %v2205, 0
        %v2271 = vsel %vm2223, %v1237, 0
        %2273 = vmatprep.subr.bf16.mxu0 0
        %2274 = vmatpush1.bf16.msra.mxu0 %v2271
        %2275 = vmatprep.subr.bf16.mxu0 0
        %2276 = vmatpush1.bf16.msra.mxu0 0
        %2277 = vmatprep.subr.bf16.mxu0 0
        %2278 = vmatpush1.bf16.msra.mxu0 0
        %2279 = vmatprep.subr.bf16.mxu0 0
        %2280 = vmatpush1.bf16.msra.mxu0 0
        %2281 = vmatprep.subr.bf16.mxu0 0
        %2282 = vmatpush1.bf16.msra.mxu0 0
        %2283 = vmatprep.subr.bf16.mxu0 0
        %2284 = vmatpush1.bf16.msra.mxu0 0
        %2285 = vmatprep.subr.bf16.mxu0 0
        %2286 = vmatpush1.bf16.msra.mxu0 0
        %2287 = vmatprep.subr.bf16.mxu0 0
        %2288 = vmatpush1.bf16.msra.mxu0 0
        %2289 = vmatprep.subr.bf16.mxu0 0
        %2290 = vmatpush1.bf16.msra.mxu0 0
        %2291 = vmatprep.subr.bf16.mxu0 0
        %2292 = vmatpush1.bf16.msra.mxu0 0
        %2293 = vmatprep.subr.bf16.mxu0 0
        %2294 = vmatpush1.bf16.msra.mxu0 0
        %2295 = vmatprep.subr.bf16.mxu0 0
        %2296 = vmatpush1.bf16.msra.mxu0 0
        %2297 = vmatprep.subr.bf16.mxu0 0
        %2298 = vmatpush1.bf16.msra.mxu0 0
        %2299 = vmatprep.subr.bf16.mxu0 0
        %2300 = vmatpush1.bf16.msra.mxu0 0
        %2301 = vmatprep.subr.bf16.mxu0 0
        %2302 = vmatpush1.bf16.msra.mxu0 0
        %2303 = vmatprep.subr.bf16.mxu0 0
        %2304 = vmatpush1.bf16.msra.mxu0 0
        %2305 = vmatprep.mubr.bf16.mxu0 0
        %2306 = vmatmul.mubr.bf16.gmra.mrb[0].mxu0 %v2268
        %v2307 = vpop.f32.mrb[0].mxu0
        %v2308 = vadd.f32 0.0, %v2307
        %v2309 = vpop.f32.mrb[0].mxu0
        %v2310 = vpop.f32.mrb[0].mxu0
        %v2311 = vpop.f32.mrb[0].mxu0
        %2312 = vdwg.mxu0
        %v2314 = vsel %vm2027, %v2206, 0
        %v2317 = vsel %vm2223, %v1238, 0
        %2319 = vmatprep.subr.bf16.mxu0 0
        %2320 = vmatpush1.bf16.msra.mxu0 %v2317
        %2321 = vmatprep.subr.bf16.mxu0 0
        %2322 = vmatpush1.bf16.msra.mxu0 0
        %2323 = vmatprep.subr.bf16.mxu0 0
        %2324 = vmatpush1.bf16.msra.mxu0 0
        %2325 = vmatprep.subr.bf16.mxu0 0
        %2326 = vmatpush1.bf16.msra.mxu0 0
        %2327 = vmatprep.subr.bf16.mxu0 0
        %2328 = vmatpush1.bf16.msra.mxu0 0
        %2329 = vmatprep.subr.bf16.mxu0 0
        %2330 = vmatpush1.bf16.msra.mxu0 0
        %2331 = vmatprep.subr.bf16.mxu0 0
        %2332 = vmatpush1.bf16.msra.mxu0 0
        %2333 = vmatprep.subr.bf16.mxu0 0
        %2334 = vmatpush1.bf16.msra.mxu0 0
        %2335 = vmatprep.subr.bf16.mxu0 0
        %2336 = vmatpush1.bf16.msra.mxu0 0
        %2337 = vmatprep.subr.bf16.mxu0 0
        %2338 = vmatpush1.bf16.msra.mxu0 0
        %2339 = vmatprep.subr.bf16.mxu0 0
        %2340 = vmatpush1.bf16.msra.mxu0 0
        %2341 = vmatprep.subr.bf16.mxu0 0
        %2342 = vmatpush1.bf16.msra.mxu0 0
        %2343 = vmatprep.subr.bf16.mxu0 0
        %2344 = vmatpush1.bf16.msra.mxu0 0
        %2345 = vmatprep.subr.bf16.mxu0 0
        %2346 = vmatpush1.bf16.msra.mxu0 0
        %2347 = vmatprep.subr.bf16.mxu0 0
        %2348 = vmatpush1.bf16.msra.mxu0 0
        %2349 = vmatprep.subr.bf16.mxu0 0
        %2350 = vmatpush1.bf16.msra.mxu0 0
        %2351 = vmatprep.mubr.bf16.mxu0 0
        %2352 = vmatmul.mubr.bf16.gmra.mrb[0].mxu0 %v2314
        %v2353 = vpop.f32.mrb[0].mxu0
        %v2354 = vadd.f32 0.0, %v2353
        %v2355 = vpop.f32.mrb[0].mxu0
        %v2356 = vpop.f32.mrb[0].mxu0
        %v2357 = vpop.f32.mrb[0].mxu0
        %2358 = vdwg.mxu0
        %v2360 = vsel %vm2027, %v2207, 0
        %v2363 = vsel %vm2223, %v1239, 0
        %2365 = vmatprep.subr.bf16.mxu0 0
        %2366 = vmatpush1.bf16.msra.mxu0 %v2363
        %2367 = vmatprep.subr.bf16.mxu0 0
        %2368 = vmatpush1.bf16.msra.mxu0 0
        %2369 = vmatprep.subr.bf16.mxu0 0
        %2370 = vmatpush1.bf16.msra.mxu0 0
        %2371 = vmatprep.subr.bf16.mxu0 0
        %2372 = vmatpush1.bf16.msra.mxu0 0
        %2373 = vmatprep.subr.bf16.mxu0 0
        %2374 = vmatpush1.bf16.msra.mxu0 0
        %2375 = vmatprep.subr.bf16.mxu0 0
        %2376 = vmatpush1.bf16.msra.mxu0 0
        %2377 = vmatprep.subr.bf16.mxu0 0
        %2378 = vmatpush1.bf16.msra.mxu0 0
        %2379 = vmatprep.subr.bf16.mxu0 0
        %2380 = vmatpush1.bf16.msra.mxu0 0
        %2381 = vmatprep.subr.bf16.mxu0 0
        %2382 = vmatpush1.bf16.msra.mxu0 0
        %2383 = vmatprep.subr.bf16.mxu0 0
        %2384 = vmatpush1.bf16.msra.mxu0 0
        %2385 = vmatprep.subr.bf16.mxu0 0
        %2386 = vmatpush1.bf16.msra.mxu0 0
        %2387 = vmatprep.subr.bf16.mxu0 0
        %2388 = vmatpush1.bf16.msra.mxu0 0
        %2389 = vmatprep.subr.bf16.mxu0 0
        %2390 = vmatpush1.bf16.msra.mxu0 0
        %2391 = vmatprep.subr.bf16.mxu0 0
        %2392 = vmatpush1.bf16.msra.mxu0 0
        %2393 = vmatprep.subr.bf16.mxu0 0
        %2394 = vmatpush1.bf16.msra.mxu0 0
        %2395 = vmatprep.subr.bf16.mxu0 0
        %2396 = vmatpush1.bf16.msra.mxu0 0
        %2397 = vmatprep.mubr.bf16.mxu0 0
        %2398 = vmatmul.mubr.bf16.gmra.mrb[0].mxu0 %v2360
        %v2399 = vpop.f32.mrb[0].mxu0
        %v2400 = vadd.f32 0.0, %v2399
        %v2401 = vpop.f32.mrb[0].mxu0
        %v2402 = vpop.f32.mrb[0].mxu0
        %v2403 = vpop.f32.mrb[0].mxu0
        %2404 = vdwg.mxu0
        %v2406 = vsel %vm2027, %v2208, 0
        %v2409 = vsel %vm2223, %v1240, 0
        %2411 = vmatprep.subr.bf16.mxu0 0
        %2412 = vmatpush1.bf16.msra.mxu0 %v2409
        %2413 = vmatprep.subr.bf16.mxu0 0
        %2414 = vmatpush1.bf16.msra.mxu0 0
        %2415 = vmatprep.subr.bf16.mxu0 0
        %2416 = vmatpush1.bf16.msra.mxu0 0
        %2417 = vmatprep.subr.bf16.mxu0 0
        %2418 = vmatpush1.bf16.msra.mxu0 0
        %2419 = vmatprep.subr.bf16.mxu0 0
        %2420 = vmatpush1.bf16.msra.mxu0 0
        %2421 = vmatprep.subr.bf16.mxu0 0
        %2422 = vmatpush1.bf16.msra.mxu0 0
        %2423 = vmatprep.subr.bf16.mxu0 0
        %2424 = vmatpush1.bf16.msra.mxu0 0
        %2425 = vmatprep.subr.bf16.mxu0 0
        %2426 = vmatpush1.bf16.msra.mxu0 0
        %2427 = vmatprep.subr.bf16.mxu0 0
        %2428 = vmatpush1.bf16.msra.mxu0 0
        %2429 = vmatprep.subr.bf16.mxu0 0
        %2430 = vmatpush1.bf16.msra.mxu0 0
        %2431 = vmatprep.subr.bf16.mxu0 0
        %2432 = vmatpush1.bf16.msra.mxu0 0
        %2433 = vmatprep.subr.bf16.mxu0 0
        %2434 = vmatpush1.bf16.msra.mxu0 0
        %2435 = vmatprep.subr.bf16.mxu0 0
        %2436 = vmatpush1.bf16.msra.mxu0 0
        %2437 = vmatprep.subr.bf16.mxu0 0
        %2438 = vmatpush1.bf16.msra.mxu0 0
        %2439 = vmatprep.subr.bf16.mxu0 0
        %2440 = vmatpush1.bf16.msra.mxu0 0
        %2441 = vmatprep.subr.bf16.mxu0 0
        %2442 = vmatpush1.bf16.msra.mxu0 0
        %2443 = vmatprep.mubr.bf16.mxu0 0
        %2444 = vmatmul.mubr.bf16.gmra.mrb[0].mxu0 %v2406
        %v2445 = vpop.f32.mrb[0].mxu0
        %v2446 = vadd.f32 0.0, %v2445
        %v2447 = vpop.f32.mrb[0].mxu0
        %v2448 = vpop.f32.mrb[0].mxu0
        %v2449 = vpop.f32.mrb[0].mxu0
        %2450 = vdwg.mxu0
        %v2452 = vsel %vm2027, %v2209, 0
        %v2455 = vsel %vm2223, %v1241, 0
        %2457 = vmatprep.subr.bf16.mxu0 0
        %2458 = vmatpush1.bf16.msra.mxu0 %v2455
        %2459 = vmatprep.subr.bf16.mxu0 0
        %2460 = vmatpush1.bf16.msra.mxu0 0
        %2461 = vmatprep.subr.bf16.mxu0 0
        %2462 = vmatpush1.bf16.msra.mxu0 0
        %2463 = vmatprep.subr.bf16.mxu0 0
        %2464 = vmatpush1.bf16.msra.mxu0 0
        %2465 = vmatprep.subr.bf16.mxu0 0
        %2466 = vmatpush1.bf16.msra.mxu0 0
        %2467 = vmatprep.subr.bf16.mxu0 0
        %2468 = vmatpush1.bf16.msra.mxu0 0
        %2469 = vmatprep.subr.bf16.mxu0 0
        %2470 = vmatpush1.bf16.msra.mxu0 0
        %2471 = vmatprep.subr.bf16.mxu0 0
        %2472 = vmatpush1.bf16.msra.mxu0 0
        %2473 = vmatprep.subr.bf16.mxu0 0
        %2474 = vmatpush1.bf16.msra.mxu0 0
        %2475 = vmatprep.subr.bf16.mxu0 0
        %2476 = vmatpush1.bf16.msra.mxu0 0
        %2477 = vmatprep.subr.bf16.mxu0 0
        %2478 = vmatpush1.bf16.msra.mxu0 0
        %2479 = vmatprep.subr.bf16.mxu0 0
        %2480 = vmatpush1.bf16.msra.mxu0 0
        %2481 = vmatprep.subr.bf16.mxu0 0
        %2482 = vmatpush1.bf16.msra.mxu0 0
        %2483 = vmatprep.subr.bf16.mxu0 0
        %2484 = vmatpush1.bf16.msra.mxu0 0
        %2485 = vmatprep.subr.bf16.mxu0 0
        %2486 = vmatpush1.bf16.msra.mxu0 0
        %2487 = vmatprep.subr.bf16.mxu0 0
        %2488 = vmatpush1.bf16.msra.mxu0 0
        %2489 = vmatprep.mubr.bf16.mxu0 0
        %2490 = vmatmul.mubr.bf16.gmra.mrb[0].mxu0 %v2452
        %v2491 = vpop.f32.mrb[0].mxu0
        %v2492 = vadd.f32 0.0, %v2491
        %v2493 = vpop.f32.mrb[0].mxu0
        %v2494 = vpop.f32.mrb[0].mxu0
        %v2495 = vpop.f32.mrb[0].mxu0
        %2496 = vdwg.mxu0
        %v2498 = vsel %vm2027, %v2210, 0
        %v2501 = vsel %vm2223, %v1242, 0
        %2503 = vmatprep.subr.bf16.mxu0 0
        %2504 = vmatpush1.bf16.msra.mxu0 %v2501
        %2505 = vmatprep.subr.bf16.mxu0 0
        %2506 = vmatpush1.bf16.msra.mxu0 0
        %2507 = vmatprep.subr.bf16.mxu0 0
        %2508 = vmatpush1.bf16.msra.mxu0 0
        %2509 = vmatprep.subr.bf16.mxu0 0
        %2510 = vmatpush1.bf16.msra.mxu0 0
        %2511 = vmatprep.subr.bf16.mxu0 0
        %2512 = vmatpush1.bf16.msra.mxu0 0
        %2513 = vmatprep.subr.bf16.mxu0 0
        %2514 = vmatpush1.bf16.msra.mxu0 0
        %2515 = vmatprep.subr.bf16.mxu0 0
        %2516 = vmatpush1.bf16.msra.mxu0 0
        %2517 = vmatprep.subr.bf16.mxu0 0
        %2518 = vmatpush1.bf16.msra.mxu0 0
        %2519 = vmatprep.subr.bf16.mxu0 0
        %2520 = vmatpush1.bf16.msra.mxu0 0
        %2521 = vmatprep.subr.bf16.mxu0 0
        %2522 = vmatpush1.bf16.msra.mxu0 0
        %2523 = vmatprep.subr.bf16.mxu0 0
        %2524 = vmatpush1.bf16.msra.mxu0 0
        %2525 = vmatprep.subr.bf16.mxu0 0
        %2526 = vmatpush1.bf16.msra.mxu0 0
        %2527 = vmatprep.subr.bf16.mxu0 0
        %2528 = vmatpush1.bf16.msra.mxu0 0
        %2529 = vmatprep.subr.bf16.mxu0 0
        %2530 = vmatpush1.bf16.msra.mxu0 0
        %2531 = vmatprep.subr.bf16.mxu0 0
        %2532 = vmatpush1.bf16.msra.mxu0 0
        %2533 = vmatprep.subr.bf16.mxu0 0
        %2534 = vmatpush1.bf16.msra.mxu0 0
        %2535 = vmatprep.mubr.bf16.mxu0 0
        %2536 = vmatmul.mubr.bf16.gmra.mrb[0].mxu0 %v2498
        %v2537 = vpop.f32.mrb[0].mxu0
        %v2538 = vadd.f32 0.0, %v2537
        %v2539 = vpop.f32.mrb[0].mxu0
        %v2540 = vpop.f32.mrb[0].mxu0
        %v2541 = vpop.f32.mrb[0].mxu0
        %2542 = vdwg.mxu0
        %v2544 = vsel %vm2027, %v2211, 0
        %v2547 = vsel %vm2223, %v1243, 0
        %2549 = vmatprep.subr.bf16.mxu0 0
        %2550 = vmatpush1.bf16.msra.mxu0 %v2547
        %2551 = vmatprep.subr.bf16.mxu0 0
        %2552 = vmatpush1.bf16.msra.mxu0 0
        %2553 = vmatprep.subr.bf16.mxu0 0
        %2554 = vmatpush1.bf16.msra.mxu0 0
        %2555 = vmatprep.subr.bf16.mxu0 0
        %2556 = vmatpush1.bf16.msra.mxu0 0
        %2557 = vmatprep.subr.bf16.mxu0 0
        %2558 = vmatpush1.bf16.msra.mxu0 0
        %2559 = vmatprep.subr.bf16.mxu0 0
        %2560 = vmatpush1.bf16.msra.mxu0 0
        %2561 = vmatprep.subr.bf16.mxu0 0
        %2562 = vmatpush1.bf16.msra.mxu0 0
        %2563 = vmatprep.subr.bf16.mxu0 0
        %2564 = vmatpush1.bf16.msra.mxu0 0
        %2565 = vmatprep.subr.bf16.mxu0 0
        %2566 = vmatpush1.bf16.msra.mxu0 0
        %2567 = vmatprep.subr.bf16.mxu0 0
        %2568 = vmatpush1.bf16.msra.mxu0 0
        %2569 = vmatprep.subr.bf16.mxu0 0
        %2570 = vmatpush1.bf16.msra.mxu0 0
        %2571 = vmatprep.subr.bf16.mxu0 0
        %2572 = vmatpush1.bf16.msra.mxu0 0
        %2573 = vmatprep.subr.bf16.mxu0 0
        %2574 = vmatpush1.bf16.msra.mxu0 0
        %2575 = vmatprep.subr.bf16.mxu0 0
        %2576 = vmatpush1.bf16.msra.mxu0 0
        %2577 = vmatprep.subr.bf16.mxu0 0
        %2578 = vmatpush1.bf16.msra.mxu0 0
        %2579 = vmatprep.subr.bf16.mxu0 0
        %2580 = vmatpush1.bf16.msra.mxu0 0
        %2581 = vmatprep.mubr.bf16.mxu0 0
        %2582 = vmatmul.mubr.bf16.gmra.mrb[0].mxu0 %v2544
        %v2583 = vpop.f32.mrb[0].mxu0
        %v2584 = vadd.f32 0.0, %v2583
        %v2585 = vpop.f32.mrb[0].mxu0
        %v2586 = vpop.f32.mrb[0].mxu0
        %v2587 = vpop.f32.mrb[0].mxu0
        %2588 = vdwg.mxu0
        %v2590 = vsel %vm2027, %v2212, 0
        %v2593 = vsel %vm2223, %v1244, 0
        %2595 = vmatprep.subr.bf16.mxu0 0
        %2596 = vmatpush1.bf16.msra.mxu0 %v2593
        %2597 = vmatprep.subr.bf16.mxu0 0
        %2598 = vmatpush1.bf16.msra.mxu0 0
        %2599 = vmatprep.subr.bf16.mxu0 0
        %2600 = vmatpush1.bf16.msra.mxu0 0
        %2601 = vmatprep.subr.bf16.mxu0 0
        %2602 = vmatpush1.bf16.msra.mxu0 0
        %2603 = vmatprep.subr.bf16.mxu0 0
        %2604 = vmatpush1.bf16.msra.mxu0 0
        %2605 = vmatprep.subr.bf16.mxu0 0
        %2606 = vmatpush1.bf16.msra.mxu0 0
        %2607 = vmatprep.subr.bf16.mxu0 0
        %2608 = vmatpush1.bf16.msra.mxu0 0
        %2609 = vmatprep.subr.bf16.mxu0 0
        %2610 = vmatpush1.bf16.msra.mxu0 0
        %2611 = vmatprep.subr.bf16.mxu0 0
        %2612 = vmatpush1.bf16.msra.mxu0 0
        %2613 = vmatprep.subr.bf16.mxu0 0
        %2614 = vmatpush1.bf16.msra.mxu0 0
        %2615 = vmatprep.subr.bf16.mxu0 0
        %2616 = vmatpush1.bf16.msra.mxu0 0
        %2617 = vmatprep.subr.bf16.mxu0 0
        %2618 = vmatpush1.bf16.msra.mxu0 0
        %2619 = vmatprep.subr.bf16.mxu0 0
        %2620 = vmatpush1.bf16.msra.mxu0 0
        %2621 = vmatprep.subr.bf16.mxu0 0
        %2622 = vmatpush1.bf16.msra.mxu0 0
        %2623 = vmatprep.subr.bf16.mxu0 0
        %2624 = vmatpush1.bf16.msra.mxu0 0
        %2625 = vmatprep.subr.bf16.mxu0 0
        %2626 = vmatpush1.bf16.msra.mxu0 0
        %2627 = vmatprep.mubr.bf16.mxu0 0
        %2628 = vmatmul.mubr.bf16.gmra.mrb[0].mxu0 %v2590
        %v2629 = vpop.f32.mrb[0].mxu0
        %v2630 = vadd.f32 0.0, %v2629
        %v2631 = vpop.f32.mrb[0].mxu0
        %v2632 = vpop.f32.mrb[0].mxu0
        %v2633 = vpop.f32.mrb[0].mxu0
        %2634 = vdwg.mxu0
        %v2636 = vsel %vm2027, %v2213, 0
        %v2639 = vsel %vm2223, %v1245, 0
        %2641 = vmatprep.subr.bf16.mxu0 0
        %2642 = vmatpush1.bf16.msra.mxu0 %v2639
        %2643 = vmatprep.subr.bf16.mxu0 0
        %2644 = vmatpush1.bf16.msra.mxu0 0
        %2645 = vmatprep.subr.bf16.mxu0 0
        %2646 = vmatpush1.bf16.msra.mxu0 0
        %2647 = vmatprep.subr.bf16.mxu0 0
        %2648 = vmatpush1.bf16.msra.mxu0 0
        %2649 = vmatprep.subr.bf16.mxu0 0
        %2650 = vmatpush1.bf16.msra.mxu0 0
        %2651 = vmatprep.subr.bf16.mxu0 0
        %2652 = vmatpush1.bf16.msra.mxu0 0
        %2653 = vmatprep.subr.bf16.mxu0 0
        %2654 = vmatpush1.bf16.msra.mxu0 0
        %2655 = vmatprep.subr.bf16.mxu0 0
        %2656 = vmatpush1.bf16.msra.mxu0 0
        %2657 = vmatprep.subr.bf16.mxu0 0
        %2658 = vmatpush1.bf16.msra.mxu0 0
        %2659 = vmatprep.subr.bf16.mxu0 0
        %2660 = vmatpush1.bf16.msra.mxu0 0
        %2661 = vmatprep.subr.bf16.mxu0 0
        %2662 = vmatpush1.bf16.msra.mxu0 0
        %2663 = vmatprep.subr.bf16.mxu0 0
        %2664 = vmatpush1.bf16.msra.mxu0 0
        %2665 = vmatprep.subr.bf16.mxu0 0
        %2666 = vmatpush1.bf16.msra.mxu0 0
        %2667 = vmatprep.subr.bf16.mxu0 0
        %2668 = vmatpush1.bf16.msra.mxu0 0
        %2669 = vmatprep.subr.bf16.mxu0 0
        %2670 = vmatpush1.bf16.msra.mxu0 0
        %2671 = vmatprep.subr.bf16.mxu0 0
        %2672 = vmatpush1.bf16.msra.mxu0 0
        %2673 = vmatprep.mubr.bf16.mxu0 0
        %2674 = vmatmul.mubr.bf16.gmra.mrb[0].mxu0 %v2636
        %v2675 = vpop.f32.mrb[0].mxu0
        %v2676 = vadd.f32 0.0, %v2675
        %v2677 = vpop.f32.mrb[0].mxu0
        %v2678 = vpop.f32.mrb[0].mxu0
        %v2679 = vpop.f32.mrb[0].mxu0
        %2680 = vdwg.mxu0
        %v2682 = vsel %vm2027, %v2214, 0
        %v2685 = vsel %vm2223, %v1246, 0
        %2687 = vmatprep.subr.bf16.mxu0 0
        %2688 = vmatpush1.bf16.msra.mxu0 %v2685
        %2689 = vmatprep.subr.bf16.mxu0 0
        %2690 = vmatpush1.bf16.msra.mxu0 0
        %2691 = vmatprep.subr.bf16.mxu0 0
        %2692 = vmatpush1.bf16.msra.mxu0 0
        %2693 = vmatprep.subr.bf16.mxu0 0
        %2694 = vmatpush1.bf16.msra.mxu0 0
        %2695 = vmatprep.subr.bf16.mxu0 0
        %2696 = vmatpush1.bf16.msra.mxu0 0
        %2697 = vmatprep.subr.bf16.mxu0 0
        %2698 = vmatpush1.bf16.msra.mxu0 0
        %2699 = vmatprep.subr.bf16.mxu0 0
        %2700 = vmatpush1.bf16.msra.mxu0 0
        %2701 = vmatprep.subr.bf16.mxu0 0
        %2702 = vmatpush1.bf16.msra.mxu0 0
        %2703 = vmatprep.subr.bf16.mxu0 0
        %2704 = vmatpush1.bf16.msra.mxu0 0
        %2705 = vmatprep.subr.bf16.mxu0 0
        %2706 = vmatpush1.bf16.msra.mxu0 0
        %2707 = vmatprep.subr.bf16.mxu0 0
        %2708 = vmatpush1.bf16.msra.mxu0 0
        %2709 = vmatprep.subr.bf16.mxu0 0
        %2710 = vmatpush1.bf16.msra.mxu0 0
        %2711 = vmatprep.subr.bf16.mxu0 0
        %2712 = vmatpush1.bf16.msra.mxu0 0
        %2713 = vmatprep.subr.bf16.mxu0 0
        %2714 = vmatpush1.bf16.msra.mxu0 0
        %2715 = vmatprep.subr.bf16.mxu0 0
        %2716 = vmatpush1.bf16.msra.mxu0 0
        %2717 = vmatprep.subr.bf16.mxu0 0
        %2718 = vmatpush1.bf16.msra.mxu0 0
        %2719 = vmatprep.mubr.bf16.mxu0 0
        %2720 = vmatmul.mubr.bf16.gmra.mrb[0].mxu0 %v2682
        %v2721 = vpop.f32.mrb[0].mxu0
        %v2722 = vadd.f32 0.0, %v2721
        %v2723 = vpop.f32.mrb[0].mxu0
        %v2724 = vpop.f32.mrb[0].mxu0
        %v2725 = vpop.f32.mrb[0].mxu0
        %2726 = vdwg.mxu0
        %v2728 = vsel %vm2027, %v2215, 0
        %v2731 = vsel %vm2223, %v1247, 0
        %2733 = vmatprep.subr.bf16.mxu0 0
        %2734 = vmatpush1.bf16.msra.mxu0 %v2731
        %2735 = vmatprep.subr.bf16.mxu0 0
        %2736 = vmatpush1.bf16.msra.mxu0 0
        %2737 = vmatprep.subr.bf16.mxu0 0
        %2738 = vmatpush1.bf16.msra.mxu0 0
        %2739 = vmatprep.subr.bf16.mxu0 0
        %2740 = vmatpush1.bf16.msra.mxu0 0
        %2741 = vmatprep.subr.bf16.mxu0 0
        %2742 = vmatpush1.bf16.msra.mxu0 0
        %2743 = vmatprep.subr.bf16.mxu0 0
        %2744 = vmatpush1.bf16.msra.mxu0 0
        %2745 = vmatprep.subr.bf16.mxu0 0
        %2746 = vmatpush1.bf16.msra.mxu0 0
        %2747 = vmatprep.subr.bf16.mxu0 0
        %2748 = vmatpush1.bf16.msra.mxu0 0
        %2749 = vmatprep.subr.bf16.mxu0 0
        %2750 = vmatpush1.bf16.msra.mxu0 0
        %2751 = vmatprep.subr.bf16.mxu0 0
        %2752 = vmatpush1.bf16.msra.mxu0 0
        %2753 = vmatprep.subr.bf16.mxu0 0
        %2754 = vmatpush1.bf16.msra.mxu0 0
        %2755 = vmatprep.subr.bf16.mxu0 0
        %2756 = vmatpush1.bf16.msra.mxu0 0
        %2757 = vmatprep.subr.bf16.mxu0 0
        %2758 = vmatpush1.bf16.msra.mxu0 0
        %2759 = vmatprep.subr.bf16.mxu0 0
        %2760 = vmatpush1.bf16.msra.mxu0 0
        %2761 = vmatprep.subr.bf16.mxu0 0
        %2762 = vmatpush1.bf16.msra.mxu0 0
        %2763 = vmatprep.subr.bf16.mxu0 0
        %2764 = vmatpush1.bf16.msra.mxu0 0
        %2765 = vmatprep.mubr.bf16.mxu0 0
        %2766 = vmatmul.mubr.bf16.gmra.mrb[0].mxu0 %v2728
        %v2767 = vpop.f32.mrb[0].mxu0
        %v2768 = vadd.f32 0.0, %v2767
        %v2769 = vpop.f32.mrb[0].mxu0
        %v2770 = vpop.f32.mrb[0].mxu0
        %v2771 = vpop.f32.mrb[0].mxu0
        %2772 = vdwg.mxu0
        %v2774 = vsel %vm2027, %v2216, 0
        %v2777 = vsel %vm2223, %v1248, 0
        %2779 = vmatprep.subr.bf16.mxu0 0
        %2780 = vmatpush1.bf16.msra.mxu0 %v2777
        %2781 = vmatprep.subr.bf16.mxu0 0
        %2782 = vmatpush1.bf16.msra.mxu0 0
        %2783 = vmatprep.subr.bf16.mxu0 0
        %2784 = vmatpush1.bf16.msra.mxu0 0
        %2785 = vmatprep.subr.bf16.mxu0 0
        %2786 = vmatpush1.bf16.msra.mxu0 0
        %2787 = vmatprep.subr.bf16.mxu0 0
        %2788 = vmatpush1.bf16.msra.mxu0 0
        %2789 = vmatprep.subr.bf16.mxu0 0
        %2790 = vmatpush1.bf16.msra.mxu0 0
        %2791 = vmatprep.subr.bf16.mxu0 0
        %2792 = vmatpush1.bf16.msra.mxu0 0
        %2793 = vmatprep.subr.bf16.mxu0 0
        %2794 = vmatpush1.bf16.msra.mxu0 0
        %2795 = vmatprep.subr.bf16.mxu0 0
        %2796 = vmatpush1.bf16.msra.mxu0 0
        %2797 = vmatprep.subr.bf16.mxu0 0
        %2798 = vmatpush1.bf16.msra.mxu0 0
        %2799 = vmatprep.subr.bf16.mxu0 0
        %2800 = vmatpush1.bf16.msra.mxu0 0
        %2801 = vmatprep.subr.bf16.mxu0 0
        %2802 = vmatpush1.bf16.msra.mxu0 0
        %2803 = vmatprep.subr.bf16.mxu0 0
        %2804 = vmatpush1.bf16.msra.mxu0 0
        %2805 = vmatprep.subr.bf16.mxu0 0
        %2806 = vmatpush1.bf16.msra.mxu0 0
        %2807 = vmatprep.subr.bf16.mxu0 0
        %2808 = vmatpush1.bf16.msra.mxu0 0
        %2809 = vmatprep.subr.bf16.mxu0 0
        %2810 = vmatpush1.bf16.msra.mxu0 0
        %2811 = vmatprep.mubr.bf16.mxu0 0
        %2812 = vmatmul.mubr.bf16.gmra.mrb[0].mxu0 %v2774
        %v2813 = vpop.f32.mrb[0].mxu0
        %v2814 = vadd.f32 0.0, %v2813
        %v2815 = vpop.f32.mrb[0].mxu0
        %v2816 = vpop.f32.mrb[0].mxu0
        %v2817 = vpop.f32.mrb[0].mxu0
        %2818 = vdwg.mxu0
        %v2820 = vsel %vm2027, %v2217, 0
        %v2823 = vsel %vm2223, %v1249, 0
        %2825 = vmatprep.subr.bf16.mxu0 0
        %2826 = vmatpush1.bf16.msra.mxu0 %v2823
        %2827 = vmatprep.subr.bf16.mxu0 0
        %2828 = vmatpush1.bf16.msra.mxu0 0
        %2829 = vmatprep.subr.bf16.mxu0 0
        %2830 = vmatpush1.bf16.msra.mxu0 0
        %2831 = vmatprep.subr.bf16.mxu0 0
        %2832 = vmatpush1.bf16.msra.mxu0 0
        %2833 = vmatprep.subr.bf16.mxu0 0
        %2834 = vmatpush1.bf16.msra.mxu0 0
        %2835 = vmatprep.subr.bf16.mxu0 0
        %2836 = vmatpush1.bf16.msra.mxu0 0
        %2837 = vmatprep.subr.bf16.mxu0 0
        %2838 = vmatpush1.bf16.msra.mxu0 0
        %2839 = vmatprep.subr.bf16.mxu0 0
        %2840 = vmatpush1.bf16.msra.mxu0 0
        %2841 = vmatprep.subr.bf16.mxu0 0
        %2842 = vmatpush1.bf16.msra.mxu0 0
        %2843 = vmatprep.subr.bf16.mxu0 0
        %2844 = vmatpush1.bf16.msra.mxu0 0
        %2845 = vmatprep.subr.bf16.mxu0 0
        %2846 = vmatpush1.bf16.msra.mxu0 0
        %2847 = vmatprep.subr.bf16.mxu0 0
        %2848 = vmatpush1.bf16.msra.mxu0 0
        %2849 = vmatprep.subr.bf16.mxu0 0
        %2850 = vmatpush1.bf16.msra.mxu0 0
        %2851 = vmatprep.subr.bf16.mxu0 0
        %2852 = vmatpush1.bf16.msra.mxu0 0
        %2853 = vmatprep.subr.bf16.mxu0 0
        %2854 = vmatpush1.bf16.msra.mxu0 0
        %2855 = vmatprep.subr.bf16.mxu0 0
        %2856 = vmatpush1.bf16.msra.mxu0 0
        %2857 = vmatprep.mubr.bf16.mxu0 0
        %2858 = vmatmul.mubr.bf16.gmra.mrb[0].mxu0 %v2820
        %v2859 = vpop.f32.mrb[0].mxu0
        %v2860 = vadd.f32 0.0, %v2859
        %v2861 = vpop.f32.mrb[0].mxu0
        %v2862 = vpop.f32.mrb[0].mxu0
        %v2863 = vpop.f32.mrb[0].mxu0
        %2864 = vdwg.mxu0
        %v2866 = vsel %vm2027, %v2218, 0
        %v2869 = vsel %vm2223, %v1250, 0
        %2871 = vmatprep.subr.bf16.mxu0 0
        %2872 = vmatpush1.bf16.msra.mxu0 %v2869
        %2873 = vmatprep.subr.bf16.mxu0 0
        %2874 = vmatpush1.bf16.msra.mxu0 0
        %2875 = vmatprep.subr.bf16.mxu0 0
        %2876 = vmatpush1.bf16.msra.mxu0 0
        %2877 = vmatprep.subr.bf16.mxu0 0
        %2878 = vmatpush1.bf16.msra.mxu0 0
        %2879 = vmatprep.subr.bf16.mxu0 0
        %2880 = vmatpush1.bf16.msra.mxu0 0
        %2881 = vmatprep.subr.bf16.mxu0 0
        %2882 = vmatpush1.bf16.msra.mxu0 0
        %2883 = vmatprep.subr.bf16.mxu0 0
        %2884 = vmatpush1.bf16.msra.mxu0 0
        %2885 = vmatprep.subr.bf16.mxu0 0
        %2886 = vmatpush1.bf16.msra.mxu0 0
        %2887 = vmatprep.subr.bf16.mxu0 0
        %2888 = vmatpush1.bf16.msra.mxu0 0
        %2889 = vmatprep.subr.bf16.mxu0 0
        %2890 = vmatpush1.bf16.msra.mxu0 0
        %2891 = vmatprep.subr.bf16.mxu0 0
        %2892 = vmatpush1.bf16.msra.mxu0 0
        %2893 = vmatprep.subr.bf16.mxu0 0
        %2894 = vmatpush1.bf16.msra.mxu0 0
        %2895 = vmatprep.subr.bf16.mxu0 0
        %2896 = vmatpush1.bf16.msra.mxu0 0
        %2897 = vmatprep.subr.bf16.mxu0 0
        %2898 = vmatpush1.bf16.msra.mxu0 0
        %2899 = vmatprep.subr.bf16.mxu0 0
        %2900 = vmatpush1.bf16.msra.mxu0 0
        %2901 = vmatprep.subr.bf16.mxu0 0
        %2902 = vmatpush1.bf16.msra.mxu0 0
        %2903 = vmatprep.mubr.bf16.mxu0 0
        %2904 = vmatmul.mubr.bf16.gmra.mrb[0].mxu0 %v2866
        %v2905 = vpop.f32.mrb[0].mxu0
        %v2906 = vadd.f32 0.0, %v2905
        %v2907 = vpop.f32.mrb[0].mxu0
        %v2908 = vpop.f32.mrb[0].mxu0
        %v2909 = vpop.f32.mrb[0].mxu0
        %2910 = vdwg.mxu0
        %v2912 = vsel %vm2027, %v2219, 0
        %v2915 = vsel %vm2223, %v1251, 0
        %2917 = vmatprep.subr.bf16.mxu0 0
        %2918 = vmatpush1.bf16.msra.mxu0 %v2915
        %2919 = vmatprep.subr.bf16.mxu0 0
        %2920 = vmatpush1.bf16.msra.mxu0 0
        %2921 = vmatprep.subr.bf16.mxu0 0
        %2922 = vmatpush1.bf16.msra.mxu0 0
        %2923 = vmatprep.subr.bf16.mxu0 0
        %2924 = vmatpush1.bf16.msra.mxu0 0
        %2925 = vmatprep.subr.bf16.mxu0 0
        %2926 = vmatpush1.bf16.msra.mxu0 0
        %2927 = vmatprep.subr.bf16.mxu0 0
        %2928 = vmatpush1.bf16.msra.mxu0 0
        %2929 = vmatprep.subr.bf16.mxu0 0
        %2930 = vmatpush1.bf16.msra.mxu0 0
        %2931 = vmatprep.subr.bf16.mxu0 0
        %2932 = vmatpush1.bf16.msra.mxu0 0
        %2933 = vmatprep.subr.bf16.mxu0 0
        %2934 = vmatpush1.bf16.msra.mxu0 0
        %2935 = vmatprep.subr.bf16.mxu0 0
        %2936 = vmatpush1.bf16.msra.mxu0 0
        %2937 = vmatprep.subr.bf16.mxu0 0
        %2938 = vmatpush1.bf16.msra.mxu0 0
        %2939 = vmatprep.subr.bf16.mxu0 0
        %2940 = vmatpush1.bf16.msra.mxu0 0
        %2941 = vmatprep.subr.bf16.mxu0 0
        %2942 = vmatpush1.bf16.msra.mxu0 0
        %2943 = vmatprep.subr.bf16.mxu0 0
        %2944 = vmatpush1.bf16.msra.mxu0 0
        %2945 = vmatprep.subr.bf16.mxu0 0
        %2946 = vmatpush1.bf16.msra.mxu0 0
        %2947 = vmatprep.subr.bf16.mxu0 0
        %2948 = vmatpush1.bf16.msra.mxu0 0
        %2949 = vmatprep.mubr.bf16.mxu0 0
        %2950 = vmatmul.mubr.bf16.gmra.mrb[0].mxu0 %v2912
        %v2951 = vpop.f32.mrb[0].mxu0
        %v2952 = vadd.f32 0.0, %v2951
        %v2953 = vpop.f32.mrb[0].mxu0
        %v2954 = vpop.f32.mrb[0].mxu0
        %v2955 = vpop.f32.mrb[0].mxu0
        %2956 = vdwg.mxu0
        %v2957 = vpack.c.bf16 %v2308, %v2262
        %v2958 = vpack.c.bf16 %v2400, %v2354
        %v2959 = vpack.c.bf16 %v2492, %v2446
        %v2960 = vpack.c.bf16 %v2584, %v2538
        %v2961 = vpack.c.bf16 %v2676, %v2630
        %v2962 = vpack.c.bf16 %v2768, %v2722
        %v2963 = vpack.c.bf16 %v2860, %v2814
        %v2964 = vpack.c.bf16 %v2952, %v2906
        %v2965 = vld [vmem:[#allocation10] sm:$0xf]
        %v2966 = vld [vmem:[#allocation10 + $0x4] sm:$0xf]
        %v2967 = vld [vmem:[#allocation10 + $0x8] sm:$0xf]
        %v2968 = vld [vmem:[#allocation10 + $0xc] sm:$0xf]
        %v2969 = vld [vmem:[#allocation10 + $0x10] sm:$0xf]
        %v2970 = vld [vmem:[#allocation10 + $0x14] sm:$0xf]
        %v2971 = vld [vmem:[#allocation10 + $0x18] sm:$0xf]
        %v2972 = vld [vmem:[#allocation10 + $0x1c] sm:$0xf]
        %v2973 = vld [vmem:[#allocation10 + $0x20] sm:$0xf]
        %v2974 = vld [vmem:[#allocation10 + $0x24] sm:$0xf]
        %v2975 = vld [vmem:[#allocation10 + $0x28] sm:$0xf]
        %v2976 = vld [vmem:[#allocation10 + $0x2c] sm:$0xf]
        %v2977 = vld [vmem:[#allocation10 + $0x30] sm:$0xf]
        %v2978 = vld [vmem:[#allocation10 + $0x34] sm:$0xf]
        %v2979 = vld [vmem:[#allocation10 + $0x38] sm:$0xf]
        %v2980 = vld [vmem:[#allocation10 + $0x3c] sm:$0xf]
        %v2997 = vunpack.c.l.b16 %v2965
        %v2998 = vunpack.c.l.b16 %v2966
        %v2999 = vunpack.c.l.b16 %v2967
        %v3000 = vunpack.c.l.b16 %v2968
        %v3001 = vunpack.c.l.b16 %v2969
        %v3002 = vunpack.c.l.b16 %v2970
        %v3003 = vunpack.c.l.b16 %v2971
        %v3004 = vunpack.c.l.b16 %v2972
        %v3005 = vunpack.c.l.b16 %v2973
        %v3006 = vunpack.c.l.b16 %v2974
        %v3007 = vunpack.c.l.b16 %v2975
        %v3008 = vunpack.c.l.b16 %v2976
        %v3009 = vunpack.c.l.b16 %v2977
        %v3010 = vunpack.c.l.b16 %v2978
        %v3011 = vunpack.c.l.b16 %v2979
        %v3012 = vunpack.c.l.b16 %v2980
        %v3013 = vpack.c.b16 %v2998, %v2997
        %v3014 = vpack.c.b16 %v3000, %v2999
        %v3015 = vpack.c.b16 %v3002, %v3001
        %v3016 = vpack.c.b16 %v3004, %v3003
        %v3017 = vpack.c.b16 %v3006, %v3005
        %v3018 = vpack.c.b16 %v3008, %v3007
        %v3019 = vpack.c.b16 %v3010, %v3009
        %v3020 = vpack.c.b16 %v3012, %v3011
        %3029 = vmatprep.subr.bf16.mxu0 0
        %3030 = vmatpush1.bf16.msra.mxu0 %v3013
        %3031 = vmatprep.subr.bf16.mxu0 0
        %3032 = vmatpush1.bf16.msra.mxu0 %v3014
        %3033 = vmatprep.subr.bf16.mxu0 0
        %3034 = vmatpush1.bf16.msra.mxu0 %v3015
        %3035 = vmatprep.subr.bf16.mxu0 0
        %3036 = vmatpush1.bf16.msra.mxu0 %v3016
        %3037 = vmatprep.subr.bf16.mxu0 0
        %3038 = vmatpush1.bf16.msra.mxu0 %v3017
        %3039 = vmatprep.subr.bf16.mxu0 0
        %3040 = vmatpush1.bf16.msra.mxu0 %v3018
        %3041 = vmatprep.subr.bf16.mxu0 0
        %3042 = vmatpush1.bf16.msra.mxu0 %v3019
        %3043 = vmatprep.subr.bf16.mxu0 0
        %3044 = vmatpush1.bf16.msra.mxu0 %v3020
        %3045 = vmatprep.subr.bf16.mxu0 0
        %3046 = vmatpush1.bf16.msra.mxu0 0
        %3047 = vmatprep.subr.bf16.mxu0 0
        %3048 = vmatpush1.bf16.msra.mxu0 0
        %3049 = vmatprep.subr.bf16.mxu0 0
        %3050 = vmatpush1.bf16.msra.mxu0 0
        %3051 = vmatprep.subr.bf16.mxu0 0
        %3052 = vmatpush1.bf16.msra.mxu0 0
        %3053 = vmatprep.subr.bf16.mxu0 0
        %3054 = vmatpush1.bf16.msra.mxu0 0
        %3055 = vmatprep.subr.bf16.mxu0 0
        %3056 = vmatpush1.bf16.msra.mxu0 0
        %3057 = vmatprep.subr.bf16.mxu0 0
        %3058 = vmatpush1.bf16.msra.mxu0 0
        %3059 = vmatprep.subr.bf16.mxu0 0
        %3060 = vmatpush1.bf16.msra.mxu0 0
        %3061 = vmatprep.mubr.bf16.mxu0 0
        %3062 = vmatmul.mubr.bf16.gmra.mrb[0].mxu0 %v2957
        %v3063 = vpop.f32.mrb[0].mxu0
        %v3064 = vadd.f32 0.0, %v3063
        %v3065 = vpop.f32.mrb[0].mxu0
        %v3066 = vpop.f32.mrb[0].mxu0
        %v3067 = vadd.f32 0.0, %v3066
        %v3068 = vpop.f32.mrb[0].mxu0
        %3069 = vmatprep.mubr.bf16.mxu0 0
        %3070 = vmatmul.mubr.bf16.gmra.mrb[0].mxu0 %v2958
        %v3071 = vpop.f32.mrb[0].mxu0
        %v3072 = vadd.f32 0.0, %v3071
        %v3073 = vpop.f32.mrb[0].mxu0
        %v3074 = vpop.f32.mrb[0].mxu0
        %v3075 = vadd.f32 0.0, %v3074
        %v3076 = vpop.f32.mrb[0].mxu0
        %3077 = vmatprep.mubr.bf16.mxu0 0
        %3078 = vmatmul.mubr.bf16.gmra.mrb[0].mxu0 %v2959
        %v3079 = vpop.f32.mrb[0].mxu0
        %v3080 = vadd.f32 0.0, %v3079
        %v3081 = vpop.f32.mrb[0].mxu0
        %v3082 = vpop.f32.mrb[0].mxu0
        %v3083 = vadd.f32 0.0, %v3082
        %v3084 = vpop.f32.mrb[0].mxu0
        %3085 = vmatprep.mubr.bf16.mxu0 0
        %3086 = vmatmul.mubr.bf16.gmra.mrb[0].mxu0 %v2960
        %v3087 = vpop.f32.mrb[0].mxu0
        %v3088 = vadd.f32 0.0, %v3087
        %v3089 = vpop.f32.mrb[0].mxu0
        %v3090 = vpop.f32.mrb[0].mxu0
        %v3091 = vadd.f32 0.0, %v3090
        %v3092 = vpop.f32.mrb[0].mxu0
        %3093 = vmatprep.mubr.bf16.mxu0 0
        %3094 = vmatmul.mubr.bf16.gmra.mrb[0].mxu0 %v2961
        %v3095 = vpop.f32.mrb[0].mxu0
        %v3096 = vadd.f32 0.0, %v3095
        %v3097 = vpop.f32.mrb[0].mxu0
        %v3098 = vpop.f32.mrb[0].mxu0
        %v3099 = vadd.f32 0.0, %v3098
        %v3100 = vpop.f32.mrb[0].mxu0
        %3101 = vmatprep.mubr.bf16.mxu0 0
        %3102 = vmatmul.mubr.bf16.gmra.mrb[0].mxu0 %v2962
        %v3103 = vpop.f32.mrb[0].mxu0
        %v3104 = vadd.f32 0.0, %v3103
        %v3105 = vpop.f32.mrb[0].mxu0
        %v3106 = vpop.f32.mrb[0].mxu0
        %v3107 = vadd.f32 0.0, %v3106
        %v3108 = vpop.f32.mrb[0].mxu0
        %3109 = vmatprep.mubr.bf16.mxu0 0
        %3110 = vmatmul.mubr.bf16.gmra.mrb[0].mxu0 %v2963
        %v3111 = vpop.f32.mrb[0].mxu0
        %v3112 = vadd.f32 0.0, %v3111
        %v3113 = vpop.f32.mrb[0].mxu0
        %v3114 = vpop.f32.mrb[0].mxu0
        %v3115 = vadd.f32 0.0, %v3114
        %v3116 = vpop.f32.mrb[0].mxu0
        %3117 = vmatprep.mubr.bf16.mxu0 0
        %3118 = vmatmul.mubr.bf16.gmra.mrb[0].mxu0 %v2964
        %v3119 = vpop.f32.mrb[0].mxu0
        %v3120 = vadd.f32 0.0, %v3119
        %v3121 = vpop.f32.mrb[0].mxu0
        %v3122 = vpop.f32.mrb[0].mxu0
        %v3123 = vadd.f32 0.0, %v3122
        %v3124 = vpop.f32.mrb[0].mxu0
        %3125 = vdwg.mxu0
        %v3126 = vld [vmem:[#allocation5] sm:$0xff]
        %v3127 = vadd.f32 %v3064, %v3126
        %v3128 = vadd.f32 %v3067, %v3126
        %v3129 = vadd.f32 %v3072, %v3126
        %v3130 = vadd.f32 %v3075, %v3126
        %v3131 = vadd.f32 %v3080, %v3126
        %v3132 = vadd.f32 %v3083, %v3126
        %v3133 = vadd.f32 %v3088, %v3126
        %v3134 = vadd.f32 %v3091, %v3126
        %v3135 = vadd.f32 %v3096, %v3126
        %v3136 = vadd.f32 %v3099, %v3126
        %v3137 = vadd.f32 %v3104, %v3126
        %v3138 = vadd.f32 %v3107, %v3126
        %v3139 = vadd.f32 %v3112, %v3126
        %v3140 = vadd.f32 %v3115, %v3126
        %v3141 = vadd.f32 %v3120, %v3126
        %v3142 = vadd.f32 %v3123, %v3126
        %3143 = vadd.xlane.f32.xlu0 %v3127
        %v3144 = vpop.xlane.xlu0 %3143
        %3145 = vadd.xlane.f32.xlu0 %v3128
        %v3146 = vpop.xlane.xlu0 %3145
        %3147 = vadd.xlane.f32.xlu0 %v3129
        %v3148 = vpop.xlane.xlu0 %3147
        %3149 = vadd.xlane.f32.xlu0 %v3130
        %v3150 = vpop.xlane.xlu0 %3149
        %3151 = vadd.xlane.f32.xlu0 %v3131
        %v3152 = vpop.xlane.xlu0 %3151
        %3153 = vadd.xlane.f32.xlu0 %v3132
        %v3154 = vpop.xlane.xlu0 %3153
        %3155 = vadd.xlane.f32.xlu0 %v3133
        %v3156 = vpop.xlane.xlu0 %3155
        %3157 = vadd.xlane.f32.xlu0 %v3134
        %v3158 = vpop.xlane.xlu0 %3157
        %3159 = vadd.xlane.f32.xlu0 %v3135
        %v3160 = vpop.xlane.xlu0 %3159
        %3161 = vadd.xlane.f32.xlu0 %v3136
        %v3162 = vpop.xlane.xlu0 %3161
        %3163 = vadd.xlane.f32.xlu0 %v3137
        %v3164 = vpop.xlane.xlu0 %3163
        %3165 = vadd.xlane.f32.xlu0 %v3138
        %v3166 = vpop.xlane.xlu0 %3165
        %3167 = vadd.xlane.f32.xlu0 %v3139
        %v3168 = vpop.xlane.xlu0 %3167
        %3169 = vadd.xlane.f32.xlu0 %v3140
        %v3170 = vpop.xlane.xlu0 %3169
        %3171 = vadd.xlane.f32.xlu0 %v3141
        %v3172 = vpop.xlane.xlu0 %3171
        %3173 = vadd.xlane.f32.xlu0 %v3142
        %v3174 = vpop.xlane.xlu0 %3173
        %v3175 = vrcp.pop 128.0
        %v3176 = vmul.f32 %v3144, %v3175
        %v3177 = vmul.f32 %v3146, %v3175
        %v3178 = vmul.f32 %v3148, %v3175
        %v3179 = vmul.f32 %v3150, %v3175
        %v3180 = vmul.f32 %v3152, %v3175
        %v3181 = vmul.f32 %v3154, %v3175
        %v3182 = vmul.f32 %v3156, %v3175
        %v3183 = vmul.f32 %v3158, %v3175
        %v3184 = vmul.f32 %v3160, %v3175
        %v3185 = vmul.f32 %v3162, %v3175
        %v3186 = vmul.f32 %v3164, %v3175
        %v3187 = vmul.f32 %v3166, %v3175
        %v3188 = vmul.f32 %v3168, %v3175
        %v3189 = vmul.f32 %v3170, %v3175
        %v3190 = vmul.f32 %v3172, %v3175
        %v3191 = vmul.f32 %v3174, %v3175
        %v3192 = vsub.f32 %v3127, %v3176
        %v3193 = vsub.f32 %v3128, %v3177
        %v3194 = vsub.f32 %v3129, %v3178
        %v3195 = vsub.f32 %v3130, %v3179
        %v3196 = vsub.f32 %v3131, %v3180
        %v3197 = vsub.f32 %v3132, %v3181
        %v3198 = vsub.f32 %v3133, %v3182
        %v3199 = vsub.f32 %v3134, %v3183
        %v3200 = vsub.f32 %v3135, %v3184
        %v3201 = vsub.f32 %v3136, %v3185
        %v3202 = vsub.f32 %v3137, %v3186
        %v3203 = vsub.f32 %v3138, %v3187
        %v3204 = vsub.f32 %v3139, %v3188
        %v3205 = vsub.f32 %v3140, %v3189
        %v3206 = vsub.f32 %v3141, %v3190
        %v3207 = vsub.f32 %v3142, %v3191
        %v3208 = vmul.f32 %v3192, %v3192
        %v3209 = vmul.f32 %v3193, %v3193
        %v3210 = vmul.f32 %v3194, %v3194
        %v3211 = vmul.f32 %v3195, %v3195
        %v3212 = vmul.f32 %v3196, %v3196
        %v3213 = vmul.f32 %v3197, %v3197
        %v3214 = vmul.f32 %v3198, %v3198
        %v3215 = vmul.f32 %v3199, %v3199
        %v3216 = vmul.f32 %v3200, %v3200
        %v3217 = vmul.f32 %v3201, %v3201
        %v3218 = vmul.f32 %v3202, %v3202
        %v3219 = vmul.f32 %v3203, %v3203
        %v3220 = vmul.f32 %v3204, %v3204
        %v3221 = vmul.f32 %v3205, %v3205
        %v3222 = vmul.f32 %v3206, %v3206
        %v3223 = vmul.f32 %v3207, %v3207
        %3224 = vadd.xlane.f32.xlu0 %v3208
        %v3225 = vpop.xlane.xlu0 %3224
        %3226 = vadd.xlane.f32.xlu0 %v3209
        %v3227 = vpop.xlane.xlu0 %3226
        %3228 = vadd.xlane.f32.xlu0 %v3210
        %v3229 = vpop.xlane.xlu0 %3228
        %3230 = vadd.xlane.f32.xlu0 %v3211
        %v3231 = vpop.xlane.xlu0 %3230
        %3232 = vadd.xlane.f32.xlu0 %v3212
        %v3233 = vpop.xlane.xlu0 %3232
        %3234 = vadd.xlane.f32.xlu0 %v3213
        %v3235 = vpop.xlane.xlu0 %3234
        %3236 = vadd.xlane.f32.xlu0 %v3214
        %v3237 = vpop.xlane.xlu0 %3236
        %3238 = vadd.xlane.f32.xlu0 %v3215
        %v3239 = vpop.xlane.xlu0 %3238
        %3240 = vadd.xlane.f32.xlu0 %v3216
        %v3241 = vpop.xlane.xlu0 %3240
        %3242 = vadd.xlane.f32.xlu0 %v3217
        %v3243 = vpop.xlane.xlu0 %3242
        %3244 = vadd.xlane.f32.xlu0 %v3218
        %v3245 = vpop.xlane.xlu0 %3244
        %3246 = vadd.xlane.f32.xlu0 %v3219
        %v3247 = vpop.xlane.xlu0 %3246
        %3248 = vadd.xlane.f32.xlu0 %v3220
        %v3249 = vpop.xlane.xlu0 %3248
        %3250 = vadd.xlane.f32.xlu0 %v3221
        %v3251 = vpop.xlane.xlu0 %3250
        %3252 = vadd.xlane.f32.xlu0 %v3222
        %v3253 = vpop.xlane.xlu0 %3252
        %3254 = vadd.xlane.f32.xlu0 %v3223
        %v3255 = vpop.xlane.xlu0 %3254
        %v3256 = vmul.f32 %v3225, %v3175
        %v3257 = vmul.f32 %v3227, %v3175
        %v3258 = vmul.f32 %v3229, %v3175
        %v3259 = vmul.f32 %v3231, %v3175
        %v3260 = vmul.f32 %v3233, %v3175
        %v3261 = vmul.f32 %v3235, %v3175
        %v3262 = vmul.f32 %v3237, %v3175
        %v3263 = vmul.f32 %v3239, %v3175
        %v3264 = vmul.f32 %v3241, %v3175
        %v3265 = vmul.f32 %v3243, %v3175
        %v3266 = vmul.f32 %v3245, %v3175
        %v3267 = vmul.f32 %v3247, %v3175
        %v3268 = vmul.f32 %v3249, %v3175
        %v3269 = vmul.f32 %v3251, %v3175
        %v3270 = vmul.f32 %v3253, %v3175
        %v3271 = vmul.f32 %v3255, %v3175
        %v3272 = vadd.f32 %v3256, 1e-05
        %v3273 = vadd.f32 %v3257, 1e-05
        %v3274 = vadd.f32 %v3258, 1e-05
        %v3275 = vadd.f32 %v3259, 1e-05
        %v3276 = vadd.f32 %v3260, 1e-05
        %v3277 = vadd.f32 %v3261, 1e-05
        %v3278 = vadd.f32 %v3262, 1e-05
        %v3279 = vadd.f32 %v3263, 1e-05
        %v3280 = vadd.f32 %v3264, 1e-05
        %v3281 = vadd.f32 %v3265, 1e-05
        %v3282 = vadd.f32 %v3266, 1e-05
        %v3283 = vadd.f32 %v3267, 1e-05
        %v3284 = vadd.f32 %v3268, 1e-05
        %v3285 = vadd.f32 %v3269, 1e-05
        %v3286 = vadd.f32 %v3270, 1e-05
        %v3287 = vadd.f32 %v3271, 1e-05
        %v3288 = vrsqrt.pop %v3272
        %v3289 = vrsqrt.pop %v3273
        %v3290 = vrsqrt.pop %v3274
        %v3291 = vrsqrt.pop %v3275
        %v3292 = vrsqrt.pop %v3276
        %v3293 = vrsqrt.pop %v3277
        %v3294 = vrsqrt.pop %v3278
        %v3295 = vrsqrt.pop %v3279
        %v3296 = vrsqrt.pop %v3280
        %v3297 = vrsqrt.pop %v3281
        %v3298 = vrsqrt.pop %v3282
        %v3299 = vrsqrt.pop %v3283
        %v3300 = vrsqrt.pop %v3284
        %v3301 = vrsqrt.pop %v3285
        %v3302 = vrsqrt.pop %v3286
        %v3303 = vrsqrt.pop %v3287
        %v3304 = vmul.f32 %v3192, %v3288
        %v3305 = vmul.f32 %v3193, %v3289
        %v3306 = vmul.f32 %v3194, %v3290
        %v3307 = vmul.f32 %v3195, %v3291
        %v3308 = vmul.f32 %v3196, %v3292
        %v3309 = vmul.f32 %v3197, %v3293
        %v3310 = vmul.f32 %v3198, %v3294
        %v3311 = vmul.f32 %v3199, %v3295
        %v3312 = vmul.f32 %v3200, %v3296
        %v3313 = vmul.f32 %v3201, %v3297
        %v3314 = vmul.f32 %v3202, %v3298
        %v3315 = vmul.f32 %v3203, %v3299
        %v3316 = vmul.f32 %v3204, %v3300
        %v3317 = vmul.f32 %v3205, %v3301
        %v3318 = vmul.f32 %v3206, %v3302
        %v3319 = vmul.f32 %v3207, %v3303
        %v3320 = vld [vmem:[%s8] sm:$0x1]
        %v3322 = vlaneseq
        %v3323 = vshrl.u32 %v3322, 7
        %v3324 = vsub.s32 0, %v3323
        %v3325 = vrot.slane %v3320, %v3324
        %v3327 = vmul.f32 %v3304, %v3325
        %v3328 = vmul.f32 %v3305, %v3325
        %v3329 = vmul.f32 %v3306, %v3325
        %v3330 = vmul.f32 %v3307, %v3325
        %v3331 = vmul.f32 %v3308, %v3325
        %v3332 = vmul.f32 %v3309, %v3325
        %v3333 = vmul.f32 %v3310, %v3325
        %v3334 = vmul.f32 %v3311, %v3325
        %v3335 = vmul.f32 %v3312, %v3325
        %v3336 = vmul.f32 %v3313, %v3325
        %v3337 = vmul.f32 %v3314, %v3325
        %v3338 = vmul.f32 %v3315, %v3325
        %v3339 = vmul.f32 %v3316, %v3325
        %v3340 = vmul.f32 %v3317, %v3325
        %v3341 = vmul.f32 %v3318, %v3325
        %v3342 = vmul.f32 %v3319, %v3325
        %v3343 = vld [vmem:[#allocation11] sm:$0x1]
        %v3345 = vlaneseq
        %v3346 = vshrl.u32 %v3345, 7
        %v3347 = vsub.s32 0, %v3346
        %v3348 = vrot.slane %v3343, %v3347
        %v3350 = vadd.f32 %v3327, %v3348
        %v3351 = vadd.f32 %v3328, %v3348
        %v3352 = vadd.f32 %v3329, %v3348
        %v3353 = vadd.f32 %v3330, %v3348
        %v3354 = vadd.f32 %v3331, %v3348
        %v3355 = vadd.f32 %v3332, %v3348
        %v3356 = vadd.f32 %v3333, %v3348
        %v3357 = vadd.f32 %v3334, %v3348
        %v3358 = vadd.f32 %v3335, %v3348
        %v3359 = vadd.f32 %v3336, %v3348
        %v3360 = vadd.f32 %v3337, %v3348
        %v3361 = vadd.f32 %v3338, %v3348
        %v3362 = vadd.f32 %v3339, %v3348
        %v3363 = vadd.f32 %v3340, %v3348
        %v3364 = vadd.f32 %v3341, %v3348
        %v3365 = vadd.f32 %v3342, %v3348
        %v3366 = vpack.c.bf16 %v3351, %v3350
        %v3367 = vpack.c.bf16 %v3353, %v3352
        %v3368 = vpack.c.bf16 %v3355, %v3354
        %v3369 = vpack.c.bf16 %v3357, %v3356
        %v3370 = vpack.c.bf16 %v3359, %v3358
        %v3371 = vpack.c.bf16 %v3361, %v3360
        %v3372 = vpack.c.bf16 %v3363, %v3362
        %v3373 = vpack.c.bf16 %v3365, %v3364
        %v3374 = vld [vmem:[#allocation13] sm:$0xff]
        %v3375 = vld [vmem:[#allocation13 + $0x8] sm:$0xff]
        %v3376 = vld [vmem:[#allocation13 + $0x10] sm:$0xff]
        %v3377 = vld [vmem:[#allocation13 + $0x18] sm:$0xff]
        %v3378 = vld [vmem:[#allocation13 + $0x20] sm:$0xff]
        %v3379 = vld [vmem:[#allocation13 + $0x28] sm:$0xff]
        %v3380 = vld [vmem:[#allocation13 + $0x30] sm:$0xff]
        %v3381 = vld [vmem:[#allocation13 + $0x38] sm:$0xff]
        %v3382 = vld [vmem:[#allocation13 + $0x40] sm:$0xff]
        %v3383 = vld [vmem:[#allocation13 + $0x48] sm:$0xff]
        %v3384 = vld [vmem:[#allocation13 + $0x50] sm:$0xff]
        %v3385 = vld [vmem:[#allocation13 + $0x58] sm:$0xff]
        %v3386 = vld [vmem:[#allocation13 + $0x60] sm:$0xff]
        %v3387 = vld [vmem:[#allocation13 + $0x68] sm:$0xff]
        %v3388 = vld [vmem:[#allocation13 + $0x70] sm:$0xff]
        %v3389 = vld [vmem:[#allocation13 + $0x78] sm:$0xff]
        %v3390 = vld [vmem:[%s11] sm:$0x3]
        %v3392 = vlaneseq
        %v3393 = vshrl.u32 %v3392, 7
        %v3394 = vsub.s32 0, %v3393
        %v3395 = vrot.slane %v3390, %v3394
        %v3396 = vlaneseq
        %v3397 = vshrl.u32 %v3396, 7
        %v3398 = vsub.s32 1, %v3397
        %v3399 = vrot.slane %v3390, %v3398
        %v3418 = vunpack.c.l.b16 %v3374
        %v3419 = vunpack.c.h.b16 %v3374
        %v3420 = vunpack.c.l.b16 %v3375
        %v3421 = vunpack.c.h.b16 %v3375
        %v3422 = vunpack.c.l.b16 %v3376
        %v3423 = vunpack.c.h.b16 %v3376
        %v3424 = vunpack.c.l.b16 %v3377
        %v3425 = vunpack.c.h.b16 %v3377
        %v3426 = vunpack.c.l.b16 %v3378
        %v3427 = vunpack.c.h.b16 %v3378
        %v3428 = vunpack.c.l.b16 %v3379
        %v3429 = vunpack.c.h.b16 %v3379
        %v3430 = vunpack.c.l.b16 %v3380
        %v3431 = vunpack.c.h.b16 %v3380
        %v3432 = vunpack.c.l.b16 %v3381
        %v3433 = vunpack.c.h.b16 %v3381
        %v3434 = vunpack.c.l.b16 %v3382
        %v3435 = vunpack.c.h.b16 %v3382
        %v3436 = vunpack.c.l.b16 %v3383
        %v3437 = vunpack.c.h.b16 %v3383
        %v3438 = vunpack.c.l.b16 %v3384
        %v3439 = vunpack.c.h.b16 %v3384
        %v3440 = vunpack.c.l.b16 %v3385
        %v3441 = vunpack.c.h.b16 %v3385
        %v3442 = vunpack.c.l.b16 %v3386
        %v3443 = vunpack.c.h.b16 %v3386
        %v3444 = vunpack.c.l.b16 %v3387
        %v3445 = vunpack.c.h.b16 %v3387
        %v3446 = vunpack.c.l.b16 %v3388
        %v3447 = vunpack.c.h.b16 %v3388
        %v3448 = vunpack.c.l.b16 %v3389
        %v3449 = vunpack.c.h.b16 %v3389
        %v3450 = vpack.c.b16 %v3420, %v3418
        %v3451 = vpack.c.b16 %v3421, %v3419
        %v3452 = vpack.c.b16 %v3424, %v3422
        %v3453 = vpack.c.b16 %v3425, %v3423
        %v3454 = vpack.c.b16 %v3428, %v3426
        %v3455 = vpack.c.b16 %v3429, %v3427
        %v3456 = vpack.c.b16 %v3432, %v3430
        %v3457 = vpack.c.b16 %v3433, %v3431
        %v3458 = vpack.c.b16 %v3436, %v3434
        %v3459 = vpack.c.b16 %v3437, %v3435
        %v3460 = vpack.c.b16 %v3440, %v3438
        %v3461 = vpack.c.b16 %v3441, %v3439
        %v3462 = vpack.c.b16 %v3444, %v3442
        %v3463 = vpack.c.b16 %v3445, %v3443
        %v3464 = vpack.c.b16 %v3448, %v3446
        %v3465 = vpack.c.b16 %v3449, %v3447
        %3482 = vmatprep.subr.bf16.mxu0 %v3451
        %3483 = vmatpush1.bf16.msra.mxu0 %v3450
        %3484 = vmatprep.subr.bf16.mxu0 %v3453
        %3485 = vmatpush1.bf16.msra.mxu0 %v3452
        %3486 = vmatprep.subr.bf16.mxu0 %v3455
        %3487 = vmatpush1.bf16.msra.mxu0 %v3454
        %3488 = vmatprep.subr.bf16.mxu0 %v3457
        %3489 = vmatpush1.bf16.msra.mxu0 %v3456
        %3490 = vmatprep.subr.bf16.mxu0 %v3459
        %3491 = vmatpush1.bf16.msra.mxu0 %v3458
        %3492 = vmatprep.subr.bf16.mxu0 %v3461
        %3493 = vmatpush1.bf16.msra.mxu0 %v3460
        %3494 = vmatprep.subr.bf16.mxu0 %v3463
        %3495 = vmatpush1.bf16.msra.mxu0 %v3462
        %3496 = vmatprep.subr.bf16.mxu0 %v3465
        %3497 = vmatpush1.bf16.msra.mxu0 %v3464
        %3498 = vmatprep.subr.bf16.mxu0 0
        %3499 = vmatpush1.bf16.msra.mxu0 0
        %3500 = vmatprep.subr.bf16.mxu0 0
        %3501 = vmatpush1.bf16.msra.mxu0 0
        %3502 = vmatprep.subr.bf16.mxu0 0
        %3503 = vmatpush1.bf16.msra.mxu0 0
        %3504 = vmatprep.subr.bf16.mxu0 0
        %3505 = vmatpush1.bf16.msra.mxu0 0
        %3506 = vmatprep.subr.bf16.mxu0 0
        %3507 = vmatpush1.bf16.msra.mxu0 0
        %3508 = vmatprep.subr.bf16.mxu0 0
        %3509 = vmatpush1.bf16.msra.mxu0 0
        %3510 = vmatprep.subr.bf16.mxu0 0
        %3511 = vmatpush1.bf16.msra.mxu0 0
        %3512 = vmatprep.subr.bf16.mxu0 0
        %3513 = vmatpush1.bf16.msra.mxu0 0
        %3514 = vmatprep.mubr.bf16.mxu0 0
        %3515 = vmatmul.mubr.bf16.gmra.mrb[0].mxu0 %v3366
        %v3516 = vpop.f32.mrb[0].mxu0
        %v3517 = vadd.f32 %v3395, %v3516
        %v3518 = vpop.f32.mrb[0].mxu0
        %v3519 = vadd.f32 %v3399, %v3518
        %v3520 = vpop.f32.mrb[0].mxu0
        %v3521 = vadd.f32 %v3395, %v3520
        %v3522 = vpop.f32.mrb[0].mxu0
        %v3523 = vadd.f32 %v3399, %v3522
        %3524 = vmatprep.mubr.bf16.mxu0 0
        %3525 = vmatmul.mubr.bf16.gmra.mrb[0].mxu0 %v3367
        %v3526 = vpop.f32.mrb[0].mxu0
        %v3527 = vadd.f32 %v3395, %v3526
        %v3528 = vpop.f32.mrb[0].mxu0
        %v3529 = vadd.f32 %v3399, %v3528
        %v3530 = vpop.f32.mrb[0].mxu0
        %v3531 = vadd.f32 %v3395, %v3530
        %v3532 = vpop.f32.mrb[0].mxu0
        %v3533 = vadd.f32 %v3399, %v3532
        %3534 = vmatprep.mubr.bf16.mxu0 0
        %3535 = vmatmul.mubr.bf16.gmra.mrb[0].mxu0 %v3368
        %v3536 = vpop.f32.mrb[0].mxu0
        %v3537 = vadd.f32 %v3395, %v3536
        %v3538 = vpop.f32.mrb[0].mxu0
        %v3539 = vadd.f32 %v3399, %v3538
        %v3540 = vpop.f32.mrb[0].mxu0
        %v3541 = vadd.f32 %v3395, %v3540
        %v3542 = vpop.f32.mrb[0].mxu0
        %v3543 = vadd.f32 %v3399, %v3542
        %3544 = vmatprep.mubr.bf16.mxu0 0
        %3545 = vmatmul.mubr.bf16.gmra.mrb[0].mxu0 %v3369
        %v3546 = vpop.f32.mrb[0].mxu0
        %v3547 = vadd.f32 %v3395, %v3546
        %v3548 = vpop.f32.mrb[0].mxu0
        %v3549 = vadd.f32 %v3399, %v3548
        %v3550 = vpop.f32.mrb[0].mxu0
        %v3551 = vadd.f32 %v3395, %v3550
        %v3552 = vpop.f32.mrb[0].mxu0
        %v3553 = vadd.f32 %v3399, %v3552
        %3554 = vmatprep.mubr.bf16.mxu0 0
        %3555 = vmatmul.mubr.bf16.gmra.mrb[0].mxu0 %v3370
        %v3556 = vpop.f32.mrb[0].mxu0
        %v3557 = vadd.f32 %v3395, %v3556
        %v3558 = vpop.f32.mrb[0].mxu0
        %v3559 = vadd.f32 %v3399, %v3558
        %v3560 = vpop.f32.mrb[0].mxu0
        %v3561 = vadd.f32 %v3395, %v3560
        %v3562 = vpop.f32.mrb[0].mxu0
        %v3563 = vadd.f32 %v3399, %v3562
        %3564 = vmatprep.mubr.bf16.mxu0 0
        %3565 = vmatmul.mubr.bf16.gmra.mrb[0].mxu0 %v3371
        %v3566 = vpop.f32.mrb[0].mxu0
        %v3567 = vadd.f32 %v3395, %v3566
        %v3568 = vpop.f32.mrb[0].mxu0
        %v3569 = vadd.f32 %v3399, %v3568
        %v3570 = vpop.f32.mrb[0].mxu0
        %v3571 = vadd.f32 %v3395, %v3570
        %v3572 = vpop.f32.mrb[0].mxu0
        %v3573 = vadd.f32 %v3399, %v3572
        %3574 = vmatprep.mubr.bf16.mxu0 0
        %3575 = vmatmul.mubr.bf16.gmra.mrb[0].mxu0 %v3372
        %v3576 = vpop.f32.mrb[0].mxu0
        %v3577 = vadd.f32 %v3395, %v3576
        %v3578 = vpop.f32.mrb[0].mxu0
        %v3579 = vadd.f32 %v3399, %v3578
        %v3580 = vpop.f32.mrb[0].mxu0
        %v3581 = vadd.f32 %v3395, %v3580
        %v3582 = vpop.f32.mrb[0].mxu0
        %v3583 = vadd.f32 %v3399, %v3582
        %3584 = vmatprep.mubr.bf16.mxu0 0
        %3585 = vmatmul.mubr.bf16.gmra.mrb[0].mxu0 %v3373
        %v3586 = vpop.f32.mrb[0].mxu0
        %v3587 = vadd.f32 %v3395, %v3586
        %v3588 = vpop.f32.mrb[0].mxu0
        %v3589 = vadd.f32 %v3399, %v3588
        %v3590 = vpop.f32.mrb[0].mxu0
        %v3591 = vadd.f32 %v3395, %v3590
        %v3592 = vpop.f32.mrb[0].mxu0
        %v3593 = vadd.f32 %v3399, %v3592
        %3594 = vdwg.mxu0
        %v3595 = vmax.f32 %v3517, 0.0
        %v3596 = vmax.f32 %v3519, 0.0
        %v3597 = vmax.f32 %v3521, 0.0
        %v3598 = vmax.f32 %v3523, 0.0
        %v3599 = vmax.f32 %v3527, 0.0
        %v3600 = vmax.f32 %v3529, 0.0
        %v3601 = vmax.f32 %v3531, 0.0
        %v3602 = vmax.f32 %v3533, 0.0
        %v3603 = vmax.f32 %v3537, 0.0
        %v3604 = vmax.f32 %v3539, 0.0
        %v3605 = vmax.f32 %v3541, 0.0
        %v3606 = vmax.f32 %v3543, 0.0
        %v3607 = vmax.f32 %v3547, 0.0
        %v3608 = vmax.f32 %v3549, 0.0
        %v3609 = vmax.f32 %v3551, 0.0
        %v3610 = vmax.f32 %v3553, 0.0
        %v3611 = vmax.f32 %v3557, 0.0
        %v3612 = vmax.f32 %v3559, 0.0
        %v3613 = vmax.f32 %v3561, 0.0
        %v3614 = vmax.f32 %v3563, 0.0
        %v3615 = vmax.f32 %v3567, 0.0
        %v3616 = vmax.f32 %v3569, 0.0
        %v3617 = vmax.f32 %v3571, 0.0
        %v3618 = vmax.f32 %v3573, 0.0
        %v3619 = vmax.f32 %v3577, 0.0
        %v3620 = vmax.f32 %v3579, 0.0
        %v3621 = vmax.f32 %v3581, 0.0
        %v3622 = vmax.f32 %v3583, 0.0
        %v3623 = vmax.f32 %v3587, 0.0
        %v3624 = vmax.f32 %v3589, 0.0
        %v3625 = vmax.f32 %v3591, 0.0
        %v3626 = vmax.f32 %v3593, 0.0
        %v3627 = vpack.c.bf16 %v3597, %v3595
        %v3628 = vpack.c.bf16 %v3598, %v3596
        %v3629 = vpack.c.bf16 %v3601, %v3599
        %v3630 = vpack.c.bf16 %v3602, %v3600
        %v3631 = vpack.c.bf16 %v3605, %v3603
        %v3632 = vpack.c.bf16 %v3606, %v3604
        %v3633 = vpack.c.bf16 %v3609, %v3607
        %v3634 = vpack.c.bf16 %v3610, %v3608
        %v3635 = vpack.c.bf16 %v3613, %v3611
        %v3636 = vpack.c.bf16 %v3614, %v3612
        %v3637 = vpack.c.bf16 %v3617, %v3615
        %v3638 = vpack.c.bf16 %v3618, %v3616
        %v3639 = vpack.c.bf16 %v3621, %v3619
        %v3640 = vpack.c.bf16 %v3622, %v3620
        %v3641 = vpack.c.bf16 %v3625, %v3623
        %v3642 = vpack.c.bf16 %v3626, %v3624
        %v3643 = vld [vmem:[#allocation14] sm:$0xf]
        %v3644 = vld [vmem:[#allocation14 + $0x4] sm:$0xf]
        %v3645 = vld [vmem:[#allocation14 + $0x8] sm:$0xf]
        %v3646 = vld [vmem:[#allocation14 + $0xc] sm:$0xf]
        %v3647 = vld [vmem:[#allocation14 + $0x10] sm:$0xf]
        %v3648 = vld [vmem:[#allocation14 + $0x14] sm:$0xf]
        %v3649 = vld [vmem:[#allocation14 + $0x18] sm:$0xf]
        %v3650 = vld [vmem:[#allocation14 + $0x1c] sm:$0xf]
        %v3651 = vld [vmem:[#allocation14 + $0x20] sm:$0xf]
        %v3652 = vld [vmem:[#allocation14 + $0x24] sm:$0xf]
        %v3653 = vld [vmem:[#allocation14 + $0x28] sm:$0xf]
        %v3654 = vld [vmem:[#allocation14 + $0x2c] sm:$0xf]
        %v3655 = vld [vmem:[#allocation14 + $0x30] sm:$0xf]
        %v3656 = vld [vmem:[#allocation14 + $0x34] sm:$0xf]
        %v3657 = vld [vmem:[#allocation14 + $0x38] sm:$0xf]
        %v3658 = vld [vmem:[#allocation14 + $0x3c] sm:$0xf]
        %v3659 = vld [vmem:[#allocation14 + $0x40] sm:$0xf]
        %v3660 = vld [vmem:[#allocation14 + $0x44] sm:$0xf]
        %v3661 = vld [vmem:[#allocation14 + $0x48] sm:$0xf]
        %v3662 = vld [vmem:[#allocation14 + $0x4c] sm:$0xf]
        %v3663 = vld [vmem:[#allocation14 + $0x50] sm:$0xf]
        %v3664 = vld [vmem:[#allocation14 + $0x54] sm:$0xf]
        %v3665 = vld [vmem:[#allocation14 + $0x58] sm:$0xf]
        %v3666 = vld [vmem:[#allocation14 + $0x5c] sm:$0xf]
        %v3667 = vld [vmem:[#allocation14 + $0x60] sm:$0xf]
        %v3668 = vld [vmem:[#allocation14 + $0x64] sm:$0xf]
        %v3669 = vld [vmem:[#allocation14 + $0x68] sm:$0xf]
        %v3670 = vld [vmem:[#allocation14 + $0x6c] sm:$0xf]
        %v3671 = vld [vmem:[#allocation14 + $0x70] sm:$0xf]
        %v3672 = vld [vmem:[#allocation14 + $0x74] sm:$0xf]
        %v3673 = vld [vmem:[#allocation14 + $0x78] sm:$0xf]
        %v3674 = vld [vmem:[#allocation14 + $0x7c] sm:$0xf]
        %v3675 = vld [vmem:[%s13] sm:$0x1]
        %v3677 = vlaneseq
        %v3678 = vshrl.u32 %v3677, 7
        %v3679 = vsub.s32 0, %v3678
        %v3680 = vrot.slane %v3675, %v3679
        %v3714 = vunpack.c.l.b16 %v3643
        %v3715 = vunpack.c.l.b16 %v3644
        %v3716 = vunpack.c.l.b16 %v3645
        %v3717 = vunpack.c.l.b16 %v3646
        %v3718 = vunpack.c.l.b16 %v3647
        %v3719 = vunpack.c.l.b16 %v3648
        %v3720 = vunpack.c.l.b16 %v3649
        %v3721 = vunpack.c.l.b16 %v3650
        %v3722 = vunpack.c.l.b16 %v3651
        %v3723 = vunpack.c.l.b16 %v3652
        %v3724 = vunpack.c.l.b16 %v3653
        %v3725 = vunpack.c.l.b16 %v3654
        %v3726 = vunpack.c.l.b16 %v3655
        %v3727 = vunpack.c.l.b16 %v3656
        %v3728 = vunpack.c.l.b16 %v3657
        %v3729 = vunpack.c.l.b16 %v3658
        %v3730 = vunpack.c.l.b16 %v3659
        %v3731 = vunpack.c.l.b16 %v3660
        %v3732 = vunpack.c.l.b16 %v3661
        %v3733 = vunpack.c.l.b16 %v3662
        %v3734 = vunpack.c.l.b16 %v3663
        %v3735 = vunpack.c.l.b16 %v3664
        %v3736 = vunpack.c.l.b16 %v3665
        %v3737 = vunpack.c.l.b16 %v3666
        %v3738 = vunpack.c.l.b16 %v3667
        %v3739 = vunpack.c.l.b16 %v3668
        %v3740 = vunpack.c.l.b16 %v3669
        %v3741 = vunpack.c.l.b16 %v3670
        %v3742 = vunpack.c.l.b16 %v3671
        %v3743 = vunpack.c.l.b16 %v3672
        %v3744 = vunpack.c.l.b16 %v3673
        %v3745 = vunpack.c.l.b16 %v3674
        %v3746 = vpack.c.b16 %v3715, %v3714
        %v3747 = vpack.c.b16 %v3717, %v3716
        %v3748 = vpack.c.b16 %v3719, %v3718
        %v3749 = vpack.c.b16 %v3721, %v3720
        %v3750 = vpack.c.b16 %v3723, %v3722
        %v3751 = vpack.c.b16 %v3725, %v3724
        %v3752 = vpack.c.b16 %v3727, %v3726
        %v3753 = vpack.c.b16 %v3729, %v3728
        %v3754 = vpack.c.b16 %v3731, %v3730
        %v3755 = vpack.c.b16 %v3733, %v3732
        %v3756 = vpack.c.b16 %v3735, %v3734
        %v3757 = vpack.c.b16 %v3737, %v3736
        %v3758 = vpack.c.b16 %v3739, %v3738
        %v3759 = vpack.c.b16 %v3741, %v3740
        %v3760 = vpack.c.b16 %v3743, %v3742
        %v3761 = vpack.c.b16 %v3745, %v3744
        %3778 = vmatprep.subr.bf16.mxu0 0
        %3779 = vmatpush1.bf16.msra.mxu0 %v3746
        %3780 = vmatprep.subr.bf16.mxu0 0
        %3781 = vmatpush1.bf16.msra.mxu0 %v3747
        %3782 = vmatprep.subr.bf16.mxu0 0
        %3783 = vmatpush1.bf16.msra.mxu0 %v3748
        %3784 = vmatprep.subr.bf16.mxu0 0
        %3785 = vmatpush1.bf16.msra.mxu0 %v3749
        %3786 = vmatprep.subr.bf16.mxu0 0
        %3787 = vmatpush1.bf16.msra.mxu0 %v3750
        %3788 = vmatprep.subr.bf16.mxu0 0
        %3789 = vmatpush1.bf16.msra.mxu0 %v3751
        %3790 = vmatprep.subr.bf16.mxu0 0
        %3791 = vmatpush1.bf16.msra.mxu0 %v3752
        %3792 = vmatprep.subr.bf16.mxu0 0
        %3793 = vmatpush1.bf16.msra.mxu0 %v3753
        %3794 = vmatprep.subr.bf16.mxu0 0
        %3795 = vmatpush1.bf16.msra.mxu0 %v3754
        %3796 = vmatprep.subr.bf16.mxu0 0
        %3797 = vmatpush1.bf16.msra.mxu0 %v3755
        %3798 = vmatprep.subr.bf16.mxu0 0
        %3799 = vmatpush1.bf16.msra.mxu0 %v3756
        %3800 = vmatprep.subr.bf16.mxu0 0
        %3801 = vmatpush1.bf16.msra.mxu0 %v3757
        %3802 = vmatprep.subr.bf16.mxu0 0
        %3803 = vmatpush1.bf16.msra.mxu0 %v3758
        %3804 = vmatprep.subr.bf16.mxu0 0
        %3805 = vmatpush1.bf16.msra.mxu0 %v3759
        %3806 = vmatprep.subr.bf16.mxu0 0
        %3807 = vmatpush1.bf16.msra.mxu0 %v3760
        %3808 = vmatprep.subr.bf16.mxu0 0
        %3809 = vmatpush1.bf16.msra.mxu0 %v3761
        %3810 = vmatprep.mubr.bf16.mxu0 %v3628
        %3811 = vmatmul.mubr.bf16.gmra.mrb[0].mxu0 %v3627
        %v3812 = vpop.f32.mrb[0].mxu0
        %v3813 = vadd.f32 %v3680, %v3812
        %v3814 = vpop.f32.mrb[0].mxu0
        %v3815 = vpop.f32.mrb[0].mxu0
        %v3816 = vadd.f32 %v3680, %v3815
        %v3817 = vpop.f32.mrb[0].mxu0
        %3818 = vmatprep.mubr.bf16.mxu0 %v3630
        %3819 = vmatmul.mubr.bf16.gmra.mrb[0].mxu0 %v3629
        %v3820 = vpop.f32.mrb[0].mxu0
        %v3821 = vadd.f32 %v3680, %v3820
        %v3822 = vpop.f32.mrb[0].mxu0
        %v3823 = vpop.f32.mrb[0].mxu0
        %v3824 = vadd.f32 %v3680, %v3823
        %v3825 = vpop.f32.mrb[0].mxu0
        %3826 = vmatprep.mubr.bf16.mxu0 %v3632
        %3827 = vmatmul.mubr.bf16.gmra.mrb[0].mxu0 %v3631
        %v3828 = vpop.f32.mrb[0].mxu0
        %v3829 = vadd.f32 %v3680, %v3828
        %v3830 = vpop.f32.mrb[0].mxu0
        %v3831 = vpop.f32.mrb[0].mxu0
        %v3832 = vadd.f32 %v3680, %v3831
        %v3833 = vpop.f32.mrb[0].mxu0
        %3834 = vmatprep.mubr.bf16.mxu0 %v3634
        %3835 = vmatmul.mubr.bf16.gmra.mrb[0].mxu0 %v3633
        %v3836 = vpop.f32.mrb[0].mxu0
        %v3837 = vadd.f32 %v3680, %v3836
        %v3838 = vpop.f32.mrb[0].mxu0
        %v3839 = vpop.f32.mrb[0].mxu0
        %v3840 = vadd.f32 %v3680, %v3839
        %v3841 = vpop.f32.mrb[0].mxu0
        %3842 = vmatprep.mubr.bf16.mxu0 %v3636
        %3843 = vmatmul.mubr.bf16.gmra.mrb[0].mxu0 %v3635
        %v3844 = vpop.f32.mrb[0].mxu0
        %v3845 = vadd.f32 %v3680, %v3844
        %v3846 = vpop.f32.mrb[0].mxu0
        %v3847 = vpop.f32.mrb[0].mxu0
        %v3848 = vadd.f32 %v3680, %v3847
        %v3849 = vpop.f32.mrb[0].mxu0
        %3850 = vmatprep.mubr.bf16.mxu0 %v3638
        %3851 = vmatmul.mubr.bf16.gmra.mrb[0].mxu0 %v3637
        %v3852 = vpop.f32.mrb[0].mxu0
        %v3853 = vadd.f32 %v3680, %v3852
        %v3854 = vpop.f32.mrb[0].mxu0
        %v3855 = vpop.f32.mrb[0].mxu0
        %v3856 = vadd.f32 %v3680, %v3855
        %v3857 = vpop.f32.mrb[0].mxu0
        %3858 = vmatprep.mubr.bf16.mxu0 %v3640
        %3859 = vmatmul.mubr.bf16.gmra.mrb[0].mxu0 %v3639
        %v3860 = vpop.f32.mrb[0].mxu0
        %v3861 = vadd.f32 %v3680, %v3860
        %v3862 = vpop.f32.mrb[0].mxu0
        %v3863 = vpop.f32.mrb[0].mxu0
        %v3864 = vadd.f32 %v3680, %v3863
        %v3865 = vpop.f32.mrb[0].mxu0
        %3866 = vmatprep.mubr.bf16.mxu0 %v3642
        %3867 = vmatmul.mubr.bf16.gmra.mrb[0].mxu0 %v3641
        %v3868 = vpop.f32.mrb[0].mxu0
        %v3869 = vadd.f32 %v3680, %v3868
        %v3870 = vpop.f32.mrb[0].mxu0
        %v3871 = vpop.f32.mrb[0].mxu0
        %v3872 = vadd.f32 %v3680, %v3871
        %v3873 = vpop.f32.mrb[0].mxu0
        %3874 = vdwg.mxu0
        %v3875 = vadd.f32 %v3813, %v3350
        %v3876 = vadd.f32 %v3816, %v3351
        %v3877 = vadd.f32 %v3821, %v3352
        %v3878 = vadd.f32 %v3824, %v3353
        %v3879 = vadd.f32 %v3829, %v3354
        %v3880 = vadd.f32 %v3832, %v3355
        %v3881 = vadd.f32 %v3837, %v3356
        %v3882 = vadd.f32 %v3840, %v3357
        %v3883 = vadd.f32 %v3845, %v3358
        %v3884 = vadd.f32 %v3848, %v3359
        %v3885 = vadd.f32 %v3853, %v3360
        %v3886 = vadd.f32 %v3856, %v3361
        %v3887 = vadd.f32 %v3861, %v3362
        %v3888 = vadd.f32 %v3864, %v3363
        %v3889 = vadd.f32 %v3869, %v3364
        %v3890 = vadd.f32 %v3872, %v3365
        %3891 = vadd.xlane.f32.xlu0 %v3875
        %v3892 = vpop.xlane.xlu0 %3891
        %3893 = vadd.xlane.f32.xlu0 %v3876
        %v3894 = vpop.xlane.xlu0 %3893
        %3895 = vadd.xlane.f32.xlu0 %v3877
        %v3896 = vpop.xlane.xlu0 %3895
        %3897 = vadd.xlane.f32.xlu0 %v3878
        %v3898 = vpop.xlane.xlu0 %3897
        %3899 = vadd.xlane.f32.xlu0 %v3879
        %v3900 = vpop.xlane.xlu0 %3899
        %3901 = vadd.xlane.f32.xlu0 %v3880
        %v3902 = vpop.xlane.xlu0 %3901
        %3903 = vadd.xlane.f32.xlu0 %v3881
        %v3904 = vpop.xlane.xlu0 %3903
        %3905 = vadd.xlane.f32.xlu0 %v3882
        %v3906 = vpop.xlane.xlu0 %3905
        %3907 = vadd.xlane.f32.xlu0 %v3883
        %v3908 = vpop.xlane.xlu0 %3907
        %3909 = vadd.xlane.f32.xlu0 %v3884
        %v3910 = vpop.xlane.xlu0 %3909
        %3911 = vadd.xlane.f32.xlu0 %v3885
        %v3912 = vpop.xlane.xlu0 %3911
        %3913 = vadd.xlane.f32.xlu0 %v3886
        %v3914 = vpop.xlane.xlu0 %3913
        %3915 = vadd.xlane.f32.xlu0 %v3887
        %v3916 = vpop.xlane.xlu0 %3915
        %3917 = vadd.xlane.f32.xlu0 %v3888
        %v3918 = vpop.xlane.xlu0 %3917
        %3919 = vadd.xlane.f32.xlu0 %v3889
        %v3920 = vpop.xlane.xlu0 %3919
        %3921 = vadd.xlane.f32.xlu0 %v3890
        %v3922 = vpop.xlane.xlu0 %3921
        %v3923 = vmul.f32 %v3892, %v3175
        %v3924 = vmul.f32 %v3894, %v3175
        %v3925 = vmul.f32 %v3896, %v3175
        %v3926 = vmul.f32 %v3898, %v3175
        %v3927 = vmul.f32 %v3900, %v3175
        %v3928 = vmul.f32 %v3902, %v3175
        %v3929 = vmul.f32 %v3904, %v3175
        %v3930 = vmul.f32 %v3906, %v3175
        %v3931 = vmul.f32 %v3908, %v3175
        %v3932 = vmul.f32 %v3910, %v3175
        %v3933 = vmul.f32 %v3912, %v3175
        %v3934 = vmul.f32 %v3914, %v3175
        %v3935 = vmul.f32 %v3916, %v3175
        %v3936 = vmul.f32 %v3918, %v3175
        %v3937 = vmul.f32 %v3920, %v3175
        %v3938 = vmul.f32 %v3922, %v3175
        %v3939 = vsub.f32 %v3875, %v3923
        %v3940 = vsub.f32 %v3876, %v3924
        %v3941 = vsub.f32 %v3877, %v3925
        %v3942 = vsub.f32 %v3878, %v3926
        %v3943 = vsub.f32 %v3879, %v3927
        %v3944 = vsub.f32 %v3880, %v3928
        %v3945 = vsub.f32 %v3881, %v3929
        %v3946 = vsub.f32 %v3882, %v3930
        %v3947 = vsub.f32 %v3883, %v3931
        %v3948 = vsub.f32 %v3884, %v3932
        %v3949 = vsub.f32 %v3885, %v3933
        %v3950 = vsub.f32 %v3886, %v3934
        %v3951 = vsub.f32 %v3887, %v3935
        %v3952 = vsub.f32 %v3888, %v3936
        %v3953 = vsub.f32 %v3889, %v3937
        %v3954 = vsub.f32 %v3890, %v3938
        %v3955 = vmul.f32 %v3939, %v3939
        %v3956 = vmul.f32 %v3940, %v3940
        %v3957 = vmul.f32 %v3941, %v3941
        %v3958 = vmul.f32 %v3942, %v3942
        %v3959 = vmul.f32 %v3943, %v3943
        %v3960 = vmul.f32 %v3944, %v3944
        %v3961 = vmul.f32 %v3945, %v3945
        %v3962 = vmul.f32 %v3946, %v3946
        %v3963 = vmul.f32 %v3947, %v3947
        %v3964 = vmul.f32 %v3948, %v3948
        %v3965 = vmul.f32 %v3949, %v3949
        %v3966 = vmul.f32 %v3950, %v3950
        %v3967 = vmul.f32 %v3951, %v3951
        %v3968 = vmul.f32 %v3952, %v3952
        %v3969 = vmul.f32 %v3953, %v3953
        %v3970 = vmul.f32 %v3954, %v3954
        %3971 = vadd.xlane.f32.xlu0 %v3955
        %v3972 = vpop.xlane.xlu0 %3971
        %3973 = vadd.xlane.f32.xlu0 %v3956
        %v3974 = vpop.xlane.xlu0 %3973
        %3975 = vadd.xlane.f32.xlu0 %v3957
        %v3976 = vpop.xlane.xlu0 %3975
        %3977 = vadd.xlane.f32.xlu0 %v3958
        %v3978 = vpop.xlane.xlu0 %3977
        %3979 = vadd.xlane.f32.xlu0 %v3959
        %v3980 = vpop.xlane.xlu0 %3979
        %3981 = vadd.xlane.f32.xlu0 %v3960
        %v3982 = vpop.xlane.xlu0 %3981
        %3983 = vadd.xlane.f32.xlu0 %v3961
        %v3984 = vpop.xlane.xlu0 %3983
        %3985 = vadd.xlane.f32.xlu0 %v3962
        %v3986 = vpop.xlane.xlu0 %3985
        %3987 = vadd.xlane.f32.xlu0 %v3963
        %v3988 = vpop.xlane.xlu0 %3987
        %3989 = vadd.xlane.f32.xlu0 %v3964
        %v3990 = vpop.xlane.xlu0 %3989
        %3991 = vadd.xlane.f32.xlu0 %v3965
        %v3992 = vpop.xlane.xlu0 %3991
        %3993 = vadd.xlane.f32.xlu0 %v3966
        %v3994 = vpop.xlane.xlu0 %3993
        %3995 = vadd.xlane.f32.xlu0 %v3967
        %v3996 = vpop.xlane.xlu0 %3995
        %3997 = vadd.xlane.f32.xlu0 %v3968
        %v3998 = vpop.xlane.xlu0 %3997
        %3999 = vadd.xlane.f32.xlu0 %v3969
        %v4000 = vpop.xlane.xlu0 %3999
        %4001 = vadd.xlane.f32.xlu0 %v3970
        %v4002 = vpop.xlane.xlu0 %4001
        %v4003 = vmul.f32 %v3972, %v3175
        %v4004 = vmul.f32 %v3974, %v3175
        %v4005 = vmul.f32 %v3976, %v3175
        %v4006 = vmul.f32 %v3978, %v3175
        %v4007 = vmul.f32 %v3980, %v3175
        %v4008 = vmul.f32 %v3982, %v3175
        %v4009 = vmul.f32 %v3984, %v3175
        %v4010 = vmul.f32 %v3986, %v3175
        %v4011 = vmul.f32 %v3988, %v3175
        %v4012 = vmul.f32 %v3990, %v3175
        %v4013 = vmul.f32 %v3992, %v3175
        %v4014 = vmul.f32 %v3994, %v3175
        %v4015 = vmul.f32 %v3996, %v3175
        %v4016 = vmul.f32 %v3998, %v3175
        %v4017 = vmul.f32 %v4000, %v3175
        %v4018 = vmul.f32 %v4002, %v3175
        %v4019 = vadd.f32 %v4003, 1e-05
        %v4020 = vadd.f32 %v4004, 1e-05
        %v4021 = vadd.f32 %v4005, 1e-05
        %v4022 = vadd.f32 %v4006, 1e-05
        %v4023 = vadd.f32 %v4007, 1e-05
        %v4024 = vadd.f32 %v4008, 1e-05
        %v4025 = vadd.f32 %v4009, 1e-05
        %v4026 = vadd.f32 %v4010, 1e-05
        %v4027 = vadd.f32 %v4011, 1e-05
        %v4028 = vadd.f32 %v4012, 1e-05
        %v4029 = vadd.f32 %v4013, 1e-05
        %v4030 = vadd.f32 %v4014, 1e-05
        %v4031 = vadd.f32 %v4015, 1e-05
        %v4032 = vadd.f32 %v4016, 1e-05
        %v4033 = vadd.f32 %v4017, 1e-05
        %v4034 = vadd.f32 %v4018, 1e-05
        %v4035 = vrsqrt.pop %v4019
        %v4036 = vrsqrt.pop %v4020
        %v4037 = vrsqrt.pop %v4021
        %v4038 = vrsqrt.pop %v4022
        %v4039 = vrsqrt.pop %v4023
        %v4040 = vrsqrt.pop %v4024
        %v4041 = vrsqrt.pop %v4025
        %v4042 = vrsqrt.pop %v4026
        %v4043 = vrsqrt.pop %v4027
        %v4044 = vrsqrt.pop %v4028
        %v4045 = vrsqrt.pop %v4029
        %v4046 = vrsqrt.pop %v4030
        %v4047 = vrsqrt.pop %v4031
        %v4048 = vrsqrt.pop %v4032
        %v4049 = vrsqrt.pop %v4033
        %v4050 = vrsqrt.pop %v4034
        %v4051 = vmul.f32 %v3939, %v4035
        %v4052 = vmul.f32 %v3940, %v4036
        %v4053 = vmul.f32 %v3941, %v4037
        %v4054 = vmul.f32 %v3942, %v4038
        %v4055 = vmul.f32 %v3943, %v4039
        %v4056 = vmul.f32 %v3944, %v4040
        %v4057 = vmul.f32 %v3945, %v4041
        %v4058 = vmul.f32 %v3946, %v4042
        %v4059 = vmul.f32 %v3947, %v4043
        %v4060 = vmul.f32 %v3948, %v4044
        %v4061 = vmul.f32 %v3949, %v4045
        %v4062 = vmul.f32 %v3950, %v4046
        %v4063 = vmul.f32 %v3951, %v4047
        %v4064 = vmul.f32 %v3952, %v4048
        %v4065 = vmul.f32 %v3953, %v4049
        %v4066 = vmul.f32 %v3954, %v4050
        %v4067 = vld [vmem:[%s14] sm:$0x1]
        %v4069 = vlaneseq
        %v4070 = vshrl.u32 %v4069, 7
        %v4071 = vsub.s32 0, %v4070
        %v4072 = vrot.slane %v4067, %v4071
        %v4074 = vmul.f32 %v4051, %v4072
        %v4075 = vmul.f32 %v4052, %v4072
        %v4076 = vmul.f32 %v4053, %v4072
        %v4077 = vmul.f32 %v4054, %v4072
        %v4078 = vmul.f32 %v4055, %v4072
        %v4079 = vmul.f32 %v4056, %v4072
        %v4080 = vmul.f32 %v4057, %v4072
        %v4081 = vmul.f32 %v4058, %v4072
        %v4082 = vmul.f32 %v4059, %v4072
        %v4083 = vmul.f32 %v4060, %v4072
        %v4084 = vmul.f32 %v4061, %v4072
        %v4085 = vmul.f32 %v4062, %v4072
        %v4086 = vmul.f32 %v4063, %v4072
        %v4087 = vmul.f32 %v4064, %v4072
        %v4088 = vmul.f32 %v4065, %v4072
        %v4089 = vmul.f32 %v4066, %v4072
        %v4090 = vld [vmem:[%s15] sm:$0x1]
        %v4092 = vlaneseq
        %v4093 = vshrl.u32 %v4092, 7
        %v4094 = vsub.s32 0, %v4093
        %v4095 = vrot.slane %v4090, %v4094
        %v4097 = vadd.f32 %v4074, %v4095
        %v4098 = vadd.f32 %v4075, %v4095
        %v4099 = vadd.f32 %v4076, %v4095
        %v4100 = vadd.f32 %v4077, %v4095
        %v4101 = vadd.f32 %v4078, %v4095
        %v4102 = vadd.f32 %v4079, %v4095
        %v4103 = vadd.f32 %v4080, %v4095
        %v4104 = vadd.f32 %v4081, %v4095
        %v4105 = vadd.f32 %v4082, %v4095
        %v4106 = vadd.f32 %v4083, %v4095
        %v4107 = vadd.f32 %v4084, %v4095
        %v4108 = vadd.f32 %v4085, %v4095
        %v4109 = vadd.f32 %v4086, %v4095
        %v4110 = vadd.f32 %v4087, %v4095
        %v4111 = vadd.f32 %v4088, %v4095
        %v4112 = vadd.f32 %v4089, %v4095
        %v4113 = vrot.slane %v4097, 4
        %v4114 = vadd.f32 %v4097, %v4113
        %v4115 = vrot.slane %v4114, 2
        %v4116 = vadd.f32 %v4114, %v4115
        %v4117 = vrot.slane %v4116, 1
        %v4118 = vadd.f32 %v4116, %v4117
        %v4119 = vrot.slane %v4098, 4
        %v4120 = vadd.f32 %v4098, %v4119
        %v4121 = vrot.slane %v4120, 2
        %v4122 = vadd.f32 %v4120, %v4121
        %v4123 = vrot.slane %v4122, 1
        %v4124 = vadd.f32 %v4122, %v4123
        %v4125 = vrot.slane %v4099, 4
        %v4126 = vadd.f32 %v4099, %v4125
        %v4127 = vrot.slane %v4126, 2
        %v4128 = vadd.f32 %v4126, %v4127
        %v4129 = vrot.slane %v4128, 1
        %v4130 = vadd.f32 %v4128, %v4129
        %v4131 = vrot.slane %v4100, 4
        %v4132 = vadd.f32 %v4100, %v4131
        %v4133 = vrot.slane %v4132, 2
        %v4134 = vadd.f32 %v4132, %v4133
        %v4135 = vrot.slane %v4134, 1
        %v4136 = vadd.f32 %v4134, %v4135
        %v4137 = vrot.slane %v4101, 4
        %v4138 = vadd.f32 %v4101, %v4137
        %v4139 = vrot.slane %v4138, 2
        %v4140 = vadd.f32 %v4138, %v4139
        %v4141 = vrot.slane %v4140, 1
        %v4142 = vadd.f32 %v4140, %v4141
        %v4143 = vrot.slane %v4102, 4
        %v4144 = vadd.f32 %v4102, %v4143
        %v4145 = vrot.slane %v4144, 2
        %v4146 = vadd.f32 %v4144, %v4145
        %v4147 = vrot.slane %v4146, 1
        %v4148 = vadd.f32 %v4146, %v4147
        %v4149 = vrot.slane %v4103, 4
        %v4150 = vadd.f32 %v4103, %v4149
        %v4151 = vrot.slane %v4150, 2
        %v4152 = vadd.f32 %v4150, %v4151
        %v4153 = vrot.slane %v4152, 1
        %v4154 = vadd.f32 %v4152, %v4153
        %v4155 = vrot.slane %v4104, 4
        %v4156 = vadd.f32 %v4104, %v4155
        %v4157 = vrot.slane %v4156, 2
        %v4158 = vadd.f32 %v4156, %v4157
        %v4159 = vrot.slane %v4158, 1
        %v4160 = vadd.f32 %v4158, %v4159
        %v4161 = vrot.slane %v4105, 4
        %v4162 = vadd.f32 %v4105, %v4161
        %v4163 = vrot.slane %v4162, 2
        %v4164 = vadd.f32 %v4162, %v4163
        %v4165 = vrot.slane %v4164, 1
        %v4166 = vadd.f32 %v4164, %v4165
        %v4167 = vrot.slane %v4106, 4
        %v4168 = vadd.f32 %v4106, %v4167
        %v4169 = vrot.slane %v4168, 2
        %v4170 = vadd.f32 %v4168, %v4169
        %v4171 = vrot.slane %v4170, 1
        %v4172 = vadd.f32 %v4170, %v4171
        %v4173 = vrot.slane %v4107, 4
        %v4174 = vadd.f32 %v4107, %v4173
        %v4175 = vrot.slane %v4174, 2
        %v4176 = vadd.f32 %v4174, %v4175
        %v4177 = vrot.slane %v4176, 1
        %v4178 = vadd.f32 %v4176, %v4177
        %v4179 = vrot.slane %v4108, 4
        %v4180 = vadd.f32 %v4108, %v4179
        %v4181 = vrot.slane %v4180, 2
        %v4182 = vadd.f32 %v4180, %v4181
        %v4183 = vrot.slane %v4182, 1
        %v4184 = vadd.f32 %v4182, %v4183
        %v4185 = vrot.slane %v4109, 4
        %v4186 = vadd.f32 %v4109, %v4185
        %v4187 = vrot.slane %v4186, 2
        %v4188 = vadd.f32 %v4186, %v4187
        %v4189 = vrot.slane %v4188, 1
        %v4190 = vadd.f32 %v4188, %v4189
        %v4191 = vrot.slane %v4110, 4
        %v4192 = vadd.f32 %v4110, %v4191
        %v4193 = vrot.slane %v4192, 2
        %v4194 = vadd.f32 %v4192, %v4193
        %v4195 = vrot.slane %v4194, 1
        %v4196 = vadd.f32 %v4194, %v4195
        %v4197 = vrot.slane %v4111, 4
        %v4198 = vadd.f32 %v4111, %v4197
        %v4199 = vrot.slane %v4198, 2
        %v4200 = vadd.f32 %v4198, %v4199
        %v4201 = vrot.slane %v4200, 1
        %v4202 = vadd.f32 %v4200, %v4201
        %v4203 = vrot.slane %v4112, 4
        %v4204 = vadd.f32 %v4112, %v4203
        %v4205 = vrot.slane %v4204, 2
        %v4206 = vadd.f32 %v4204, %v4205
        %v4207 = vrot.slane %v4206, 1
        %v4208 = vadd.f32 %v4206, %v4207
        %v4209 = vrcp.pop 8.0
        %v4210 = vmul.f32 %v4118, %v4209
        %v4211 = vmul.f32 %v4124, %v4209
        %v4212 = vmul.f32 %v4130, %v4209
        %v4213 = vmul.f32 %v4136, %v4209
        %v4214 = vmul.f32 %v4142, %v4209
        %v4215 = vmul.f32 %v4148, %v4209
        %v4216 = vmul.f32 %v4154, %v4209
        %v4217 = vmul.f32 %v4160, %v4209
        %v4218 = vmul.f32 %v4166, %v4209
        %v4219 = vmul.f32 %v4172, %v4209
        %v4220 = vmul.f32 %v4178, %v4209
        %v4221 = vmul.f32 %v4184, %v4209
        %v4222 = vmul.f32 %v4190, %v4209
        %v4223 = vmul.f32 %v4196, %v4209
        %v4224 = vmul.f32 %v4202, %v4209
        %v4225 = vmul.f32 %v4208, %v4209
        %vm4242 = vcmask 1041409
        %v4243 = vsel %vm4242, %v4211, %v4210
        %vm4244 = vcmask 1042434
        %v4245 = vsel %vm4244, %v4212, %v4243
        %vm4246 = vcmask 1043459
        %v4247 = vsel %vm4246, %v4213, %v4245
        %vm4248 = vcmask 1044484
        %v4249 = vsel %vm4248, %v4214, %v4247
        %vm4250 = vcmask 1045509
        %v4251 = vsel %vm4250, %v4215, %v4249
        %vm4252 = vcmask 1046534
        %v4253 = vsel %vm4252, %v4216, %v4251
        %vm4254 = vcmask 1047559
        %v4255 = vsel %vm4254, %v4217, %v4253
        %v4256 = vsel %vm4242, %v4219, %v4218
        %v4257 = vsel %vm4244, %v4220, %v4256
        %v4258 = vsel %vm4246, %v4221, %v4257
        %v4259 = vsel %vm4248, %v4222, %v4258
        %v4260 = vsel %vm4250, %v4223, %v4259
        %v4261 = vsel %vm4252, %v4224, %v4260
        %v4262 = vsel %vm4254, %v4225, %v4261
        %4265 = vst [vmem:[%s779] sm:$0xff] %v4255
        %4266 = vst [vmem:[%s779 + $0x8] sm:$0xff] %v4262
        %v4267 = vpack.c.bf16 %v4210, %v4210
        %v4268 = vpack.c.bf16 %v4211, %v4211
        %v4269 = vpack.c.bf16 %v4212, %v4212
        %v4270 = vpack.c.bf16 %v4213, %v4213
        %v4271 = vpack.c.bf16 %v4214, %v4214
        %v4272 = vpack.c.bf16 %v4215, %v4215
        %v4273 = vpack.c.bf16 %v4216, %v4216
        %v4274 = vpack.c.bf16 %v4217, %v4217
        %v4275 = vpack.c.bf16 %v4218, %v4218
        %v4276 = vpack.c.bf16 %v4219, %v4219
        %v4277 = vpack.c.bf16 %v4220, %v4220
        %v4278 = vpack.c.bf16 %v4221, %v4221
        %v4279 = vpack.c.bf16 %v4222, %v4222
        %v4280 = vpack.c.bf16 %v4223, %v4223
        %v4281 = vpack.c.bf16 %v4224, %v4224
        %v4282 = vpack.c.bf16 %v4225, %v4225
        %v4283 = vld [vmem:[%s16] sm:$0xf]
        %v4284 = vld [vmem:[%s16 + $0x4] sm:$0xf]
        %v4285 = vld [vmem:[%s16 + $0x8] sm:$0xf]
        %v4286 = vld [vmem:[%s16 + $0xc] sm:$0xf]
        %v4287 = vld [vmem:[%s16 + $0x10] sm:$0xf]
        %v4288 = vld [vmem:[%s16 + $0x14] sm:$0xf]
        %v4289 = vld [vmem:[%s16 + $0x18] sm:$0xf]
        %v4290 = vld [vmem:[%s16 + $0x1c] sm:$0xf]
        %v4291 = vld [vmem:[%s16 + $0x20] sm:$0xf]
        %v4292 = vld [vmem:[%s16 + $0x24] sm:$0xf]
        %v4293 = vld [vmem:[%s16 + $0x28] sm:$0xf]
        %v4294 = vld [vmem:[%s16 + $0x2c] sm:$0xf]
        %v4295 = vld [vmem:[%s16 + $0x30] sm:$0xf]
        %v4296 = vld [vmem:[%s16 + $0x34] sm:$0xf]
        %v4297 = vld [vmem:[%s16 + $0x38] sm:$0xf]
        %v4298 = vld [vmem:[%s16 + $0x3c] sm:$0xf]
        %v4299 = vld [vmem:[%s17] sm:$0x1]
        %v4301 = vlaneseq
        %v4302 = vshrl.u32 %v4301, 7
        %v4303 = vsub.s32 0, %v4302
        %v4304 = vrot.slane %v4299, %v4303
        %v4322 = vunpack.c.l.b16 %v4267
        %v4323 = vunpack.c.l.b16 %v4268
        %v4324 = vunpack.c.l.b16 %v4269
        %v4325 = vunpack.c.l.b16 %v4270
        %v4326 = vunpack.c.l.b16 %v4271
        %v4327 = vunpack.c.l.b16 %v4272
        %v4328 = vunpack.c.l.b16 %v4273
        %v4329 = vunpack.c.l.b16 %v4274
        %v4330 = vunpack.c.l.b16 %v4275
        %v4331 = vunpack.c.l.b16 %v4276
        %v4332 = vunpack.c.l.b16 %v4277
        %v4333 = vunpack.c.l.b16 %v4278
        %v4334 = vunpack.c.l.b16 %v4279
        %v4335 = vunpack.c.l.b16 %v4280
        %v4336 = vunpack.c.l.b16 %v4281
        %v4337 = vunpack.c.l.b16 %v4282
        %v4338 = vsel %vm4242, %v4323, %v4322
        %v4339 = vsel %vm4244, %v4324, %v4338
        %v4340 = vsel %vm4246, %v4325, %v4339
        %v4341 = vsel %vm4248, %v4326, %v4340
        %v4342 = vsel %vm4250, %v4327, %v4341
        %v4343 = vsel %vm4252, %v4328, %v4342
        %v4344 = vsel %vm4254, %v4329, %v4343
        %v4345 = vsel %vm4242, %v4331, %v4330
        %v4346 = vsel %vm4244, %v4332, %v4345
        %v4347 = vsel %vm4246, %v4333, %v4346
        %v4348 = vsel %vm4248, %v4334, %v4347
        %v4349 = vsel %vm4250, %v4335, %v4348
        %v4350 = vsel %vm4252, %v4336, %v4349
        %v4351 = vsel %vm4254, %v4337, %v4350
        %v4352 = vpack.c.b16 %v4351, %v4344
        %v4370 = vunpack.c.l.b16 %v4283
        %v4371 = vunpack.c.l.b16 %v4284
        %v4372 = vunpack.c.l.b16 %v4285
        %v4373 = vunpack.c.l.b16 %v4286
        %v4374 = vunpack.c.l.b16 %v4287
        %v4375 = vunpack.c.l.b16 %v4288
        %v4376 = vunpack.c.l.b16 %v4289
        %v4377 = vunpack.c.l.b16 %v4290
        %v4378 = vunpack.c.l.b16 %v4291
        %v4379 = vunpack.c.l.b16 %v4292
        %v4380 = vunpack.c.l.b16 %v4293
        %v4381 = vunpack.c.l.b16 %v4294
        %v4382 = vunpack.c.l.b16 %v4295
        %v4383 = vunpack.c.l.b16 %v4296
        %v4384 = vunpack.c.l.b16 %v4297
        %v4385 = vunpack.c.l.b16 %v4298
        %v4386 = vpack.c.b16 %v4371, %v4370
        %v4387 = vpack.c.b16 %v4373, %v4372
        %v4388 = vpack.c.b16 %v4375, %v4374
        %v4389 = vpack.c.b16 %v4377, %v4376
        %v4390 = vpack.c.b16 %v4379, %v4378
        %v4391 = vpack.c.b16 %v4381, %v4380
        %v4392 = vpack.c.b16 %v4383, %v4382
        %v4393 = vpack.c.b16 %v4385, %v4384
        %4402 = vmatprep.subr.bf16.mxu0 0
        %4403 = vmatpush1.bf16.msra.mxu0 %v4386
        %4404 = vmatprep.subr.bf16.mxu0 0
        %4405 = vmatpush1.bf16.msra.mxu0 %v4387
        %4406 = vmatprep.subr.bf16.mxu0 0
        %4407 = vmatpush1.bf16.msra.mxu0 %v4388
        %4408 = vmatprep.subr.bf16.mxu0 0
        %4409 = vmatpush1.bf16.msra.mxu0 %v4389
        %4410 = vmatprep.subr.bf16.mxu0 0
        %4411 = vmatpush1.bf16.msra.mxu0 %v4390
        %4412 = vmatprep.subr.bf16.mxu0 0
        %4413 = vmatpush1.bf16.msra.mxu0 %v4391
        %4414 = vmatprep.subr.bf16.mxu0 0
        %4415 = vmatpush1.bf16.msra.mxu0 %v4392
        %4416 = vmatprep.subr.bf16.mxu0 0
        %4417 = vmatpush1.bf16.msra.mxu0 %v4393
        %4418 = vmatprep.subr.bf16.mxu0 0
        %4419 = vmatpush1.bf16.msra.mxu0 0
        %4420 = vmatprep.subr.bf16.mxu0 0
        %4421 = vmatpush1.bf16.msra.mxu0 0
        %4422 = vmatprep.subr.bf16.mxu0 0
        %4423 = vmatpush1.bf16.msra.mxu0 0
        %4424 = vmatprep.subr.bf16.mxu0 0
        %4425 = vmatpush1.bf16.msra.mxu0 0
        %4426 = vmatprep.subr.bf16.mxu0 0
        %4427 = vmatpush1.bf16.msra.mxu0 0
        %4428 = vmatprep.subr.bf16.mxu0 0
        %4429 = vmatpush1.bf16.msra.mxu0 0
        %4430 = vmatprep.subr.bf16.mxu0 0
        %4431 = vmatpush1.bf16.msra.mxu0 0
        %4432 = vmatprep.subr.bf16.mxu0 0
        %4433 = vmatpush1.bf16.msra.mxu0 0
        %4434 = vmatprep.mubr.bf16.mxu0 0
        %4435 = vmatmul.mubr.bf16.gmra.mrb[0].mxu0 %v4352
        %v4436 = vpop.f32.mrb[0].mxu0
        %v4437 = vadd.f32 %v4304, %v4436
        %v4438 = vpop.f32.mrb[0].mxu0
        %v4439 = vpop.f32.mrb[0].mxu0
        %v4440 = vadd.f32 %v4304, %v4439
        %v4441 = vpop.f32.mrb[0].mxu0
        %4442 = vdwg.mxu0
        %v4443 = vmax.f32 %v4437, 0.0
        %v4444 = vmax.f32 %v4440, 0.0
        %v4445 = vpack.c.bf16 %v4444, %v4443
        %v4446 = vld [vmem:[%s18] sm:$0xf]
        %v4447 = vld [vmem:[%s18 + $0x4] sm:$0xf]
        %v4448 = vld [vmem:[%s18 + $0x8] sm:$0xf]
        %v4449 = vld [vmem:[%s18 + $0xc] sm:$0xf]
        %v4450 = vld [vmem:[%s19] sm:$0x1]
        %v4452 = vlaneseq
        %v4453 = vshrl.u32 %v4452, 7
        %v4454 = vsub.s32 0, %v4453
        %v4455 = vrot.slane %v4450, %v4454
        %v4461 = vunpack.c.l.b16 %v4446
        %v4462 = vunpack.c.l.b16 %v4447
        %v4463 = vunpack.c.l.b16 %v4448
        %v4464 = vunpack.c.l.b16 %v4449
        %v4465 = vpack.c.b16 %v4462, %v4461
        %v4466 = vpack.c.b16 %v4464, %v4463
        %vm4469 = vcmask 261120
        %v4471 = vsel %vm4469, %v4445, 0
        %4473 = vmatprep.subr.bf16.mxu0 0
        %4474 = vmatpush1.bf16.msra.mxu0 %v4465
        %4475 = vmatprep.subr.bf16.mxu0 0
        %4476 = vmatpush1.bf16.msra.mxu0 %v4466
        %4477 = vmatprep.subr.bf16.mxu0 0
        %4478 = vmatpush1.bf16.msra.mxu0 0
        %4479 = vmatprep.subr.bf16.mxu0 0
        %4480 = vmatpush1.bf16.msra.mxu0 0
        %4481 = vmatprep.subr.bf16.mxu0 0
        %4482 = vmatpush1.bf16.msra.mxu0 0
        %4483 = vmatprep.subr.bf16.mxu0 0
        %4484 = vmatpush1.bf16.msra.mxu0 0
        %4485 = vmatprep.subr.bf16.mxu0 0
        %4486 = vmatpush1.bf16.msra.mxu0 0
        %4487 = vmatprep.subr.bf16.mxu0 0
        %4488 = vmatpush1.bf16.msra.mxu0 0
        %4489 = vmatprep.subr.bf16.mxu0 0
        %4490 = vmatpush1.bf16.msra.mxu0 0
        %4491 = vmatprep.subr.bf16.mxu0 0
        %4492 = vmatpush1.bf16.msra.mxu0 0
        %4493 = vmatprep.subr.bf16.mxu0 0
        %4494 = vmatpush1.bf16.msra.mxu0 0
        %4495 = vmatprep.subr.bf16.mxu0 0
        %4496 = vmatpush1.bf16.msra.mxu0 0
        %4497 = vmatprep.subr.bf16.mxu0 0
        %4498 = vmatpush1.bf16.msra.mxu0 0
        %4499 = vmatprep.subr.bf16.mxu0 0
        %4500 = vmatpush1.bf16.msra.mxu0 0
        %4501 = vmatprep.subr.bf16.mxu0 0
        %4502 = vmatpush1.bf16.msra.mxu0 0
        %4503 = vmatprep.subr.bf16.mxu0 0
        %4504 = vmatpush1.bf16.msra.mxu0 0
        %4505 = vmatprep.mubr.bf16.mxu0 0
        %4506 = vmatmul.mubr.bf16.gmra.mrb[0].mxu0 %v4471
        %v4507 = vpop.f32.mrb[0].mxu0
        %v4508 = vadd.f32 %v4455, %v4507
        %v4509 = vpop.f32.mrb[0].mxu0
        %v4510 = vpop.f32.mrb[0].mxu0
        %v4511 = vadd.f32 %v4455, %v4510
        %v4512 = vpop.f32.mrb[0].mxu0
        %4513 = vdwg.mxu0
        %4514 = vst [vmem:[%s786] sm:$0xff] %v4508
        %4515 = vst [vmem:[%s786 + $0x8] sm:$0xff] %v4511
        %s4516 = sand.u32 %s482, 1
        %s4517 = scalar_lea.sflag [#allocation4], %s4516
        %s4518 = sand.u32 %s482, 1
        %s4519 = smul.addr %s4518, 16
        %s4520 = scalar_lea.vmem [#allocation16], %s4519
        %s4521 = sand.u32 %s508, 1
        %s4522 = scalar_lea.sflag [#allocation18], %s4521
        %s4523 = sand.u32 %s508, 1
        %s4524 = smul.addr %s4523, 16
        %s4525 = scalar_lea.vmem [#allocation17], %s4524
        // Predicated region
        $region133: #{tpu_custom_call.1} parent=99 // pred_check
          %p4526 = pneg %p492
        $region134: #{tpu_custom_call.1} parent=99 // pred_check_branch
          %4528 = sbr.rel (%p4526) target = $region136
        $region135: #{tpu_custom_call.1} parent=99 // pred_region
          %s4529 = smul.u32 2, %s44
          %s4531 = ssub.s32 256, 256
          %4532 = vsyncadd %s4517, %s4531
          %s4533 = smul.addr %s4529, 128
          %s4534 = scalar_lea.hbm %s20, %s4533
          %s4535 = sshll.u32 %s4520, 4
          %s4536 = int_to_ptr.vmem [resolvable:$true] %s4535
          %4541 = dma.vmem_to_hbm [thread:$0]  %s4536, 256, %s4534, %s4517, 128, 128, 8
        $region136: #{tpu_custom_call.1} parent=99 // pred_fallthru
          _
        // Predicated region
        $region137: #{tpu_custom_call.1} parent=99 // pred_check
          %p4542 = pneg %p518
        $region138: #{tpu_custom_call.1} parent=99 // pred_check_branch
          %4544 = sbr.rel (%p4542) target = $region140
        $region139: #{tpu_custom_call.1} parent=99 // pred_region
          %s4545 = smul.u32 2, %s44
          %s4547 = ssub.s32 256, 256
          %4548 = vsyncadd %s4522, %s4547
          %s4549 = smul.addr %s4545, 128
          %s4550 = scalar_lea.hbm %s21, %s4549
          %s4551 = sshll.u32 %s4525, 4
          %s4552 = int_to_ptr.vmem [resolvable:$true] %s4551
          %4557 = dma.vmem_to_hbm [thread:$0]  %s4552, 256, %s4550, %s4522, 128, 128, 8
        $region140: #{tpu_custom_call.1} parent=99 // pred_fallthru
          _
      $region100: #{tpu_custom_call.1} parent=5 // pred_fallthru
        _
      %p4558 = scmp.le.s32.totalorder 2, %s39
      // Predicated region
      $region141: #{tpu_custom_call.1} parent=5 // pred_check
        %p4559 = pneg %p4558
      $region142: #{tpu_custom_call.1} parent=5 // pred_check_branch
        %4561 = sbr.rel (%p4559) target = $region144
      $region143: #{tpu_custom_call.1} parent=5 // pred_region
        %s4562 = ssub.s32 %s39, 2
        // Predicated region
        $region145: #{tpu_custom_call.1} parent=143 // pred_check
          %p4563 = pneg %p498
        $region146: #{tpu_custom_call.1} parent=143 // pred_check_branch
          %4565 = sbr.rel (%p4563) target = $region148
        $region147: #{tpu_custom_call.1} parent=143 // pred_region
          %s4566 = sand.u32 %s483, 1
          %s4567 = scalar_lea.sflag [#allocation4], %s4566
          %s4568 = sand.u32 %s483, 1
          %s4569 = smul.addr %s4568, 16
          %s4570 = scalar_lea.vmem [#allocation16], %s4569
          %4571 = dma.done %s4567, 256
        $region148: #{tpu_custom_call.1} parent=143 // pred_fallthru
          _
        // Predicated region
        $region149: #{tpu_custom_call.1} parent=143 // pred_check
          %p4572 = pneg %p524
        $region150: #{tpu_custom_call.1} parent=143 // pred_check_branch
          %4574 = sbr.rel (%p4572) target = $region152
        $region151: #{tpu_custom_call.1} parent=143 // pred_region
          %s4575 = sand.u32 %s509, 1
          %s4576 = scalar_lea.sflag [#allocation18], %s4575
          %s4577 = sand.u32 %s509, 1
          %s4578 = smul.addr %s4577, 16
          %s4579 = scalar_lea.vmem [#allocation17], %s4578
          %4580 = dma.done %s4576, 256
        $region152: #{tpu_custom_call.1} parent=143 // pred_fallthru
          _
      $region144: #{tpu_custom_call.1} parent=5 // pred_fallthru
        _
    $region6: #{tpu_custom_call.1} parent=1 // loop_footer
      %s43 = sadd.s32 1, %s39
    $region7: #{tpu_custom_call.1} parent=1 // loop_footer_branch
      %38 = sbr.rel target = $region3
    $region8: #{tpu_custom_call.1} parent=1 // loop_exit
      _
    %4581 = vsyncpa [#allocation3], 1
    %s4582 = scalar_lea.sflag [#allocation3], 1
    %4583 = vsyncpa %s4582, 1
    %4584 = vsyncpa [#allocation6], 1
    %4585 = vsyncpa [#allocation9], 1
    %4586 = vsyncpa [#allocation12], 1
    %4587 = vsyncpa [#allocation15], 1
    %4588 = vsyncpa [#allocation4], 1
    %s4589 = scalar_lea.sflag [#allocation4], 1
    %4590 = vsyncpa %s4589, 1
    %4591 = vsyncpa [#allocation18], 1
    %s4592 = scalar_lea.sflag [#allocation18], 1
    %4593 = vsyncpa %s4592, 1

</llo_original>
